<compile_context>
chip_gen: v5e
topology: v5e:2x2
jax: 0.10.0
libtpu: 0.0.40
codegen_flags: <defaults>
</compile_context>

<pallas_src>
import functools

import numpy as np
import jax
import jax.numpy as jnp
from jax import lax
from jax.experimental import pallas as pl
from jax.experimental.pallas import tpu as pltpu

EPS = 1e-5


def _attention_block_kernel(
    g_ref, x_ref, mg_ref, mx_ref,
    sg_ref, tg_ref, wg_ref,
    sx_ref, tx_ref, wx_ref,
    ss_ref, ts_ref, ws_ref, bs_ref,
    y_ref,
    pg_ref, px_ref, ps_ref, pp_ref,
    *, Hg, Wg, Hx, Wx, dot_dtype):
  HWg = Hg * Wg
  HWx = Hx * Wx

  def conv3x3(pad_ref, W, HW, a, w_ref, m_ref):
    # 3x3 "same" conv (stride 1) as a single im2col matmul.
    # Only the halo rows (top W+1 / bottom W+1) need zeros; the interior is
    # fully rewritten every step.  (Not gated on pl.program_id(0)==0: with the
    # batch axis "parallel" a megacore split would leave the second core's
    # scratch halos uninitialized.)
    cin = a.shape[1]
    halo = jnp.zeros((W + 1, cin), jnp.float32)
    pad_ref[pl.ds(0, W + 1), :] = halo
    pad_ref[pl.ds(W + 1 + HW, W + 1), :] = halo
    pad_ref[pl.ds(W + 1, HW), :] = a

    lmask = m_ref[:, 0:1]   # zero where w == 0      (left-neighbour wrap)
    rmask = m_ref[:, 1:2]   # zero where w == W - 1  (right-neighbour wrap)

    taps = []
    for dh in range(3):
      for dw in range(3):
        p = pad_ref[pl.ds(dh * W + dw, HW), :]
        if dw == 0:
          p = p * lmask
        elif dw == 2:
          p = p * rmask
        taps.append(p)
    # lane-concatenated im2col slab: column index = (3*dh + dw)*Cin + ci,
    # matching the wrapper's (9*Cin, CO) weight slab layout.
    slab = jnp.concatenate(taps, axis=-1).astype(dot_dtype)
    return jnp.dot(slab, w_ref[...].astype(dot_dtype),
                   preferred_element_type=jnp.float32)

  # ---- g branch: BN -> ReLU -> conv3x3 (bias folded into ts) -> maxpool 2x2 ----
  ag = jnp.maximum(g_ref[0] * sg_ref[...] + tg_ref[...], 0.0)
  gconv = conv3x3(pg_ref, Wg, HWg, ag, wg_ref, mg_ref)

  # 2x2 stride-2 max-pool via strided anchor extraction (no selection matmul).
  pp_ref[...] = gconv
  pooled = []
  for hp in range(Hx):
    base = 2 * hp * Wg
    p00 = pp_ref[pl.ds(base, Wx, stride=2), :]            # (2hp,   even w)
    p01 = pp_ref[pl.ds(base + 1, Wx, stride=2), :]         # (2hp,   odd  w)
    p10 = pp_ref[pl.ds(base + Wg, Wx, stride=2), :]        # (2hp+1, even w)
    p11 = pp_ref[pl.ds(base + Wg + 1, Wx, stride=2), :]    # (2hp+1, odd  w)
    pooled.append(jnp.maximum(jnp.maximum(p00, p01), jnp.maximum(p10, p11)))
  g_pool = jnp.concatenate(pooled, axis=0)                 # (HWx, CO)

  # ---- x branch: BN -> ReLU -> conv3x3 (bias folded into ts) ----
  xb = x_ref[0]
  ax = jnp.maximum(xb * sx_ref[...] + tx_ref[...], 0.0)
  xconv = conv3x3(px_ref, Wx, HWx, ax, wx_ref, mx_ref)

  # ---- fuse: (g_pool + x_conv) -> BN -> ReLU -> conv3x3 -> gate with x ----
  asum = jnp.maximum((g_pool + xconv) * ss_ref[...] + ts_ref[...], 0.0)
  gcconv = conv3x3(ps_ref, Wx, HWx, asum, ws_ref, mx_ref) + bs_ref[...]

  y_ref[0] = gcconv * xb


def attention_block_pallas(g, x, params, *, dot_dtype=jnp.float32):
  # dot_dtype=jnp.bfloat16 is recommended on v6e/v7x at larger channel counts
  # (MXU inputs in bf16, accumulation stays f32).
  B, C0, Hg, Wg = g.shape
  _, C1, Hx, Wx = x.shape
  CO = params["wg"].shape[0]
  assert Hg == 2 * Hx and Wg == 2 * Wx and C1 == CO
  assert Hg % 2 == 0 and Wg % 2 == 0      # even spatial dims (exact 2x2 pool)

  def flat_nhwc(t):                       # NCHW -> (B, H*W, C)
    b, c, h, w = t.shape
    return jnp.transpose(t, (0, 2, 3, 1)).reshape(b, h * w, c)

  def fold_bn(prefix):                    # eval-mode BN folded into scale/shift
    scale = params[prefix + "_gamma"] * lax.rsqrt(params[prefix + "_var"] + EPS)
    shift = params[prefix + "_beta"] - params[prefix + "_mean"] * scale
    return scale[None, :].astype(jnp.float32), shift[None, :].astype(jnp.float32)

  def conv_w(w):                          # torch OIHW -> (9*Cin, Cout) im2col slab
    co, ci, _, _ = w.shape
    return jnp.transpose(w, (2, 3, 1, 0)).reshape(9 * ci, co).astype(jnp.float32)

  sg, tg = fold_bn("bn_g")
  sx, tx = fold_bn("bn_x")
  ss, ts = fold_bn("bn_s")
  # Max-pool commutes with a per-channel constant add, so the g- and x-branch
  # conv biases fold into the fused-stage BN shift (bs must NOT be folded).
  ts = ts + ss * (params["bg"] + params["bx"])[None, :].astype(jnp.float32)

  wg, wx, ws = conv_w(params["wg"]), conv_w(params["wx"]), conv_w(params["ws"])
  bs = params["bs"][None, :].astype(jnp.float32)

  g_f = flat_nhwc(g).astype(jnp.float32)
  x_f = flat_nhwc(x).astype(jnp.float32)

  def wrap_masks(H, W):                   # columns: [w != 0, w != W-1]
    widx = np.arange(H * W) % W
    return jnp.asarray(
        np.stack([(widx != 0), (widx != W - 1)], axis=1).astype(np.float32))

  mg_m = wrap_masks(Hg, Wg)
  mx_m = wrap_masks(Hx, Wx)

  kernel = functools.partial(
      _attention_block_kernel,
      Hg=Hg, Wg=Wg, Hx=Hx, Wx=Wx, dot_dtype=dot_dtype)

  def full(shape):
    return pl.BlockSpec(shape, lambda b, _n=len(shape): (0,) * _n)

  def per_batch(hw, c):
    return pl.BlockSpec((1, hw, c), lambda b: (b, 0, 0))

  y_f = pl.pallas_call(
      kernel,
      out_shape=jax.ShapeDtypeStruct((B, Hx * Wx, CO), jnp.float32),
      grid_spec=pltpu.PrefetchScalarGridSpec(
          num_scalar_prefetch=0,
          grid=(B,),
          in_specs=[
              per_batch(Hg * Wg, C0),                 # g
              per_batch(Hx * Wx, C1),                 # x
              full((Hg * Wg, 2)),                     # wrap masks (g resolution)
              full((Hx * Wx, 2)),                     # wrap masks (x resolution)
              full((1, C0)), full((1, C0)),           # BN scale/shift for g
              full((9 * C0, CO)),                     # im2col conv weights for g
              full((1, C1)), full((1, C1)),           # BN scale/shift for x
              full((9 * C1, CO)),                     # im2col conv weights for x
              full((1, CO)), full((1, CO)),           # BN scale/shift for gc (bias-folded)
              full((9 * CO, CO)),                     # im2col conv weights for gc
              full((1, CO)),                          # bias for gc conv
          ],
          out_specs=per_batch(Hx * Wx, CO),
          scratch_shapes=[
              pltpu.VMEM((Hg * Wg + 2 * Wg + 2, C0), jnp.float32),  # padded g
              pltpu.VMEM((Hx * Wx + 2 * Wx + 2, C1), jnp.float32),  # padded x
              pltpu.VMEM((Hx * Wx + 2 * Wx + 2, CO), jnp.float32),  # padded sum
              pltpu.VMEM((Hg * Wg, CO), jnp.float32),               # pool staging
          ]),
      compiler_params=pltpu.CompilerParams(
          dimension_semantics=("parallel",)),
  )(g_f, x_f, mg_m, mx_m, sg, tg, wg, sx, tx, wx, ss, ts, ws, bs)

  y = y_f.reshape(B, Hx, Wx, CO)
  return jnp.transpose(y, (0, 3, 1, 2))   # back to NCHW


# ---------------- pure-JAX reference (for correctness check) ----------------
def attention_block_ref(g, x, p):
  def bn_relu(t, prefix):
    s = p[prefix + "_gamma"] * lax.rsqrt(p[prefix + "_var"] + EPS)
    b = p[prefix + "_beta"] - p[prefix + "_mean"] * s
    return jnp.maximum(t * s[None, :, None, None] + b[None, :, None, None], 0.0)

  def conv(t, w, b):
    o = lax.conv_general_dilated(t, w, (1, 1), ((1, 1), (1, 1)),
                                 dimension_numbers=("NCHW", "OIHW", "NCHW"))
    return o + b[None, :, None, None]

  gp = conv(bn_relu(g, "bn_g"), p["wg"], p["bg"])
  gp = lax.reduce_window(gp, -jnp.inf, lax.max,
                         (1, 1, 2, 2), (1, 1, 2, 2), "VALID")
  xc = conv(bn_relu(x, "bn_x"), p["wx"], p["bx"])
  gc = conv(bn_relu(gp + xc, "bn_s"), p["ws"], p["bs"])
  return gc * x


def init_params(key, c0, c1):
  co = c1
  p = {}
  ks = iter(jax.random.split(key, 4 * 3 + 2 * 3))
  for name, c in [("bn_g", c0), ("bn_x", c1), ("bn_s", c1)]:
    p[name + "_gamma"] = jax.random.uniform(next(ks), (c,), jnp.float32, 0.5, 1.5)
    p[name + "_beta"] = 0.1 * jax.random.normal(next(ks), (c,), jnp.float32)
    p[name + "_mean"] = 0.1 * jax.random.normal(next(ks), (c,), jnp.float32)
    p[name + "_var"] = jax.random.uniform(next(ks), (c,), jnp.float32, 0.5, 1.5)
  for name, ci in [("g", c0), ("x", c1), ("s", co)]:
    p["w" + name] = 0.1 * jax.random.normal(next(ks), (co, ci, 3, 3), jnp.float32)
    p["b" + name] = 0.1 * jax.random.normal(next(ks), (co,), jnp.float32)
  return p


if __name__ == "__main__":
  key = jax.random.PRNGKey(0)
  kg, kx, kp = jax.random.split(key, 3)

  B, C0, C1, H, W = 2, 4, 8, 16, 16          # in_c = (4, 8) -> out_c = 8
  g = jax.random.normal(kg, (B, C0, H, W), jnp.float32)
  x = jax.random.normal(kx, (B, C1, H // 2, W // 2), jnp.float32)
  params = init_params(kp, C0, C1)

  y = attention_block_pallas(g, x, params)
  y = jax.block_until_ready(y)

  y_ref = attention_block_ref(g, x, params)
  assert y.shape == y_ref.shape == (B, C1, H // 2, W // 2)
  assert float(jnp.max(jnp.abs(y - y_ref))) < 1e-2
  print("KERNEL_OK")
</pallas_src>

<mosaic_0001>
module attributes {stable_mosaic.version = 11 : i64} {
  func.func @_attention_block_kernel(%arg0: i32, %arg1: memref<1x256x4xf32, #tpu.memory_space<vmem>>, %arg2: memref<1x64x8xf32, #tpu.memory_space<vmem>>, %arg3: memref<256x2xf32, #tpu.memory_space<vmem>>, %arg4: memref<64x2xf32, #tpu.memory_space<vmem>>, %arg5: memref<1x4xf32, #tpu.memory_space<vmem>>, %arg6: memref<1x4xf32, #tpu.memory_space<vmem>>, %arg7: memref<36x8xf32, #tpu.memory_space<vmem>>, %arg8: memref<1x8xf32, #tpu.memory_space<vmem>>, %arg9: memref<1x8xf32, #tpu.memory_space<vmem>>, %arg10: memref<72x8xf32, #tpu.memory_space<vmem>>, %arg11: memref<1x8xf32, #tpu.memory_space<vmem>>, %arg12: memref<1x8xf32, #tpu.memory_space<vmem>>, %arg13: memref<72x8xf32, #tpu.memory_space<vmem>>, %arg14: memref<1x8xf32, #tpu.memory_space<vmem>>, %arg15: memref<1x64x8xf32, #tpu.memory_space<vmem>>, %arg16: memref<290x4xf32, #tpu.memory_space<vmem>>, %arg17: memref<82x8xf32, #tpu.memory_space<vmem>>, %arg18: memref<82x8xf32, #tpu.memory_space<vmem>>, %arg19: memref<256x8xf32, #tpu.memory_space<vmem>>) attributes {dimension_semantics = [#tpu.dimension_semantics<parallel>], iteration_bounds = array<i64: 2>, scalar_prefetch = 0 : i64, scratch_operands = 4 : i64, tpu.core_type = #tpu.core_type<tc>, window_params = [{transform_indices = @transform_0, window_bounds = array<i64: 1, 256, 4>}, {transform_indices = @transform_1, window_bounds = array<i64: 1, 64, 8>}, {pipeline_mode = #tpu.pipeline_mode<synchronous>, transform_indices = @transform_2, window_bounds = array<i64: 256, 2>}, {pipeline_mode = #tpu.pipeline_mode<synchronous>, transform_indices = @transform_3, window_bounds = array<i64: 64, 2>}, {pipeline_mode = #tpu.pipeline_mode<synchronous>, transform_indices = @transform_4, window_bounds = array<i64: 1, 4>}, {pipeline_mode = #tpu.pipeline_mode<synchronous>, transform_indices = @transform_5, window_bounds = array<i64: 1, 4>}, {pipeline_mode = #tpu.pipeline_mode<synchronous>, transform_indices = @transform_6, window_bounds = array<i64: 36, 8>}, {pipeline_mode = #tpu.pipeline_mode<synchronous>, transform_indices = @transform_7, window_bounds = array<i64: 1, 8>}, {pipeline_mode = #tpu.pipeline_mode<synchronous>, transform_indices = @transform_8, window_bounds = array<i64: 1, 8>}, {pipeline_mode = #tpu.pipeline_mode<synchronous>, transform_indices = @transform_9, window_bounds = array<i64: 72, 8>}, {pipeline_mode = #tpu.pipeline_mode<synchronous>, transform_indices = @transform_10, window_bounds = array<i64: 1, 8>}, {pipeline_mode = #tpu.pipeline_mode<synchronous>, transform_indices = @transform_11, window_bounds = array<i64: 1, 8>}, {pipeline_mode = #tpu.pipeline_mode<synchronous>, transform_indices = @transform_12, window_bounds = array<i64: 72, 8>}, {pipeline_mode = #tpu.pipeline_mode<synchronous>, transform_indices = @transform_13, window_bounds = array<i64: 1, 8>}, {transform_indices = @transform_14, window_bounds = array<i64: 1, 64, 8>}]} {
    %c0 = arith.constant 0 : index
    %c0_0 = arith.constant 0 : index
    %c0_1 = arith.constant 0 : index
    %0 = vector.load %arg1[%c0, %c0_0, %c0_1] : memref<1x256x4xf32, #tpu.memory_space<vmem>>, vector<1x256x4xf32>
    %1 = vector.shape_cast %0 : vector<1x256x4xf32> to vector<256x4xf32>
    %c0_2 = arith.constant 0 : index
    %c0_3 = arith.constant 0 : index
    %2 = vector.load %arg5[%c0_2, %c0_3] : memref<1x4xf32, #tpu.memory_space<vmem>>, vector<1x4xf32>
    %3 = vector.broadcast %2 : vector<1x4xf32> to vector<256x4xf32>
    %4 = arith.mulf %1, %3 : vector<256x4xf32>
    %c0_4 = arith.constant 0 : index
    %c0_5 = arith.constant 0 : index
    %5 = vector.load %arg6[%c0_4, %c0_5] : memref<1x4xf32, #tpu.memory_space<vmem>>, vector<1x4xf32>
    %6 = vector.broadcast %5 : vector<1x4xf32> to vector<256x4xf32>
    %7 = arith.addf %4, %6 : vector<256x4xf32>
    %cst = arith.constant 0.000000e+00 : f32
    %8 = vector.broadcast %cst : f32 to vector<256x4xf32>
    %9 = arith.maximumf %7, %8 : vector<256x4xf32>
    %cst_6 = arith.constant 0.000000e+00 : f32
    %10 = vector.broadcast %cst_6 : f32 to vector<17x4xf32>
    %c0_7 = arith.constant 0 : index
    %c0_8 = arith.constant 0 : index
    %11 = vector.load %arg16[%c0_7, %c0_8] : memref<290x4xf32, #tpu.memory_space<vmem>>, vector<17x4xf32>
    tpu.vector_store %arg16[%c0_7, %c0_8], %10 {strides = array<i32>} : memref<290x4xf32, #tpu.memory_space<vmem>>, vector<17x4xf32>,
    %c273 = arith.constant 273 : index
    %c0_9 = arith.constant 0 : index
    %12 = vector.load %arg16[%c273, %c0_9] : memref<290x4xf32, #tpu.memory_space<vmem>>, vector<17x4xf32>
    tpu.vector_store %arg16[%c273, %c0_9], %10 {strides = array<i32>} : memref<290x4xf32, #tpu.memory_space<vmem>>, vector<17x4xf32>,
    %c17 = arith.constant 17 : index
    %c0_10 = arith.constant 0 : index
    %13 = vector.load %arg16[%c17, %c0_10] : memref<290x4xf32, #tpu.memory_space<vmem>>, vector<256x4xf32>
    tpu.vector_store %arg16[%c17, %c0_10], %9 {strides = array<i32>} : memref<290x4xf32, #tpu.memory_space<vmem>>, vector<256x4xf32>,
    %c0_11 = arith.constant 0 : index
    %c0_12 = arith.constant 0 : index
    %14 = vector.load %arg3[%c0_11, %c0_12] : memref<256x2xf32, #tpu.memory_space<vmem>>, vector<256x1xf32>
    %c0_13 = arith.constant 0 : index
    %c1 = arith.constant 1 : index
    %15 = vector.load %arg3[%c0_13, %c1] : memref<256x2xf32, #tpu.memory_space<vmem>>, vector<256x1xf32>
    %c0_14 = arith.constant 0 : index
    %c0_15 = arith.constant 0 : index
    %16 = vector.load %arg16[%c0_14, %c0_15] : memref<290x4xf32, #tpu.memory_space<vmem>>, vector<256x4xf32>
    %17 = vector.broadcast %14 : vector<256x1xf32> to vector<256x4xf32>
    %18 = arith.mulf %16, %17 : vector<256x4xf32>
    %c1_16 = arith.constant 1 : index
    %c0_17 = arith.constant 0 : index
    %19 = vector.load %arg16[%c1_16, %c0_17] : memref<290x4xf32, #tpu.memory_space<vmem>>, vector<256x4xf32>
    %c2 = arith.constant 2 : index
    %c0_18 = arith.constant 0 : index
    %20 = vector.load %arg16[%c2, %c0_18] : memref<290x4xf32, #tpu.memory_space<vmem>>, vector<256x4xf32>
    %21 = vector.broadcast %15 : vector<256x1xf32> to vector<256x4xf32>
    %22 = arith.mulf %20, %21 : vector<256x4xf32>
    %c16 = arith.constant 16 : index
    %c0_19 = arith.constant 0 : index
    %23 = vector.load %arg16[%c16, %c0_19] : memref<290x4xf32, #tpu.memory_space<vmem>>, vector<256x4xf32>
    %24 = vector.broadcast %14 : vector<256x1xf32> to vector<256x4xf32>
    %25 = arith.mulf %23, %24 : vector<256x4xf32>
    %c17_20 = arith.constant 17 : index
    %c0_21 = arith.constant 0 : index
    %26 = vector.load %arg16[%c17_20, %c0_21] : memref<290x4xf32, #tpu.memory_space<vmem>>, vector<256x4xf32>
    %c18 = arith.constant 18 : index
    %c0_22 = arith.constant 0 : index
    %27 = vector.load %arg16[%c18, %c0_22] : memref<290x4xf32, #tpu.memory_space<vmem>>, vector<256x4xf32>
    %28 = vector.broadcast %15 : vector<256x1xf32> to vector<256x4xf32>
    %29 = arith.mulf %27, %28 : vector<256x4xf32>
    %c32 = arith.constant 32 : index
    %c0_23 = arith.constant 0 : index
    %30 = vector.load %arg16[%c32, %c0_23] : memref<290x4xf32, #tpu.memory_space<vmem>>, vector<256x4xf32>
    %31 = vector.broadcast %14 : vector<256x1xf32> to vector<256x4xf32>
    %32 = arith.mulf %30, %31 : vector<256x4xf32>
    %c33 = arith.constant 33 : index
    %c0_24 = arith.constant 0 : index
    %33 = vector.load %arg16[%c33, %c0_24] : memref<290x4xf32, #tpu.memory_space<vmem>>, vector<256x4xf32>
    %c34 = arith.constant 34 : index
    %c0_25 = arith.constant 0 : index
    %34 = vector.load %arg16[%c34, %c0_25] : memref<290x4xf32, #tpu.memory_space<vmem>>, vector<256x4xf32>
    %35 = vector.broadcast %15 : vector<256x1xf32> to vector<256x4xf32>
    %36 = arith.mulf %34, %35 : vector<256x4xf32>
    %37 = tpu.concatenate %18, %19, %22, %25, %26, %29, %32, %33, %36 in 1 : vector<256x4xf32>, vector<256x4xf32>, vector<256x4xf32>, vector<256x4xf32>, vector<256x4xf32>, vector<256x4xf32>, vector<256x4xf32>, vector<256x4xf32>, vector<256x4xf32> -> vector<256x36xf32>
    %c0_26 = arith.constant 0 : index
    %c0_27 = arith.constant 0 : index
    %38 = vector.load %arg7[%c0_26, %c0_27] : memref<36x8xf32, #tpu.memory_space<vmem>>, vector<36x8xf32>
    %cst_28 = arith.constant dense<0.000000e+00> : vector<256x8xf32>
    %39 = tpu.matmul %37, %38, %cst_28 {dimension_numbers = #tpu.dot_dimension_numbers<[1], [0], [0], [1], [0, 0, 1, 1], [], []>} : vector<256x36xf32>, vector<36x8xf32>, vector<256x8xf32> -> vector<256x8xf32>
    %c0_29 = arith.constant 0 : index
    %c0_30 = arith.constant 0 : index
    %40 = vector.load %arg19[%c0_29, %c0_30] : memref<256x8xf32, #tpu.memory_space<vmem>>, vector<256x8xf32>
    tpu.vector_store %arg19[%c0_29, %c0_30], %39 {strides = array<i32>} : memref<256x8xf32, #tpu.memory_space<vmem>>, vector<256x8xf32>,
    %c0_31 = arith.constant 0 : index
    %c0_32 = arith.constant 0 : index
    %41 = tpu.strided_load %arg19[%c0_31, %c0_32] {strides = array<i32: 2, 1>} : memref<256x8xf32, #tpu.memory_space<vmem>>, vector<8x8xf32>
    %c1_33 = arith.constant 1 : index
    %c0_34 = arith.constant 0 : index
    %42 = tpu.strided_load %arg19[%c1_33, %c0_34] {strides = array<i32: 2, 1>} : memref<256x8xf32, #tpu.memory_space<vmem>>, vector<8x8xf32>
    %c16_35 = arith.constant 16 : index
    %c0_36 = arith.constant 0 : index
    %43 = tpu.strided_load %arg19[%c16_35, %c0_36] {strides = array<i32: 2, 1>} : memref<256x8xf32, #tpu.memory_space<vmem>>, vector<8x8xf32>
    %c17_37 = arith.constant 17 : index
    %c0_38 = arith.constant 0 : index
    %44 = tpu.strided_load %arg19[%c17_37, %c0_38] {strides = array<i32: 2, 1>} : memref<256x8xf32, #tpu.memory_space<vmem>>, vector<8x8xf32>
    %45 = arith.maximumf %41, %42 : vector<8x8xf32>
    %46 = arith.maximumf %43, %44 : vector<8x8xf32>
    %47 = arith.maximumf %45, %46 : vector<8x8xf32>
    %c32_39 = arith.constant 32 : index
    %c0_40 = arith.constant 0 : index
    %48 = tpu.strided_load %arg19[%c32_39, %c0_40] {strides = array<i32: 2, 1>} : memref<256x8xf32, #tpu.memory_space<vmem>>, vector<8x8xf32>
    %c33_41 = arith.constant 33 : index
    %c0_42 = arith.constant 0 : index
    %49 = tpu.strided_load %arg19[%c33_41, %c0_42] {strides = array<i32: 2, 1>} : memref<256x8xf32, #tpu.memory_space<vmem>>, vector<8x8xf32>
    %c48 = arith.constant 48 : index
    %c0_43 = arith.constant 0 : index
    %50 = tpu.strided_load %arg19[%c48, %c0_43] {strides = array<i32: 2, 1>} : memref<256x8xf32, #tpu.memory_space<vmem>>, vector<8x8xf32>
    %c49 = arith.constant 49 : index
    %c0_44 = arith.constant 0 : index
    %51 = tpu.strided_load %arg19[%c49, %c0_44] {strides = array<i32: 2, 1>} : memref<256x8xf32, #tpu.memory_space<vmem>>, vector<8x8xf32>
    %52 = arith.maximumf %48, %49 : vector<8x8xf32>
    %53 = arith.maximumf %50, %51 : vector<8x8xf32>
    %54 = arith.maximumf %52, %53 : vector<8x8xf32>
    %c64 = arith.constant 64 : index
    %c0_45 = arith.constant 0 : index
    %55 = tpu.strided_load %arg19[%c64, %c0_45] {strides = array<i32: 2, 1>} : memref<256x8xf32, #tpu.memory_space<vmem>>, vector<8x8xf32>
    %c65 = arith.constant 65 : index
    %c0_46 = arith.constant 0 : index
    %56 = tpu.strided_load %arg19[%c65, %c0_46] {strides = array<i32: 2, 1>} : memref<256x8xf32, #tpu.memory_space<vmem>>, vector<8x8xf32>
    %c80 = arith.constant 80 : index
    %c0_47 = arith.constant 0 : index
    %57 = tpu.strided_load %arg19[%c80, %c0_47] {strides = array<i32: 2, 1>} : memref<256x8xf32, #tpu.memory_space<vmem>>, vector<8x8xf32>
    %c81 = arith.constant 81 : index
    %c0_48 = arith.constant 0 : index
    %58 = tpu.strided_load %arg19[%c81, %c0_48] {strides = array<i32: 2, 1>} : memref<256x8xf32, #tpu.memory_space<vmem>>, vector<8x8xf32>
    %59 = arith.maximumf %55, %56 : vector<8x8xf32>
    %60 = arith.maximumf %57, %58 : vector<8x8xf32>
    %61 = arith.maximumf %59, %60 : vector<8x8xf32>
    %c96 = arith.constant 96 : index
    %c0_49 = arith.constant 0 : index
    %62 = tpu.strided_load %arg19[%c96, %c0_49] {strides = array<i32: 2, 1>} : memref<256x8xf32, #tpu.memory_space<vmem>>, vector<8x8xf32>
    %c97 = arith.constant 97 : index
    %c0_50 = arith.constant 0 : index
    %63 = tpu.strided_load %arg19[%c97, %c0_50] {strides = array<i32: 2, 1>} : memref<256x8xf32, #tpu.memory_space<vmem>>, vector<8x8xf32>
    %c112 = arith.constant 112 : index
    %c0_51 = arith.constant 0 : index
    %64 = tpu.strided_load %arg19[%c112, %c0_51] {strides = array<i32: 2, 1>} : memref<256x8xf32, #tpu.memory_space<vmem>>, vector<8x8xf32>
    %c113 = arith.constant 113 : index
    %c0_52 = arith.constant 0 : index
    %65 = tpu.strided_load %arg19[%c113, %c0_52] {strides = array<i32: 2, 1>} : memref<256x8xf32, #tpu.memory_space<vmem>>, vector<8x8xf32>
    %66 = arith.maximumf %62, %63 : vector<8x8xf32>
    %67 = arith.maximumf %64, %65 : vector<8x8xf32>
    %68 = arith.maximumf %66, %67 : vector<8x8xf32>
    %c128 = arith.constant 128 : index
    %c0_53 = arith.constant 0 : index
    %69 = tpu.strided_load %arg19[%c128, %c0_53] {strides = array<i32: 2, 1>} : memref<256x8xf32, #tpu.memory_space<vmem>>, vector<8x8xf32>
    %c129 = arith.constant 129 : index
    %c0_54 = arith.constant 0 : index
    %70 = tpu.strided_load %arg19[%c129, %c0_54] {strides = array<i32: 2, 1>} : memref<256x8xf32, #tpu.memory_space<vmem>>, vector<8x8xf32>
    %c144 = arith.constant 144 : index
    %c0_55 = arith.constant 0 : index
    %71 = tpu.strided_load %arg19[%c144, %c0_55] {strides = array<i32: 2, 1>} : memref<256x8xf32, #tpu.memory_space<vmem>>, vector<8x8xf32>
    %c145 = arith.constant 145 : index
    %c0_56 = arith.constant 0 : index
    %72 = tpu.strided_load %arg19[%c145, %c0_56] {strides = array<i32: 2, 1>} : memref<256x8xf32, #tpu.memory_space<vmem>>, vector<8x8xf32>
    %73 = arith.maximumf %69, %70 : vector<8x8xf32>
    %74 = arith.maximumf %71, %72 : vector<8x8xf32>
    %75 = arith.maximumf %73, %74 : vector<8x8xf32>
    %c160 = arith.constant 160 : index
    %c0_57 = arith.constant 0 : index
    %76 = tpu.strided_load %arg19[%c160, %c0_57] {strides = array<i32: 2, 1>} : memref<256x8xf32, #tpu.memory_space<vmem>>, vector<8x8xf32>
    %c161 = arith.constant 161 : index
    %c0_58 = arith.constant 0 : index
    %77 = tpu.strided_load %arg19[%c161, %c0_58] {strides = array<i32: 2, 1>} : memref<256x8xf32, #tpu.memory_space<vmem>>, vector<8x8xf32>
    %c176 = arith.constant 176 : index
    %c0_59 = arith.constant 0 : index
    %78 = tpu.strided_load %arg19[%c176, %c0_59] {strides = array<i32: 2, 1>} : memref<256x8xf32, #tpu.memory_space<vmem>>, vector<8x8xf32>
    %c177 = arith.constant 177 : index
    %c0_60 = arith.constant 0 : index
    %79 = tpu.strided_load %arg19[%c177, %c0_60] {strides = array<i32: 2, 1>} : memref<256x8xf32, #tpu.memory_space<vmem>>, vector<8x8xf32>
    %80 = arith.maximumf %76, %77 : vector<8x8xf32>
    %81 = arith.maximumf %78, %79 : vector<8x8xf32>
    %82 = arith.maximumf %80, %81 : vector<8x8xf32>
    %c192 = arith.constant 192 : index
    %c0_61 = arith.constant 0 : index
    %83 = tpu.strided_load %arg19[%c192, %c0_61] {strides = array<i32: 2, 1>} : memref<256x8xf32, #tpu.memory_space<vmem>>, vector<8x8xf32>
    %c193 = arith.constant 193 : index
    %c0_62 = arith.constant 0 : index
    %84 = tpu.strided_load %arg19[%c193, %c0_62] {strides = array<i32: 2, 1>} : memref<256x8xf32, #tpu.memory_space<vmem>>, vector<8x8xf32>
    %c208 = arith.constant 208 : index
    %c0_63 = arith.constant 0 : index
    %85 = tpu.strided_load %arg19[%c208, %c0_63] {strides = array<i32: 2, 1>} : memref<256x8xf32, #tpu.memory_space<vmem>>, vector<8x8xf32>
    %c209 = arith.constant 209 : index
    %c0_64 = arith.constant 0 : index
    %86 = tpu.strided_load %arg19[%c209, %c0_64] {strides = array<i32: 2, 1>} : memref<256x8xf32, #tpu.memory_space<vmem>>, vector<8x8xf32>
    %87 = arith.maximumf %83, %84 : vector<8x8xf32>
    %88 = arith.maximumf %85, %86 : vector<8x8xf32>
    %89 = arith.maximumf %87, %88 : vector<8x8xf32>
    %c224 = arith.constant 224 : index
    %c0_65 = arith.constant 0 : index
    %90 = tpu.strided_load %arg19[%c224, %c0_65] {strides = array<i32: 2, 1>} : memref<256x8xf32, #tpu.memory_space<vmem>>, vector<8x8xf32>
    %c225 = arith.constant 225 : index
    %c0_66 = arith.constant 0 : index
    %91 = tpu.strided_load %arg19[%c225, %c0_66] {strides = array<i32: 2, 1>} : memref<256x8xf32, #tpu.memory_space<vmem>>, vector<8x8xf32>
    %c240 = arith.constant 240 : index
    %c0_67 = arith.constant 0 : index
    %92 = tpu.strided_load %arg19[%c240, %c0_67] {strides = array<i32: 2, 1>} : memref<256x8xf32, #tpu.memory_space<vmem>>, vector<8x8xf32>
    %c241 = arith.constant 241 : index
    %c0_68 = arith.constant 0 : index
    %93 = tpu.strided_load %arg19[%c241, %c0_68] {strides = array<i32: 2, 1>} : memref<256x8xf32, #tpu.memory_space<vmem>>, vector<8x8xf32>
    %94 = arith.maximumf %90, %91 : vector<8x8xf32>
    %95 = arith.maximumf %92, %93 : vector<8x8xf32>
    %96 = arith.maximumf %94, %95 : vector<8x8xf32>
    %97 = tpu.concatenate %47, %54, %61, %68, %75, %82, %89, %96 in 0 : vector<8x8xf32>, vector<8x8xf32>, vector<8x8xf32>, vector<8x8xf32>, vector<8x8xf32>, vector<8x8xf32>, vector<8x8xf32>, vector<8x8xf32> -> vector<64x8xf32>
    %c0_69 = arith.constant 0 : index
    %c0_70 = arith.constant 0 : index
    %c0_71 = arith.constant 0 : index
    %98 = vector.load %arg2[%c0_69, %c0_70, %c0_71] : memref<1x64x8xf32, #tpu.memory_space<vmem>>, vector<1x64x8xf32>
    %99 = vector.shape_cast %98 : vector<1x64x8xf32> to vector<64x8xf32>
    %c0_72 = arith.constant 0 : index
    %c0_73 = arith.constant 0 : index
    %100 = vector.load %arg8[%c0_72, %c0_73] : memref<1x8xf32, #tpu.memory_space<vmem>>, vector<1x8xf32>
    %101 = vector.broadcast %100 : vector<1x8xf32> to vector<64x8xf32>
    %102 = arith.mulf %99, %101 : vector<64x8xf32>
    %c0_74 = arith.constant 0 : index
    %c0_75 = arith.constant 0 : index
    %103 = vector.load %arg9[%c0_74, %c0_75] : memref<1x8xf32, #tpu.memory_space<vmem>>, vector<1x8xf32>
    %104 = vector.broadcast %103 : vector<1x8xf32> to vector<64x8xf32>
    %105 = arith.addf %102, %104 : vector<64x8xf32>
    %cst_76 = arith.constant 0.000000e+00 : f32
    %106 = vector.broadcast %cst_76 : f32 to vector<64x8xf32>
    %107 = arith.maximumf %105, %106 : vector<64x8xf32>
    %cst_77 = arith.constant 0.000000e+00 : f32
    %108 = vector.broadcast %cst_77 : f32 to vector<9x8xf32>
    %c0_78 = arith.constant 0 : index
    %c0_79 = arith.constant 0 : index
    %109 = vector.load %arg17[%c0_78, %c0_79] : memref<82x8xf32, #tpu.memory_space<vmem>>, vector<9x8xf32>
    tpu.vector_store %arg17[%c0_78, %c0_79], %108 {strides = array<i32>} : memref<82x8xf32, #tpu.memory_space<vmem>>, vector<9x8xf32>,
    %c73 = arith.constant 73 : index
    %c0_80 = arith.constant 0 : index
    %110 = vector.load %arg17[%c73, %c0_80] : memref<82x8xf32, #tpu.memory_space<vmem>>, vector<9x8xf32>
    tpu.vector_store %arg17[%c73, %c0_80], %108 {strides = array<i32>} : memref<82x8xf32, #tpu.memory_space<vmem>>, vector<9x8xf32>,
    %c9 = arith.constant 9 : index
    %c0_81 = arith.constant 0 : index
    %111 = vector.load %arg17[%c9, %c0_81] : memref<82x8xf32, #tpu.memory_space<vmem>>, vector<64x8xf32>
    tpu.vector_store %arg17[%c9, %c0_81], %107 {strides = array<i32>} : memref<82x8xf32, #tpu.memory_space<vmem>>, vector<64x8xf32>,
    %c0_82 = arith.constant 0 : index
    %c0_83 = arith.constant 0 : index
    %112 = vector.load %arg4[%c0_82, %c0_83] : memref<64x2xf32, #tpu.memory_space<vmem>>, vector<64x1xf32>
    %c0_84 = arith.constant 0 : index
    %c1_85 = arith.constant 1 : index
    %113 = vector.load %arg4[%c0_84, %c1_85] : memref<64x2xf32, #tpu.memory_space<vmem>>, vector<64x1xf32>
    %c0_86 = arith.constant 0 : index
    %c0_87 = arith.constant 0 : index
    %114 = vector.load %arg17[%c0_86, %c0_87] : memref<82x8xf32, #tpu.memory_space<vmem>>, vector<64x8xf32>
    %115 = vector.broadcast %112 : vector<64x1xf32> to vector<64x8xf32>
    %116 = arith.mulf %114, %115 : vector<64x8xf32>
    %c1_88 = arith.constant 1 : index
    %c0_89 = arith.constant 0 : index
    %117 = vector.load %arg17[%c1_88, %c0_89] : memref<82x8xf32, #tpu.memory_space<vmem>>, vector<64x8xf32>
    %c2_90 = arith.constant 2 : index
    %c0_91 = arith.constant 0 : index
    %118 = vector.load %arg17[%c2_90, %c0_91] : memref<82x8xf32, #tpu.memory_space<vmem>>, vector<64x8xf32>
    %119 = vector.broadcast %113 : vector<64x1xf32> to vector<64x8xf32>
    %120 = arith.mulf %118, %119 : vector<64x8xf32>
    %c8 = arith.constant 8 : index
    %c0_92 = arith.constant 0 : index
    %121 = vector.load %arg17[%c8, %c0_92] : memref<82x8xf32, #tpu.memory_space<vmem>>, vector<64x8xf32>
    %122 = vector.broadcast %112 : vector<64x1xf32> to vector<64x8xf32>
    %123 = arith.mulf %121, %122 : vector<64x8xf32>
    %c9_93 = arith.constant 9 : index
    %c0_94 = arith.constant 0 : index
    %124 = vector.load %arg17[%c9_93, %c0_94] : memref<82x8xf32, #tpu.memory_space<vmem>>, vector<64x8xf32>
    %c10 = arith.constant 10 : index
    %c0_95 = arith.constant 0 : index
    %125 = vector.load %arg17[%c10, %c0_95] : memref<82x8xf32, #tpu.memory_space<vmem>>, vector<64x8xf32>
    %126 = vector.broadcast %113 : vector<64x1xf32> to vector<64x8xf32>
    %127 = arith.mulf %125, %126 : vector<64x8xf32>
    %c16_96 = arith.constant 16 : index
    %c0_97 = arith.constant 0 : index
    %128 = vector.load %arg17[%c16_96, %c0_97] : memref<82x8xf32, #tpu.memory_space<vmem>>, vector<64x8xf32>
    %129 = vector.broadcast %112 : vector<64x1xf32> to vector<64x8xf32>
    %130 = arith.mulf %128, %129 : vector<64x8xf32>
    %c17_98 = arith.constant 17 : index
    %c0_99 = arith.constant 0 : index
    %131 = vector.load %arg17[%c17_98, %c0_99] : memref<82x8xf32, #tpu.memory_space<vmem>>, vector<64x8xf32>
    %c18_100 = arith.constant 18 : index
    %c0_101 = arith.constant 0 : index
    %132 = vector.load %arg17[%c18_100, %c0_101] : memref<82x8xf32, #tpu.memory_space<vmem>>, vector<64x8xf32>
    %133 = vector.broadcast %113 : vector<64x1xf32> to vector<64x8xf32>
    %134 = arith.mulf %132, %133 : vector<64x8xf32>
    %135 = tpu.concatenate %116, %117, %120, %123, %124, %127, %130, %131, %134 in 1 : vector<64x8xf32>, vector<64x8xf32>, vector<64x8xf32>, vector<64x8xf32>, vector<64x8xf32>, vector<64x8xf32>, vector<64x8xf32>, vector<64x8xf32>, vector<64x8xf32> -> vector<64x72xf32>
    %c0_102 = arith.constant 0 : index
    %c0_103 = arith.constant 0 : index
    %136 = vector.load %arg10[%c0_102, %c0_103] : memref<72x8xf32, #tpu.memory_space<vmem>>, vector<72x8xf32>
    %cst_104 = arith.constant dense<0.000000e+00> : vector<64x8xf32>
    %137 = tpu.matmul %135, %136, %cst_104 {dimension_numbers = #tpu.dot_dimension_numbers<[1], [0], [0], [1], [0, 0, 1, 1], [], []>} : vector<64x72xf32>, vector<72x8xf32>, vector<64x8xf32> -> vector<64x8xf32>
    %138 = arith.addf %97, %137 : vector<64x8xf32>
    %c0_105 = arith.constant 0 : index
    %c0_106 = arith.constant 0 : index
    %139 = vector.load %arg11[%c0_105, %c0_106] : memref<1x8xf32, #tpu.memory_space<vmem>>, vector<1x8xf32>
    %140 = vector.broadcast %139 : vector<1x8xf32> to vector<64x8xf32>
    %141 = arith.mulf %138, %140 : vector<64x8xf32>
    %c0_107 = arith.constant 0 : index
    %c0_108 = arith.constant 0 : index
    %142 = vector.load %arg12[%c0_107, %c0_108] : memref<1x8xf32, #tpu.memory_space<vmem>>, vector<1x8xf32>
    %143 = vector.broadcast %142 : vector<1x8xf32> to vector<64x8xf32>
    %144 = arith.addf %141, %143 : vector<64x8xf32>
    %cst_109 = arith.constant 0.000000e+00 : f32
    %145 = vector.broadcast %cst_109 : f32 to vector<64x8xf32>
    %146 = arith.maximumf %144, %145 : vector<64x8xf32>
    %cst_110 = arith.constant 0.000000e+00 : f32
    %147 = vector.broadcast %cst_110 : f32 to vector<9x8xf32>
    %c0_111 = arith.constant 0 : index
    %c0_112 = arith.constant 0 : index
    %148 = vector.load %arg18[%c0_111, %c0_112] : memref<82x8xf32, #tpu.memory_space<vmem>>, vector<9x8xf32>
    tpu.vector_store %arg18[%c0_111, %c0_112], %147 {strides = array<i32>} : memref<82x8xf32, #tpu.memory_space<vmem>>, vector<9x8xf32>,
    %c73_113 = arith.constant 73 : index
    %c0_114 = arith.constant 0 : index
    %149 = vector.load %arg18[%c73_113, %c0_114] : memref<82x8xf32, #tpu.memory_space<vmem>>, vector<9x8xf32>
    tpu.vector_store %arg18[%c73_113, %c0_114], %147 {strides = array<i32>} : memref<82x8xf32, #tpu.memory_space<vmem>>, vector<9x8xf32>,
    %c9_115 = arith.constant 9 : index
    %c0_116 = arith.constant 0 : index
    %150 = vector.load %arg18[%c9_115, %c0_116] : memref<82x8xf32, #tpu.memory_space<vmem>>, vector<64x8xf32>
    tpu.vector_store %arg18[%c9_115, %c0_116], %146 {strides = array<i32>} : memref<82x8xf32, #tpu.memory_space<vmem>>, vector<64x8xf32>,
    %c0_117 = arith.constant 0 : index
    %c0_118 = arith.constant 0 : index
    %151 = vector.load %arg4[%c0_117, %c0_118] : memref<64x2xf32, #tpu.memory_space<vmem>>, vector<64x1xf32>
    %c0_119 = arith.constant 0 : index
    %c1_120 = arith.constant 1 : index
    %152 = vector.load %arg4[%c0_119, %c1_120] : memref<64x2xf32, #tpu.memory_space<vmem>>, vector<64x1xf32>
    %c0_121 = arith.constant 0 : index
    %c0_122 = arith.constant 0 : index
    %153 = vector.load %arg18[%c0_121, %c0_122] : memref<82x8xf32, #tpu.memory_space<vmem>>, vector<64x8xf32>
    %154 = vector.broadcast %151 : vector<64x1xf32> to vector<64x8xf32>
    %155 = arith.mulf %153, %154 : vector<64x8xf32>
    %c1_123 = arith.constant 1 : index
    %c0_124 = arith.constant 0 : index
    %156 = vector.load %arg18[%c1_123, %c0_124] : memref<82x8xf32, #tpu.memory_space<vmem>>, vector<64x8xf32>
    %c2_125 = arith.constant 2 : index
    %c0_126 = arith.constant 0 : index
    %157 = vector.load %arg18[%c2_125, %c0_126] : memref<82x8xf32, #tpu.memory_space<vmem>>, vector<64x8xf32>
    %158 = vector.broadcast %152 : vector<64x1xf32> to vector<64x8xf32>
    %159 = arith.mulf %157, %158 : vector<64x8xf32>
    %c8_127 = arith.constant 8 : index
    %c0_128 = arith.constant 0 : index
    %160 = vector.load %arg18[%c8_127, %c0_128] : memref<82x8xf32, #tpu.memory_space<vmem>>, vector<64x8xf32>
    %161 = vector.broadcast %151 : vector<64x1xf32> to vector<64x8xf32>
    %162 = arith.mulf %160, %161 : vector<64x8xf32>
    %c9_129 = arith.constant 9 : index
    %c0_130 = arith.constant 0 : index
    %163 = vector.load %arg18[%c9_129, %c0_130] : memref<82x8xf32, #tpu.memory_space<vmem>>, vector<64x8xf32>
    %c10_131 = arith.constant 10 : index
    %c0_132 = arith.constant 0 : index
    %164 = vector.load %arg18[%c10_131, %c0_132] : memref<82x8xf32, #tpu.memory_space<vmem>>, vector<64x8xf32>
    %165 = vector.broadcast %152 : vector<64x1xf32> to vector<64x8xf32>
    %166 = arith.mulf %164, %165 : vector<64x8xf32>
    %c16_133 = arith.constant 16 : index
    %c0_134 = arith.constant 0 : index
    %167 = vector.load %arg18[%c16_133, %c0_134] : memref<82x8xf32, #tpu.memory_space<vmem>>, vector<64x8xf32>
    %168 = vector.broadcast %151 : vector<64x1xf32> to vector<64x8xf32>
    %169 = arith.mulf %167, %168 : vector<64x8xf32>
    %c17_135 = arith.constant 17 : index
    %c0_136 = arith.constant 0 : index
    %170 = vector.load %arg18[%c17_135, %c0_136] : memref<82x8xf32, #tpu.memory_space<vmem>>, vector<64x8xf32>
    %c18_137 = arith.constant 18 : index
    %c0_138 = arith.constant 0 : index
    %171 = vector.load %arg18[%c18_137, %c0_138] : memref<82x8xf32, #tpu.memory_space<vmem>>, vector<64x8xf32>
    %172 = vector.broadcast %152 : vector<64x1xf32> to vector<64x8xf32>
    %173 = arith.mulf %171, %172 : vector<64x8xf32>
    %174 = tpu.concatenate %155, %156, %159, %162, %163, %166, %169, %170, %173 in 1 : vector<64x8xf32>, vector<64x8xf32>, vector<64x8xf32>, vector<64x8xf32>, vector<64x8xf32>, vector<64x8xf32>, vector<64x8xf32>, vector<64x8xf32>, vector<64x8xf32> -> vector<64x72xf32>
    %c0_139 = arith.constant 0 : index
    %c0_140 = arith.constant 0 : index
    %175 = vector.load %arg13[%c0_139, %c0_140] : memref<72x8xf32, #tpu.memory_space<vmem>>, vector<72x8xf32>
    %cst_141 = arith.constant dense<0.000000e+00> : vector<64x8xf32>
    %176 = tpu.matmul %174, %175, %cst_141 {dimension_numbers = #tpu.dot_dimension_numbers<[1], [0], [0], [1], [0, 0, 1, 1], [], []>} : vector<64x72xf32>, vector<72x8xf32>, vector<64x8xf32> -> vector<64x8xf32>
    %c0_142 = arith.constant 0 : index
    %c0_143 = arith.constant 0 : index
    %177 = vector.load %arg14[%c0_142, %c0_143] : memref<1x8xf32, #tpu.memory_space<vmem>>, vector<1x8xf32>
    %178 = vector.broadcast %177 : vector<1x8xf32> to vector<64x8xf32>
    %179 = arith.addf %176, %178 : vector<64x8xf32>
    %180 = arith.mulf %179, %99 : vector<64x8xf32>
    %c0_144 = arith.constant 0 : index
    %c0_145 = arith.constant 0 : index
    %c0_146 = arith.constant 0 : index
    %181 = vector.load %arg15[%c0_144, %c0_145, %c0_146] : memref<1x64x8xf32, #tpu.memory_space<vmem>>, vector<1x64x8xf32>
    %182 = vector.shape_cast %181 : vector<1x64x8xf32> to vector<64x8xf32>
    %183 = vector.shape_cast %180 : vector<64x8xf32> to vector<1x64x8xf32>
    tpu.vector_store %arg15[%c0_144, %c0_145, %c0_146], %183 {strides = array<i32>} : memref<1x64x8xf32, #tpu.memory_space<vmem>>, vector<1x64x8xf32>,
    return
  }
  func.func @transform_0(%arg0: i32) -> (i32, i32, i32) {
    %c0_i32 = arith.constant 0 : i32
    %c0_i32_0 = arith.constant 0 : i32
    %c0_i32_1 = arith.constant 0 : i32
    return %arg0, %c0_i32, %c0_i32_0 : i32, i32, i32
  }
  func.func @transform_1(%arg0: i32) -> (i32, i32, i32) {
    %c0_i32 = arith.constant 0 : i32
    %c0_i32_0 = arith.constant 0 : i32
    %c0_i32_1 = arith.constant 0 : i32
    return %arg0, %c0_i32, %c0_i32_0 : i32, i32, i32
  }
  func.func @transform_2(%arg0: i32) -> (i32, i32) {
    %c0_i32 = arith.constant 0 : i32
    %c0_i32_0 = arith.constant 0 : i32
    %c0_i32_1 = arith.constant 0 : i32
    return %c0_i32, %c0_i32_0 : i32, i32
  }
  func.func @transform_3(%arg0: i32) -> (i32, i32) {
    %c0_i32 = arith.constant 0 : i32
    %c0_i32_0 = arith.constant 0 : i32
    %c0_i32_1 = arith.constant 0 : i32
    return %c0_i32, %c0_i32_0 : i32, i32
  }
  func.func @transform_4(%arg0: i32) -> (i32, i32) {
    %c0_i32 = arith.constant 0 : i32
    %c0_i32_0 = arith.constant 0 : i32
    %c0_i32_1 = arith.constant 0 : i32
    return %c0_i32, %c0_i32_0 : i32, i32
  }
  func.func @transform_5(%arg0: i32) -> (i32, i32) {
    %c0_i32 = arith.constant 0 : i32
    %c0_i32_0 = arith.constant 0 : i32
    %c0_i32_1 = arith.constant 0 : i32
    return %c0_i32, %c0_i32_0 : i32, i32
  }
  func.func @transform_6(%arg0: i32) -> (i32, i32) {
    %c0_i32 = arith.constant 0 : i32
    %c0_i32_0 = arith.constant 0 : i32
    %c0_i32_1 = arith.constant 0 : i32
    return %c0_i32, %c0_i32_0 : i32, i32
  }
  func.func @transform_7(%arg0: i32) -> (i32, i32) {
    %c0_i32 = arith.constant 0 : i32
    %c0_i32_0 = arith.constant 0 : i32
    %c0_i32_1 = arith.constant 0 : i32
    return %c0_i32, %c0_i32_0 : i32, i32
  }
  func.func @transform_8(%arg0: i32) -> (i32, i32) {
    %c0_i32 = arith.constant 0 : i32
    %c0_i32_0 = arith.constant 0 : i32
    %c0_i32_1 = arith.constant 0 : i32
    return %c0_i32, %c0_i32_0 : i32, i32
  }
  func.func @transform_9(%arg0: i32) -> (i32, i32) {
    %c0_i32 = arith.constant 0 : i32
    %c0_i32_0 = arith.constant 0 : i32
    %c0_i32_1 = arith.constant 0 : i32
    return %c0_i32, %c0_i32_0 : i32, i32
  }
  func.func @transform_10(%arg0: i32) -> (i32, i32) {
    %c0_i32 = arith.constant 0 : i32
    %c0_i32_0 = arith.constant 0 : i32
    %c0_i32_1 = arith.constant 0 : i32
    return %c0_i32, %c0_i32_0 : i32, i32
  }
  func.func @transform_11(%arg0: i32) -> (i32, i32) {
    %c0_i32 = arith.constant 0 : i32
    %c0_i32_0 = arith.constant 0 : i32
    %c0_i32_1 = arith.constant 0 : i32
    return %c0_i32, %c0_i32_0 : i32, i32
  }
  func.func @transform_12(%arg0: i32) -> (i32, i32) {
    %c0_i32 = arith.constant 0 : i32
    %c0_i32_0 = arith.constant 0 : i32
    %c0_i32_1 = arith.constant 0 : i32
    return %c0_i32, %c0_i32_0 : i32, i32
  }
  func.func @transform_13(%arg0: i32) -> (i32, i32) {
    %c0_i32 = arith.constant 0 : i32
    %c0_i32_0 = arith.constant 0 : i32
    %c0_i32_1 = arith.constant 0 : i32
    return %c0_i32, %c0_i32_0 : i32, i32
  }
  func.func @transform_14(%arg0: i32) -> (i32, i32, i32) {
    %c0_i32 = arith.constant 0 : i32
    %c0_i32_0 = arith.constant 0 : i32
    %c0_i32_1 = arith.constant 0 : i32
    return %arg0, %c0_i32, %c0_i32_0 : i32, i32, i32
  }
}

</mosaic_0001>

<llo_original>
// kernel: tpu_custom_call.1
$region0: #{tpu_custom_call.1}
  #allocation0 [shape = 'u32[]', space=smem, size = 0x4, offset = 0x4, fixed_abs, tag = 'smem constant byte address 0x4 - core index']
  #allocation1 [shape = 'u32[72,128]{1,0:T(1,128)}', space=vmem, size = 0x9000, scoped, tag = 'internal scratch']
  #allocation2 [shape = 'f32[290,4]{1,0:T(8,128)}', space=vmem, size = 0x25000, scoped, tag = 'scratch operand']
  #allocation3 [shape = 'f32[82,8]{1,0:T(8,128)}', space=vmem, size = 0xb000, scoped, tag = 'scratch operand']
  #allocation4 [shape = 'f32[82,8]{1,0:T(8,128)}', space=vmem, size = 0xb000, scoped, tag = 'scratch operand']
  #allocation5 [shape = 'f32[256,8]{1,0:T(8,128)}', space=vmem, size = 0x20000, scoped, tag = 'scratch operand']
  %s0 = inlined_call_operand.vmem [shape: f32[2,256,4], index: 0, kind: input, shape index: {}]
  %s1 = inlined_call_operand.vmem [shape: f32[2,64,8], index: 1, kind: input, shape index: {}]
  %s2 = inlined_call_operand.vmem [shape: f32[256,2], index: 2, kind: input, shape index: {}]
  %s3 = inlined_call_operand.vmem [shape: f32[64,2], index: 3, kind: input, shape index: {}]
  %s4 = inlined_call_operand.vmem [shape: f32[1,4], index: 4, kind: input, shape index: {}]
  %s5 = inlined_call_operand.vmem [shape: f32[1,4], index: 5, kind: input, shape index: {}]
  %s6 = inlined_call_operand.vmem [shape: f32[36,8], index: 6, kind: input, shape index: {}]
  %s7 = inlined_call_operand.vmem [shape: f32[1,8], index: 7, kind: input, shape index: {}]
  %s8 = inlined_call_operand.vmem [shape: f32[1,8], index: 8, kind: input, shape index: {}]
  %s9 = inlined_call_operand.vmem [shape: f32[72,8], index: 9, kind: input, shape index: {}]
  %s10 = inlined_call_operand.vmem [shape: f32[1,8], index: 10, kind: input, shape index: {}]
  %s11 = inlined_call_operand.vmem [shape: f32[1,8], index: 11, kind: input, shape index: {}]
  %s12 = inlined_call_operand.vmem [shape: f32[72,8], index: 12, kind: input, shape index: {}]
  %s13 = inlined_call_operand.vmem [shape: f32[1,8], index: 13, kind: input, shape index: {}]
  %s14 = inlined_call_operand.vmem [shape: f32[2,64,8], index: 14, kind: output, shape index: {}]
  %s15 = sld [smem:[#allocation0]]
  $region89: #{tpu_custom_call.1} parent=0
    _
  %s17 = ssub.s32 1, %s15
  %s18 = scalar_select 0, %s17, %s15
  loop: start=0, step=1, limit=4
  $region2: #{tpu_custom_call.1} parent=0 // loop_pre_header
    _
  $region3: #{tpu_custom_call.1} parent=0 // loop_header
    %s20 = sphi 0, %s24
    %p21 = scmp.ge.s32.totalorder %s20, 4
    %s30 = sphi 0, %s32
    %s33 = sphi 0, %s30
    %s34 = sphi 0, %s33
    %s50 = sphi 0, %s34
    %s56 = sphi 0, %s58
    %s59 = sphi 0, %s56
    %s60 = sphi 0, %s59
    %s76 = sphi 0, %s60
    %s80 = sphi 0, %s80
    %s82 = sphi 0, %s80
    %s83 = sphi 0, %s82
    %s97 = sphi 0, %s83
    %s101 = sphi 0, %s101
    %s103 = sphi 0, %s101
    %s104 = sphi 0, %s103
    %s118 = sphi 0, %s104
    %s122 = sphi 0, %s122
    %s124 = sphi 0, %s122
    %s125 = sphi 0, %s124
    %s139 = sphi 0, %s125
    %s143 = sphi 0, %s143
    %s145 = sphi 0, %s143
    %s146 = sphi 0, %s145
    %s160 = sphi 0, %s146
    %s164 = sphi 0, %s164
    %s166 = sphi 0, %s164
    %s167 = sphi 0, %s166
    %s181 = sphi 0, %s167
    %s185 = sphi 0, %s185
    %s187 = sphi 0, %s185
    %s188 = sphi 0, %s187
    %s202 = sphi 0, %s188
    %s206 = sphi 0, %s206
    %s208 = sphi 0, %s206
    %s209 = sphi 0, %s208
    %s223 = sphi 0, %s209
    %s227 = sphi 0, %s227
    %s229 = sphi 0, %s227
    %s230 = sphi 0, %s229
    %s244 = sphi 0, %s230
    %s248 = sphi 0, %s248
    %s250 = sphi 0, %s248
    %s251 = sphi 0, %s250
    %s265 = sphi 0, %s251
    %s269 = sphi 0, %s269
    %s271 = sphi 0, %s269
    %s272 = sphi 0, %s271
    %s286 = sphi 0, %s272
    %s290 = sphi 0, %s290
    %s292 = sphi 0, %s290
    %s293 = sphi 0, %s292
    %s307 = sphi 0, %s293
    %s311 = sphi 0, %s311
    %s313 = sphi 0, %s311
    %s314 = sphi 0, %s313
    %s328 = sphi 0, %s314
    %s334 = sphi 0, %s336
    %s337 = sphi 0, %s334
    %s338 = sphi 0, %s337
    %s354 = sphi 0, %s338
  $region4: #{tpu_custom_call.1} parent=0 // loop_header_branch
    %23 = sbr.rel (%p21) target = $region8
  $region5: #{tpu_custom_call.1} parent=0 // loop_body
    %s25 = ssub.s32 %s20, 1
    %s26 = ssub.s32 %s20, 2
    %s27 = sadd.s32 %s20, 1
    %s28 = ssub.s32 %s20, %s27
    %p29 = scmp.eq.s32.totalorder %s28, 0
    %s31 = sadd.s32 %s30, 1
    %s32 = scalar_select %p29, %s30, %s31
    %p35 = pneg %p29
    %p36 = scmp.eq.s32.totalorder %s20, 1
    %p37 = por %p35, %p36
    %p38 = scmp.ne.s32.totalorder %s30, %s33
    %p39 = scmp.eq.s32.totalorder %s20, 0
    %p40 = por %p38, %p39
    %p41 = scmp.ne.s32.totalorder %s30, %s33
    %p42 = scmp.eq.s32.totalorder %s25, 1
    %p43 = por %p41, %p42
    %p44 = scmp.ne.s32.totalorder %s33, %s34
    %p45 = scmp.eq.s32.totalorder %s25, 0
    %p46 = por %p44, %p45
    %p47 = scmp.ne.s32.totalorder %s33, %s34
    %p48 = scmp.eq.s32.totalorder %s26, 1
    %p49 = por %p47, %p48
    %p51 = scmp.ne.s32.totalorder %s34, %s50
    %p52 = scmp.eq.s32.totalorder %s26, 0
    %p53 = por %p51, %p52
    %s54 = ssub.s32 %s20, %s27
    %p55 = scmp.eq.s32.totalorder %s54, 0
    %s57 = sadd.s32 %s56, 1
    %s58 = scalar_select %p55, %s56, %s57
    %p61 = pneg %p55
    %p62 = scmp.eq.s32.totalorder %s20, 1
    %p63 = por %p61, %p62
    %p64 = scmp.ne.s32.totalorder %s56, %s59
    %p65 = scmp.eq.s32.totalorder %s20, 0
    %p66 = por %p64, %p65
    %p67 = scmp.ne.s32.totalorder %s56, %s59
    %p68 = scmp.eq.s32.totalorder %s25, 1
    %p69 = por %p67, %p68
    %p70 = scmp.ne.s32.totalorder %s59, %s60
    %p71 = scmp.eq.s32.totalorder %s25, 0
    %p72 = por %p70, %p71
    %p73 = scmp.ne.s32.totalorder %s59, %s60
    %p74 = scmp.eq.s32.totalorder %s26, 1
    %p75 = por %p73, %p74
    %p77 = scmp.ne.s32.totalorder %s60, %s76
    %p78 = scmp.eq.s32.totalorder %s26, 0
    %p79 = por %p77, %p78
    %s81 = sadd.s32 %s80, 1
    %p84 = scmp.eq.s32.totalorder %s20, 1
    %p85 = scmp.ne.s32.totalorder %s80, %s82
    %p86 = scmp.eq.s32.totalorder %s20, 0
    %p87 = por %p85, %p86
    %p88 = scmp.ne.s32.totalorder %s80, %s82
    %p89 = scmp.eq.s32.totalorder %s25, 1
    %p90 = por %p88, %p89
    %p91 = scmp.ne.s32.totalorder %s82, %s83
    %p92 = scmp.eq.s32.totalorder %s25, 0
    %p93 = por %p91, %p92
    %p94 = scmp.ne.s32.totalorder %s82, %s83
    %p95 = scmp.eq.s32.totalorder %s26, 1
    %p96 = por %p94, %p95
    %p98 = scmp.ne.s32.totalorder %s83, %s97
    %p99 = scmp.eq.s32.totalorder %s26, 0
    %p100 = por %p98, %p99
    %s102 = sadd.s32 %s101, 1
    %p105 = scmp.eq.s32.totalorder %s20, 1
    %p106 = scmp.ne.s32.totalorder %s101, %s103
    %p107 = scmp.eq.s32.totalorder %s20, 0
    %p108 = por %p106, %p107
    %p109 = scmp.ne.s32.totalorder %s101, %s103
    %p110 = scmp.eq.s32.totalorder %s25, 1
    %p111 = por %p109, %p110
    %p112 = scmp.ne.s32.totalorder %s103, %s104
    %p113 = scmp.eq.s32.totalorder %s25, 0
    %p114 = por %p112, %p113
    %p115 = scmp.ne.s32.totalorder %s103, %s104
    %p116 = scmp.eq.s32.totalorder %s26, 1
    %p117 = por %p115, %p116
    %p119 = scmp.ne.s32.totalorder %s104, %s118
    %p120 = scmp.eq.s32.totalorder %s26, 0
    %p121 = por %p119, %p120
    %s123 = sadd.s32 %s122, 1
    %p126 = scmp.eq.s32.totalorder %s20, 1
    %p127 = scmp.ne.s32.totalorder %s122, %s124
    %p128 = scmp.eq.s32.totalorder %s20, 0
    %p129 = por %p127, %p128
    %p130 = scmp.ne.s32.totalorder %s122, %s124
    %p131 = scmp.eq.s32.totalorder %s25, 1
    %p132 = por %p130, %p131
    %p133 = scmp.ne.s32.totalorder %s124, %s125
    %p134 = scmp.eq.s32.totalorder %s25, 0
    %p135 = por %p133, %p134
    %p136 = scmp.ne.s32.totalorder %s124, %s125
    %p137 = scmp.eq.s32.totalorder %s26, 1
    %p138 = por %p136, %p137
    %p140 = scmp.ne.s32.totalorder %s125, %s139
    %p141 = scmp.eq.s32.totalorder %s26, 0
    %p142 = por %p140, %p141
    %s144 = sadd.s32 %s143, 1
    %p147 = scmp.eq.s32.totalorder %s20, 1
    %p148 = scmp.ne.s32.totalorder %s143, %s145
    %p149 = scmp.eq.s32.totalorder %s20, 0
    %p150 = por %p148, %p149
    %p151 = scmp.ne.s32.totalorder %s143, %s145
    %p152 = scmp.eq.s32.totalorder %s25, 1
    %p153 = por %p151, %p152
    %p154 = scmp.ne.s32.totalorder %s145, %s146
    %p155 = scmp.eq.s32.totalorder %s25, 0
    %p156 = por %p154, %p155
    %p157 = scmp.ne.s32.totalorder %s145, %s146
    %p158 = scmp.eq.s32.totalorder %s26, 1
    %p159 = por %p157, %p158
    %p161 = scmp.ne.s32.totalorder %s146, %s160
    %p162 = scmp.eq.s32.totalorder %s26, 0
    %p163 = por %p161, %p162
    %s165 = sadd.s32 %s164, 1
    %p168 = scmp.eq.s32.totalorder %s20, 1
    %p169 = scmp.ne.s32.totalorder %s164, %s166
    %p170 = scmp.eq.s32.totalorder %s20, 0
    %p171 = por %p169, %p170
    %p172 = scmp.ne.s32.totalorder %s164, %s166
    %p173 = scmp.eq.s32.totalorder %s25, 1
    %p174 = por %p172, %p173
    %p175 = scmp.ne.s32.totalorder %s166, %s167
    %p176 = scmp.eq.s32.totalorder %s25, 0
    %p177 = por %p175, %p176
    %p178 = scmp.ne.s32.totalorder %s166, %s167
    %p179 = scmp.eq.s32.totalorder %s26, 1
    %p180 = por %p178, %p179
    %p182 = scmp.ne.s32.totalorder %s167, %s181
    %p183 = scmp.eq.s32.totalorder %s26, 0
    %p184 = por %p182, %p183
    %s186 = sadd.s32 %s185, 1
    %p189 = scmp.eq.s32.totalorder %s20, 1
    %p190 = scmp.ne.s32.totalorder %s185, %s187
    %p191 = scmp.eq.s32.totalorder %s20, 0
    %p192 = por %p190, %p191
    %p193 = scmp.ne.s32.totalorder %s185, %s187
    %p194 = scmp.eq.s32.totalorder %s25, 1
    %p195 = por %p193, %p194
    %p196 = scmp.ne.s32.totalorder %s187, %s188
    %p197 = scmp.eq.s32.totalorder %s25, 0
    %p198 = por %p196, %p197
    %p199 = scmp.ne.s32.totalorder %s187, %s188
    %p200 = scmp.eq.s32.totalorder %s26, 1
    %p201 = por %p199, %p200
    %p203 = scmp.ne.s32.totalorder %s188, %s202
    %p204 = scmp.eq.s32.totalorder %s26, 0
    %p205 = por %p203, %p204
    %s207 = sadd.s32 %s206, 1
    %p210 = scmp.eq.s32.totalorder %s20, 1
    %p211 = scmp.ne.s32.totalorder %s206, %s208
    %p212 = scmp.eq.s32.totalorder %s20, 0
    %p213 = por %p211, %p212
    %p214 = scmp.ne.s32.totalorder %s206, %s208
    %p215 = scmp.eq.s32.totalorder %s25, 1
    %p216 = por %p214, %p215
    %p217 = scmp.ne.s32.totalorder %s208, %s209
    %p218 = scmp.eq.s32.totalorder %s25, 0
    %p219 = por %p217, %p218
    %p220 = scmp.ne.s32.totalorder %s208, %s209
    %p221 = scmp.eq.s32.totalorder %s26, 1
    %p222 = por %p220, %p221
    %p224 = scmp.ne.s32.totalorder %s209, %s223
    %p225 = scmp.eq.s32.totalorder %s26, 0
    %p226 = por %p224, %p225
    %s228 = sadd.s32 %s227, 1
    %p231 = scmp.eq.s32.totalorder %s20, 1
    %p232 = scmp.ne.s32.totalorder %s227, %s229
    %p233 = scmp.eq.s32.totalorder %s20, 0
    %p234 = por %p232, %p233
    %p235 = scmp.ne.s32.totalorder %s227, %s229
    %p236 = scmp.eq.s32.totalorder %s25, 1
    %p237 = por %p235, %p236
    %p238 = scmp.ne.s32.totalorder %s229, %s230
    %p239 = scmp.eq.s32.totalorder %s25, 0
    %p240 = por %p238, %p239
    %p241 = scmp.ne.s32.totalorder %s229, %s230
    %p242 = scmp.eq.s32.totalorder %s26, 1
    %p243 = por %p241, %p242
    %p245 = scmp.ne.s32.totalorder %s230, %s244
    %p246 = scmp.eq.s32.totalorder %s26, 0
    %p247 = por %p245, %p246
    %s249 = sadd.s32 %s248, 1
    %p252 = scmp.eq.s32.totalorder %s20, 1
    %p253 = scmp.ne.s32.totalorder %s248, %s250
    %p254 = scmp.eq.s32.totalorder %s20, 0
    %p255 = por %p253, %p254
    %p256 = scmp.ne.s32.totalorder %s248, %s250
    %p257 = scmp.eq.s32.totalorder %s25, 1
    %p258 = por %p256, %p257
    %p259 = scmp.ne.s32.totalorder %s250, %s251
    %p260 = scmp.eq.s32.totalorder %s25, 0
    %p261 = por %p259, %p260
    %p262 = scmp.ne.s32.totalorder %s250, %s251
    %p263 = scmp.eq.s32.totalorder %s26, 1
    %p264 = por %p262, %p263
    %p266 = scmp.ne.s32.totalorder %s251, %s265
    %p267 = scmp.eq.s32.totalorder %s26, 0
    %p268 = por %p266, %p267
    %s270 = sadd.s32 %s269, 1
    %p273 = scmp.eq.s32.totalorder %s20, 1
    %p274 = scmp.ne.s32.totalorder %s269, %s271
    %p275 = scmp.eq.s32.totalorder %s20, 0
    %p276 = por %p274, %p275
    %p277 = scmp.ne.s32.totalorder %s269, %s271
    %p278 = scmp.eq.s32.totalorder %s25, 1
    %p279 = por %p277, %p278
    %p280 = scmp.ne.s32.totalorder %s271, %s272
    %p281 = scmp.eq.s32.totalorder %s25, 0
    %p282 = por %p280, %p281
    %p283 = scmp.ne.s32.totalorder %s271, %s272
    %p284 = scmp.eq.s32.totalorder %s26, 1
    %p285 = por %p283, %p284
    %p287 = scmp.ne.s32.totalorder %s272, %s286
    %p288 = scmp.eq.s32.totalorder %s26, 0
    %p289 = por %p287, %p288
    %s291 = sadd.s32 %s290, 1
    %p294 = scmp.eq.s32.totalorder %s20, 1
    %p295 = scmp.ne.s32.totalorder %s290, %s292
    %p296 = scmp.eq.s32.totalorder %s20, 0
    %p297 = por %p295, %p296
    %p298 = scmp.ne.s32.totalorder %s290, %s292
    %p299 = scmp.eq.s32.totalorder %s25, 1
    %p300 = por %p298, %p299
    %p301 = scmp.ne.s32.totalorder %s292, %s293
    %p302 = scmp.eq.s32.totalorder %s25, 0
    %p303 = por %p301, %p302
    %p304 = scmp.ne.s32.totalorder %s292, %s293
    %p305 = scmp.eq.s32.totalorder %s26, 1
    %p306 = por %p304, %p305
    %p308 = scmp.ne.s32.totalorder %s293, %s307
    %p309 = scmp.eq.s32.totalorder %s26, 0
    %p310 = por %p308, %p309
    %s312 = sadd.s32 %s311, 1
    %p315 = scmp.eq.s32.totalorder %s20, 1
    %p316 = scmp.ne.s32.totalorder %s311, %s313
    %p317 = scmp.eq.s32.totalorder %s20, 0
    %p318 = por %p316, %p317
    %p319 = scmp.ne.s32.totalorder %s311, %s313
    %p320 = scmp.eq.s32.totalorder %s25, 1
    %p321 = por %p319, %p320
    %p322 = scmp.ne.s32.totalorder %s313, %s314
    %p323 = scmp.eq.s32.totalorder %s25, 0
    %p324 = por %p322, %p323
    %p325 = scmp.ne.s32.totalorder %s313, %s314
    %p326 = scmp.eq.s32.totalorder %s26, 1
    %p327 = por %p325, %p326
    %p329 = scmp.ne.s32.totalorder %s314, %s328
    %p330 = scmp.eq.s32.totalorder %s26, 0
    %p331 = por %p329, %p330
    %s332 = ssub.s32 %s20, %s27
    %p333 = scmp.eq.s32.totalorder %s332, 0
    %s335 = sadd.s32 %s334, 1
    %s336 = scalar_select %p333, %s334, %s335
    %p339 = pneg %p333
    %p340 = scmp.eq.s32.totalorder %s20, 1
    %p341 = por %p339, %p340
    %p342 = scmp.ne.s32.totalorder %s334, %s337
    %p343 = scmp.eq.s32.totalorder %s20, 0
    %p344 = por %p342, %p343
    %p345 = scmp.ne.s32.totalorder %s334, %s337
    %p346 = scmp.eq.s32.totalorder %s25, 1
    %p347 = por %p345, %p346
    %p348 = scmp.ne.s32.totalorder %s337, %s338
    %p349 = scmp.eq.s32.totalorder %s25, 0
    %p350 = por %p348, %p349
    %p351 = scmp.ne.s32.totalorder %s337, %s338
    %p352 = scmp.eq.s32.totalorder %s26, 1
    %p353 = por %p351, %p352
    %p355 = scmp.ne.s32.totalorder %s338, %s354
    %p356 = scmp.eq.s32.totalorder %s26, 0
    %p357 = por %p355, %p356
    %p358 = scmp.le.s32.totalorder 1, %s20
    %p359 = scmp.lt.s32.totalorder %s20, 3
    %p360 = pnand %p358, %p359
    %p361 = pneg %p360
    // Predicated region
    $region9: #{tpu_custom_call.1} parent=5 // pred_check
      _
    $region10: #{tpu_custom_call.1} parent=5 // pred_check_branch
      %363 = sbr.rel (%p360) target = $region12
    $region11: #{tpu_custom_call.1} parent=5 // pred_region
      %s364 = ssub.s32 %s20, 1
      // Predicated region
      $region13: #{tpu_custom_call.1} parent=11 // pred_check
        %p365 = pneg %p93
      $region14: #{tpu_custom_call.1} parent=11 // pred_check_branch
        %367 = sbr.rel (%p365) target = $region16
      $region15: #{tpu_custom_call.1} parent=11 // pred_region
        _
      $region16: #{tpu_custom_call.1} parent=11 // pred_fallthru
        _
      // Predicated region
      $region17: #{tpu_custom_call.1} parent=11 // pred_check
        %p368 = pneg %p114
      $region18: #{tpu_custom_call.1} parent=11 // pred_check_branch
        %370 = sbr.rel (%p368) target = $region20
      $region19: #{tpu_custom_call.1} parent=11 // pred_region
        _
      $region20: #{tpu_custom_call.1} parent=11 // pred_fallthru
        _
      // Predicated region
      $region21: #{tpu_custom_call.1} parent=11 // pred_check
        %p371 = pneg %p135
      $region22: #{tpu_custom_call.1} parent=11 // pred_check_branch
        %373 = sbr.rel (%p371) target = $region24
      $region23: #{tpu_custom_call.1} parent=11 // pred_region
        _
      $region24: #{tpu_custom_call.1} parent=11 // pred_fallthru
        _
      // Predicated region
      $region25: #{tpu_custom_call.1} parent=11 // pred_check
        %p374 = pneg %p156
      $region26: #{tpu_custom_call.1} parent=11 // pred_check_branch
        %376 = sbr.rel (%p374) target = $region28
      $region27: #{tpu_custom_call.1} parent=11 // pred_region
        _
      $region28: #{tpu_custom_call.1} parent=11 // pred_fallthru
        _
      // Predicated region
      $region29: #{tpu_custom_call.1} parent=11 // pred_check
        %p377 = pneg %p177
      $region30: #{tpu_custom_call.1} parent=11 // pred_check_branch
        %379 = sbr.rel (%p377) target = $region32
      $region31: #{tpu_custom_call.1} parent=11 // pred_region
        _
      $region32: #{tpu_custom_call.1} parent=11 // pred_fallthru
        _
      // Predicated region
      $region33: #{tpu_custom_call.1} parent=11 // pred_check
        %p380 = pneg %p198
      $region34: #{tpu_custom_call.1} parent=11 // pred_check_branch
        %382 = sbr.rel (%p380) target = $region36
      $region35: #{tpu_custom_call.1} parent=11 // pred_region
        _
      $region36: #{tpu_custom_call.1} parent=11 // pred_fallthru
        _
      // Predicated region
      $region37: #{tpu_custom_call.1} parent=11 // pred_check
        %p383 = pneg %p219
      $region38: #{tpu_custom_call.1} parent=11 // pred_check_branch
        %385 = sbr.rel (%p383) target = $region40
      $region39: #{tpu_custom_call.1} parent=11 // pred_region
        _
      $region40: #{tpu_custom_call.1} parent=11 // pred_fallthru
        _
      // Predicated region
      $region41: #{tpu_custom_call.1} parent=11 // pred_check
        %p386 = pneg %p240
      $region42: #{tpu_custom_call.1} parent=11 // pred_check_branch
        %388 = sbr.rel (%p386) target = $region44
      $region43: #{tpu_custom_call.1} parent=11 // pred_region
        _
      $region44: #{tpu_custom_call.1} parent=11 // pred_fallthru
        _
      // Predicated region
      $region45: #{tpu_custom_call.1} parent=11 // pred_check
        %p389 = pneg %p261
      $region46: #{tpu_custom_call.1} parent=11 // pred_check_branch
        %391 = sbr.rel (%p389) target = $region48
      $region47: #{tpu_custom_call.1} parent=11 // pred_region
        _
      $region48: #{tpu_custom_call.1} parent=11 // pred_fallthru
        _
      // Predicated region
      $region49: #{tpu_custom_call.1} parent=11 // pred_check
        %p392 = pneg %p282
      $region50: #{tpu_custom_call.1} parent=11 // pred_check_branch
        %394 = sbr.rel (%p392) target = $region52
      $region51: #{tpu_custom_call.1} parent=11 // pred_region
        _
      $region52: #{tpu_custom_call.1} parent=11 // pred_fallthru
        _
      // Predicated region
      $region53: #{tpu_custom_call.1} parent=11 // pred_check
        %p395 = pneg %p303
      $region54: #{tpu_custom_call.1} parent=11 // pred_check_branch
        %397 = sbr.rel (%p395) target = $region56
      $region55: #{tpu_custom_call.1} parent=11 // pred_region
        _
      $region56: #{tpu_custom_call.1} parent=11 // pred_fallthru
        _
      // Predicated region
      $region57: #{tpu_custom_call.1} parent=11 // pred_check
        %p398 = pneg %p324
      $region58: #{tpu_custom_call.1} parent=11 // pred_check_branch
        %400 = sbr.rel (%p398) target = $region60
      $region59: #{tpu_custom_call.1} parent=11 // pred_region
        _
      $region60: #{tpu_custom_call.1} parent=11 // pred_fallthru
        _
    $region12: #{tpu_custom_call.1} parent=5 // pred_fallthru
      _
    %p401 = scmp.lt.s32.totalorder %s20, 2
    // Predicated region
    $region61: #{tpu_custom_call.1} parent=5 // pred_check
      %p402 = pneg %p401
    $region62: #{tpu_custom_call.1} parent=5 // pred_check_branch
      %404 = sbr.rel (%p402) target = $region64
    $region63: #{tpu_custom_call.1} parent=5 // pred_region
      // Predicated region
      $region65: #{tpu_custom_call.1} parent=63 // pred_check
        %p405 = pneg %p40
      $region66: #{tpu_custom_call.1} parent=63 // pred_check_branch
        %407 = sbr.rel (%p405) target = $region68
      $region67: #{tpu_custom_call.1} parent=63 // pred_region
        %p408 = scmp.lt.s32.totalorder %s20, 1
        %s409 = scalar_select %p408, %s20, 1
        %s410 = smul.addr %s409, 32
        %s411 = smul.addr %s410, 8
        %s412 = scalar_lea.vmem %s0, %s411
      $region68: #{tpu_custom_call.1} parent=63 // pred_fallthru
        _
      // Predicated region
      $region69: #{tpu_custom_call.1} parent=63 // pred_check
        %p413 = pneg %p66
      $region70: #{tpu_custom_call.1} parent=63 // pred_check_branch
        %415 = sbr.rel (%p413) target = $region72
      $region71: #{tpu_custom_call.1} parent=63 // pred_region
        %p416 = scmp.lt.s32.totalorder %s20, 1
        %s417 = scalar_select %p416, %s20, 1
        %s418 = smul.addr %s417, 8
        %s419 = smul.addr %s418, 8
        %s420 = scalar_lea.vmem %s1, %s419
      $region72: #{tpu_custom_call.1} parent=63 // pred_fallthru
        _
    $region64: #{tpu_custom_call.1} parent=5 // pred_fallthru
      _
    %p421 = scmp.le.s32.totalorder 1, %s20
    %p422 = scmp.lt.s32.totalorder %s20, 3
    %p423 = pnand %p421, %p422
    %p424 = pneg %p423
    // Predicated region
    $region73: #{tpu_custom_call.1} parent=5 // pred_check
      _
    $region74: #{tpu_custom_call.1} parent=5 // pred_check_branch
      %426 = sbr.rel (%p423) target = $region76
    $region75: #{tpu_custom_call.1} parent=5 // pred_region
      %s427 = ssub.s32 %s20, 1
      %p428 = scmp.lt.s32.totalorder %s25, 1
      %s429 = scalar_select %p428, %s25, 1
      %s430 = smul.addr %s429, 32
      %s431 = smul.addr %s430, 8
      %s432 = scalar_lea.vmem %s0, %s431
      %p433 = pneg %p46
      %p434 = pneg %p43
      %p435 = scmp.lt.s32.totalorder %s25, 1
      %s436 = scalar_select %p435, %s25, 1
      %s437 = smul.addr %s436, 8
      %s438 = smul.addr %s437, 8
      %s439 = scalar_lea.vmem %s1, %s438
      %p440 = pneg %p72
      %p441 = pneg %p69
      %p442 = pneg %p93
      %p443 = pneg %p90
      %p444 = pneg %p114
      %p445 = pneg %p111
      %p446 = pneg %p135
      %p447 = pneg %p132
      %p448 = pneg %p156
      %p449 = pneg %p153
      %p450 = pneg %p177
      %p451 = pneg %p174
      %p452 = pneg %p198
      %p453 = pneg %p195
      %p454 = pneg %p219
      %p455 = pneg %p216
      %p456 = pneg %p240
      %p457 = pneg %p237
      %p458 = pneg %p261
      %p459 = pneg %p258
      %p460 = pneg %p282
      %p461 = pneg %p279
      %p462 = pneg %p303
      %p463 = pneg %p300
      %p464 = pneg %p324
      %p465 = pneg %p321
      %p466 = pneg %p350
      %p467 = pneg %p347
      %p468 = scmp.lt.s32.totalorder %s25, 1
      %s469 = scalar_select %p468, %s25, 1
      %s470 = smul.addr %s469, 8
      %s471 = smul.addr %s470, 8
      %s472 = scalar_lea.vmem %s14, %s471
      %p473 = scmp.lt.s32.totalorder %s25, 1
      %s474 = scalar_select %p473, %s25, 1
      %s475 = smul.addr %s474, 32
      %s476 = smul.addr %s475, 8
      %s477 = scalar_lea.vmem %s0, %s476
      %p478 = scmp.lt.s32.totalorder %s25, 1
      %s479 = scalar_select %p478, %s25, 1
      %s480 = smul.addr %s479, 8
      %s481 = smul.addr %s480, 8
      %s482 = scalar_lea.vmem %s1, %s481
      %p483 = scmp.lt.s32.totalorder %s25, 1
      %s484 = scalar_select %p483, %s25, 1
      %s485 = smul.addr %s484, 8
      %s486 = smul.addr %s485, 8
      %s487 = scalar_lea.vmem %s14, %s486
      %v488 = vld [vmem:[%s477] sm:$0xff]
      %v489 = vld [vmem:[%s477 + $0x8] sm:$0xff]
      %v490 = vld [vmem:[%s477 + $0x10] sm:$0xff]
      %v491 = vld [vmem:[%s477 + $0x18] sm:$0xff]
      %v492 = vld [vmem:[%s477 + $0x20] sm:$0xff]
      %v493 = vld [vmem:[%s477 + $0x28] sm:$0xff]
      %v494 = vld [vmem:[%s477 + $0x30] sm:$0xff]
      %v495 = vld [vmem:[%s477 + $0x38] sm:$0xff]
      %v496 = vld [vmem:[%s477 + $0x40] sm:$0xff]
      %v497 = vld [vmem:[%s477 + $0x48] sm:$0xff]
      %v498 = vld [vmem:[%s477 + $0x50] sm:$0xff]
      %v499 = vld [vmem:[%s477 + $0x58] sm:$0xff]
      %v500 = vld [vmem:[%s477 + $0x60] sm:$0xff]
      %v501 = vld [vmem:[%s477 + $0x68] sm:$0xff]
      %v502 = vld [vmem:[%s477 + $0x70] sm:$0xff]
      %v503 = vld [vmem:[%s477 + $0x78] sm:$0xff]
      %v504 = vld [vmem:[%s477 + $0x80] sm:$0xff]
      %v505 = vld [vmem:[%s477 + $0x88] sm:$0xff]
      %v506 = vld [vmem:[%s477 + $0x90] sm:$0xff]
      %v507 = vld [vmem:[%s477 + $0x98] sm:$0xff]
      %v508 = vld [vmem:[%s477 + $0xa0] sm:$0xff]
      %v509 = vld [vmem:[%s477 + $0xa8] sm:$0xff]
      %v510 = vld [vmem:[%s477 + $0xb0] sm:$0xff]
      %v511 = vld [vmem:[%s477 + $0xb8] sm:$0xff]
      %v512 = vld [vmem:[%s477 + $0xc0] sm:$0xff]
      %v513 = vld [vmem:[%s477 + $0xc8] sm:$0xff]
      %v514 = vld [vmem:[%s477 + $0xd0] sm:$0xff]
      %v515 = vld [vmem:[%s477 + $0xd8] sm:$0xff]
      %v516 = vld [vmem:[%s477 + $0xe0] sm:$0xff]
      %v517 = vld [vmem:[%s477 + $0xe8] sm:$0xff]
      %v518 = vld [vmem:[%s477 + $0xf0] sm:$0xff]
      %v519 = vld [vmem:[%s477 + $0xf8] sm:$0xff]
      %v520 = vld [vmem:[%s4] sm:$0x1]
      %v522 = vperm.slane %v520, 0
      %v524 = vmul.f32 %v488, %v522
      %v525 = vmul.f32 %v489, %v522
      %v526 = vmul.f32 %v490, %v522
      %v527 = vmul.f32 %v491, %v522
      %v528 = vmul.f32 %v492, %v522
      %v529 = vmul.f32 %v493, %v522
      %v530 = vmul.f32 %v494, %v522
      %v531 = vmul.f32 %v495, %v522
      %v532 = vmul.f32 %v496, %v522
      %v533 = vmul.f32 %v497, %v522
      %v534 = vmul.f32 %v498, %v522
      %v535 = vmul.f32 %v499, %v522
      %v536 = vmul.f32 %v500, %v522
      %v537 = vmul.f32 %v501, %v522
      %v538 = vmul.f32 %v502, %v522
      %v539 = vmul.f32 %v503, %v522
      %v540 = vmul.f32 %v504, %v522
      %v541 = vmul.f32 %v505, %v522
      %v542 = vmul.f32 %v506, %v522
      %v543 = vmul.f32 %v507, %v522
      %v544 = vmul.f32 %v508, %v522
      %v545 = vmul.f32 %v509, %v522
      %v546 = vmul.f32 %v510, %v522
      %v547 = vmul.f32 %v511, %v522
      %v548 = vmul.f32 %v512, %v522
      %v549 = vmul.f32 %v513, %v522
      %v550 = vmul.f32 %v514, %v522
      %v551 = vmul.f32 %v515, %v522
      %v552 = vmul.f32 %v516, %v522
      %v553 = vmul.f32 %v517, %v522
      %v554 = vmul.f32 %v518, %v522
      %v555 = vmul.f32 %v519, %v522
      %v556 = vld [vmem:[%s5] sm:$0x1]
      %v558 = vperm.slane %v556, 0
      %v560 = vadd.f32 %v524, %v558
      %v561 = vadd.f32 %v525, %v558
      %v562 = vadd.f32 %v526, %v558
      %v563 = vadd.f32 %v527, %v558
      %v564 = vadd.f32 %v528, %v558
      %v565 = vadd.f32 %v529, %v558
      %v566 = vadd.f32 %v530, %v558
      %v567 = vadd.f32 %v531, %v558
      %v568 = vadd.f32 %v532, %v558
      %v569 = vadd.f32 %v533, %v558
      %v570 = vadd.f32 %v534, %v558
      %v571 = vadd.f32 %v535, %v558
      %v572 = vadd.f32 %v536, %v558
      %v573 = vadd.f32 %v537, %v558
      %v574 = vadd.f32 %v538, %v558
      %v575 = vadd.f32 %v539, %v558
      %v576 = vadd.f32 %v540, %v558
      %v577 = vadd.f32 %v541, %v558
      %v578 = vadd.f32 %v542, %v558
      %v579 = vadd.f32 %v543, %v558
      %v580 = vadd.f32 %v544, %v558
      %v581 = vadd.f32 %v545, %v558
      %v582 = vadd.f32 %v546, %v558
      %v583 = vadd.f32 %v547, %v558
      %v584 = vadd.f32 %v548, %v558
      %v585 = vadd.f32 %v549, %v558
      %v586 = vadd.f32 %v550, %v558
      %v587 = vadd.f32 %v551, %v558
      %v588 = vadd.f32 %v552, %v558
      %v589 = vadd.f32 %v553, %v558
      %v590 = vadd.f32 %v554, %v558
      %v591 = vadd.f32 %v555, %v558
      %v592 = vmax.f32 %v560, 0.0
      %v593 = vmax.f32 %v561, 0.0
      %v594 = vmax.f32 %v562, 0.0
      %v595 = vmax.f32 %v563, 0.0
      %v596 = vmax.f32 %v564, 0.0
      %v597 = vmax.f32 %v565, 0.0
      %v598 = vmax.f32 %v566, 0.0
      %v599 = vmax.f32 %v567, 0.0
      %v600 = vmax.f32 %v568, 0.0
      %v601 = vmax.f32 %v569, 0.0
      %v602 = vmax.f32 %v570, 0.0
      %v603 = vmax.f32 %v571, 0.0
      %v604 = vmax.f32 %v572, 0.0
      %v605 = vmax.f32 %v573, 0.0
      %v606 = vmax.f32 %v574, 0.0
      %v607 = vmax.f32 %v575, 0.0
      %v608 = vmax.f32 %v576, 0.0
      %v609 = vmax.f32 %v577, 0.0
      %v610 = vmax.f32 %v578, 0.0
      %v611 = vmax.f32 %v579, 0.0
      %v612 = vmax.f32 %v580, 0.0
      %v613 = vmax.f32 %v581, 0.0
      %v614 = vmax.f32 %v582, 0.0
      %v615 = vmax.f32 %v583, 0.0
      %v616 = vmax.f32 %v584, 0.0
      %v617 = vmax.f32 %v585, 0.0
      %v618 = vmax.f32 %v586, 0.0
      %v619 = vmax.f32 %v587, 0.0
      %v620 = vmax.f32 %v588, 0.0
      %v621 = vmax.f32 %v589, 0.0
      %v622 = vmax.f32 %v590, 0.0
      %v623 = vmax.f32 %v591, 0.0
      %vm624 = vcmask 31744
      %625 = vst.msk [vmem:[#allocation2] sm:$0xff] %vm624, 0.0
      %626 = vst.msk [vmem:[#allocation2 + $0x8] sm:$0xff] %vm624, 0.0
      %vm627 = vcmask 24576
      %628 = vst.msk [vmem:[#allocation2 + $0x10] sm:$0x1] %vm627, 0.0
      %629 = vst.msk [vmem:[#allocation2 + $0x111] sm:$0xff] %vm624, 0.0
      %630 = vst.msk [vmem:[#allocation2 + $0x119] sm:$0xff] %vm624, 0.0
      %631 = vst.msk [vmem:[#allocation2 + $0x121] sm:$0x1] %vm627, 0.0
      %632 = vst.msk [vmem:[#allocation2 + $0x11] sm:$0xff] %vm624, %v592
      %633 = vst.msk [vmem:[#allocation2 + $0x19] sm:$0xff] %vm624, %v593
      %634 = vst.msk [vmem:[#allocation2 + $0x21] sm:$0xff] %vm624, %v594
      %635 = vst.msk [vmem:[#allocation2 + $0x29] sm:$0xff] %vm624, %v595
      %636 = vst.msk [vmem:[#allocation2 + $0x31] sm:$0xff] %vm624, %v596
      %637 = vst.msk [vmem:[#allocation2 + $0x39] sm:$0xff] %vm624, %v597
      %638 = vst.msk [vmem:[#allocation2 + $0x41] sm:$0xff] %vm624, %v598
      %639 = vst.msk [vmem:[#allocation2 + $0x49] sm:$0xff] %vm624, %v599
      %640 = vst.msk [vmem:[#allocation2 + $0x51] sm:$0xff] %vm624, %v600
      %641 = vst.msk [vmem:[#allocation2 + $0x59] sm:$0xff] %vm624, %v601
      %642 = vst.msk [vmem:[#allocation2 + $0x61] sm:$0xff] %vm624, %v602
      %643 = vst.msk [vmem:[#allocation2 + $0x69] sm:$0xff] %vm624, %v603
      %644 = vst.msk [vmem:[#allocation2 + $0x71] sm:$0xff] %vm624, %v604
      %645 = vst.msk [vmem:[#allocation2 + $0x79] sm:$0xff] %vm624, %v605
      %646 = vst.msk [vmem:[#allocation2 + $0x81] sm:$0xff] %vm624, %v606
      %647 = vst.msk [vmem:[#allocation2 + $0x89] sm:$0xff] %vm624, %v607
      %648 = vst.msk [vmem:[#allocation2 + $0x91] sm:$0xff] %vm624, %v608
      %649 = vst.msk [vmem:[#allocation2 + $0x99] sm:$0xff] %vm624, %v609
      %650 = vst.msk [vmem:[#allocation2 + $0xa1] sm:$0xff] %vm624, %v610
      %651 = vst.msk [vmem:[#allocation2 + $0xa9] sm:$0xff] %vm624, %v611
      %652 = vst.msk [vmem:[#allocation2 + $0xb1] sm:$0xff] %vm624, %v612
      %653 = vst.msk [vmem:[#allocation2 + $0xb9] sm:$0xff] %vm624, %v613
      %654 = vst.msk [vmem:[#allocation2 + $0xc1] sm:$0xff] %vm624, %v614
      %655 = vst.msk [vmem:[#allocation2 + $0xc9] sm:$0xff] %vm624, %v615
      %656 = vst.msk [vmem:[#allocation2 + $0xd1] sm:$0xff] %vm624, %v616
      %657 = vst.msk [vmem:[#allocation2 + $0xd9] sm:$0xff] %vm624, %v617
      %658 = vst.msk [vmem:[#allocation2 + $0xe1] sm:$0xff] %vm624, %v618
      %659 = vst.msk [vmem:[#allocation2 + $0xe9] sm:$0xff] %vm624, %v619
      %660 = vst.msk [vmem:[#allocation2 + $0xf1] sm:$0xff] %vm624, %v620
      %661 = vst.msk [vmem:[#allocation2 + $0xf9] sm:$0xff] %vm624, %v621
      %662 = vst.msk [vmem:[#allocation2 + $0x101] sm:$0xff] %vm624, %v622
      %663 = vst.msk [vmem:[#allocation2 + $0x109] sm:$0xff] %vm624, %v623
      %v664 = vld [vmem:[%s2] sm:$0xff]
      %v665 = vld [vmem:[%s2 + $0x8] sm:$0xff]
      %v666 = vld [vmem:[%s2 + $0x10] sm:$0xff]
      %v667 = vld [vmem:[%s2 + $0x18] sm:$0xff]
      %v668 = vld [vmem:[%s2 + $0x20] sm:$0xff]
      %v669 = vld [vmem:[%s2 + $0x28] sm:$0xff]
      %v670 = vld [vmem:[%s2 + $0x30] sm:$0xff]
      %v671 = vld [vmem:[%s2 + $0x38] sm:$0xff]
      %v672 = vld [vmem:[%s2 + $0x40] sm:$0xff]
      %v673 = vld [vmem:[%s2 + $0x48] sm:$0xff]
      %v674 = vld [vmem:[%s2 + $0x50] sm:$0xff]
      %v675 = vld [vmem:[%s2 + $0x58] sm:$0xff]
      %v676 = vld [vmem:[%s2 + $0x60] sm:$0xff]
      %v677 = vld [vmem:[%s2 + $0x68] sm:$0xff]
      %v678 = vld [vmem:[%s2 + $0x70] sm:$0xff]
      %v679 = vld [vmem:[%s2 + $0x78] sm:$0xff]
      %v680 = vld [vmem:[%s2 + $0x80] sm:$0xff]
      %v681 = vld [vmem:[%s2 + $0x88] sm:$0xff]
      %v682 = vld [vmem:[%s2 + $0x90] sm:$0xff]
      %v683 = vld [vmem:[%s2 + $0x98] sm:$0xff]
      %v684 = vld [vmem:[%s2 + $0xa0] sm:$0xff]
      %v685 = vld [vmem:[%s2 + $0xa8] sm:$0xff]
      %v686 = vld [vmem:[%s2 + $0xb0] sm:$0xff]
      %v687 = vld [vmem:[%s2 + $0xb8] sm:$0xff]
      %v688 = vld [vmem:[%s2 + $0xc0] sm:$0xff]
      %v689 = vld [vmem:[%s2 + $0xc8] sm:$0xff]
      %v690 = vld [vmem:[%s2 + $0xd0] sm:$0xff]
      %v691 = vld [vmem:[%s2 + $0xd8] sm:$0xff]
      %v692 = vld [vmem:[%s2 + $0xe0] sm:$0xff]
      %v693 = vld [vmem:[%s2 + $0xe8] sm:$0xff]
      %v694 = vld [vmem:[%s2 + $0xf0] sm:$0xff]
      %v695 = vld [vmem:[%s2 + $0xf8] sm:$0xff]
      %v696 = vld [vmem:[#allocation2] sm:$0xff]
      %v697 = vld [vmem:[#allocation2 + $0x8] sm:$0xff]
      %v698 = vld [vmem:[#allocation2 + $0x10] sm:$0xff]
      %v699 = vld [vmem:[#allocation2 + $0x18] sm:$0xff]
      %v700 = vld [vmem:[#allocation2 + $0x20] sm:$0xff]
      %v701 = vld [vmem:[#allocation2 + $0x28] sm:$0xff]
      %v702 = vld [vmem:[#allocation2 + $0x30] sm:$0xff]
      %v703 = vld [vmem:[#allocation2 + $0x38] sm:$0xff]
      %v704 = vld [vmem:[#allocation2 + $0x40] sm:$0xff]
      %v705 = vld [vmem:[#allocation2 + $0x48] sm:$0xff]
      %v706 = vld [vmem:[#allocation2 + $0x50] sm:$0xff]
      %v707 = vld [vmem:[#allocation2 + $0x58] sm:$0xff]
      %v708 = vld [vmem:[#allocation2 + $0x60] sm:$0xff]
      %v709 = vld [vmem:[#allocation2 + $0x68] sm:$0xff]
      %v710 = vld [vmem:[#allocation2 + $0x70] sm:$0xff]
      %v711 = vld [vmem:[#allocation2 + $0x78] sm:$0xff]
      %v712 = vld [vmem:[#allocation2 + $0x80] sm:$0xff]
      %v713 = vld [vmem:[#allocation2 + $0x88] sm:$0xff]
      %v714 = vld [vmem:[#allocation2 + $0x90] sm:$0xff]
      %v715 = vld [vmem:[#allocation2 + $0x98] sm:$0xff]
      %v716 = vld [vmem:[#allocation2 + $0xa0] sm:$0xff]
      %v717 = vld [vmem:[#allocation2 + $0xa8] sm:$0xff]
      %v718 = vld [vmem:[#allocation2 + $0xb0] sm:$0xff]
      %v719 = vld [vmem:[#allocation2 + $0xb8] sm:$0xff]
      %v720 = vld [vmem:[#allocation2 + $0xc0] sm:$0xff]
      %v721 = vld [vmem:[#allocation2 + $0xc8] sm:$0xff]
      %v722 = vld [vmem:[#allocation2 + $0xd0] sm:$0xff]
      %v723 = vld [vmem:[#allocation2 + $0xd8] sm:$0xff]
      %v724 = vld [vmem:[#allocation2 + $0xe0] sm:$0xff]
      %v725 = vld [vmem:[#allocation2 + $0xe8] sm:$0xff]
      %v726 = vld [vmem:[#allocation2 + $0xf0] sm:$0xff]
      %v727 = vld [vmem:[#allocation2 + $0xf8] sm:$0xff]
      %729 = vset.pattern.permute.xlu0 0
      %730 = vperm.xlu0 %729, %v664
      %v731 = vpop.permute.xlu0 %730
      %734 = vset.pattern.permute.xlu0 0
      %735 = vperm.xlu0 %734, %v665
      %v736 = vpop.permute.xlu0 %735
      %739 = vset.pattern.permute.xlu0 0
      %740 = vperm.xlu0 %739, %v666
      %v741 = vpop.permute.xlu0 %740
      %744 = vset.pattern.permute.xlu0 0
      %745 = vperm.xlu0 %744, %v667
      %v746 = vpop.permute.xlu0 %745
      %749 = vset.pattern.permute.xlu0 0
      %750 = vperm.xlu0 %749, %v668
      %v751 = vpop.permute.xlu0 %750
      %754 = vset.pattern.permute.xlu0 0
      %755 = vperm.xlu0 %754, %v669
      %v756 = vpop.permute.xlu0 %755
      %759 = vset.pattern.permute.xlu0 0
      %760 = vperm.xlu0 %759, %v670
      %v761 = vpop.permute.xlu0 %760
      %764 = vset.pattern.permute.xlu0 0
      %765 = vperm.xlu0 %764, %v671
      %v766 = vpop.permute.xlu0 %765
      %769 = vset.pattern.permute.xlu0 0
      %770 = vperm.xlu0 %769, %v672
      %v771 = vpop.permute.xlu0 %770
      %774 = vset.pattern.permute.xlu0 0
      %775 = vperm.xlu0 %774, %v673
      %v776 = vpop.permute.xlu0 %775
      %779 = vset.pattern.permute.xlu0 0
      %780 = vperm.xlu0 %779, %v674
      %v781 = vpop.permute.xlu0 %780
      %784 = vset.pattern.permute.xlu0 0
      %785 = vperm.xlu0 %784, %v675
      %v786 = vpop.permute.xlu0 %785
      %789 = vset.pattern.permute.xlu0 0
      %790 = vperm.xlu0 %789, %v676
      %v791 = vpop.permute.xlu0 %790
      %794 = vset.pattern.permute.xlu0 0
      %795 = vperm.xlu0 %794, %v677
      %v796 = vpop.permute.xlu0 %795
      %799 = vset.pattern.permute.xlu0 0
      %800 = vperm.xlu0 %799, %v678
      %v801 = vpop.permute.xlu0 %800
      %804 = vset.pattern.permute.xlu0 0
      %805 = vperm.xlu0 %804, %v679
      %v806 = vpop.permute.xlu0 %805
      %809 = vset.pattern.permute.xlu0 0
      %810 = vperm.xlu0 %809, %v680
      %v811 = vpop.permute.xlu0 %810
      %814 = vset.pattern.permute.xlu0 0
      %815 = vperm.xlu0 %814, %v681
      %v816 = vpop.permute.xlu0 %815
      %819 = vset.pattern.permute.xlu0 0
      %820 = vperm.xlu0 %819, %v682
      %v821 = vpop.permute.xlu0 %820
      %824 = vset.pattern.permute.xlu0 0
      %825 = vperm.xlu0 %824, %v683
      %v826 = vpop.permute.xlu0 %825
      %829 = vset.pattern.permute.xlu0 0
      %830 = vperm.xlu0 %829, %v684
      %v831 = vpop.permute.xlu0 %830
      %834 = vset.pattern.permute.xlu0 0
      %835 = vperm.xlu0 %834, %v685
      %v836 = vpop.permute.xlu0 %835
      %839 = vset.pattern.permute.xlu0 0
      %840 = vperm.xlu0 %839, %v686
      %v841 = vpop.permute.xlu0 %840
      %844 = vset.pattern.permute.xlu0 0
      %845 = vperm.xlu0 %844, %v687
      %v846 = vpop.permute.xlu0 %845
      %849 = vset.pattern.permute.xlu0 0
      %850 = vperm.xlu0 %849, %v688
      %v851 = vpop.permute.xlu0 %850
      %854 = vset.pattern.permute.xlu0 0
      %855 = vperm.xlu0 %854, %v689
      %v856 = vpop.permute.xlu0 %855
      %859 = vset.pattern.permute.xlu0 0
      %860 = vperm.xlu0 %859, %v690
      %v861 = vpop.permute.xlu0 %860
      %864 = vset.pattern.permute.xlu0 0
      %865 = vperm.xlu0 %864, %v691
      %v866 = vpop.permute.xlu0 %865
      %869 = vset.pattern.permute.xlu0 0
      %870 = vperm.xlu0 %869, %v692
      %v871 = vpop.permute.xlu0 %870
      %874 = vset.pattern.permute.xlu0 0
      %875 = vperm.xlu0 %874, %v693
      %v876 = vpop.permute.xlu0 %875
      %879 = vset.pattern.permute.xlu0 0
      %880 = vperm.xlu0 %879, %v694
      %v881 = vpop.permute.xlu0 %880
      %884 = vset.pattern.permute.xlu0 0
      %885 = vperm.xlu0 %884, %v695
      %v886 = vpop.permute.xlu0 %885
      %v888 = vmul.f32 %v696, %v731
      %v889 = vmul.f32 %v697, %v736
      %v890 = vmul.f32 %v698, %v741
      %v891 = vmul.f32 %v699, %v746
      %v892 = vmul.f32 %v700, %v751
      %v893 = vmul.f32 %v701, %v756
      %v894 = vmul.f32 %v702, %v761
      %v895 = vmul.f32 %v703, %v766
      %v896 = vmul.f32 %v704, %v771
      %v897 = vmul.f32 %v705, %v776
      %v898 = vmul.f32 %v706, %v781
      %v899 = vmul.f32 %v707, %v786
      %v900 = vmul.f32 %v708, %v791
      %v901 = vmul.f32 %v709, %v796
      %v902 = vmul.f32 %v710, %v801
      %v903 = vmul.f32 %v711, %v806
      %v904 = vmul.f32 %v712, %v811
      %v905 = vmul.f32 %v713, %v816
      %v906 = vmul.f32 %v714, %v821
      %v907 = vmul.f32 %v715, %v826
      %v908 = vmul.f32 %v716, %v831
      %v909 = vmul.f32 %v717, %v836
      %v910 = vmul.f32 %v718, %v841
      %v911 = vmul.f32 %v719, %v846
      %v912 = vmul.f32 %v720, %v851
      %v913 = vmul.f32 %v721, %v856
      %v914 = vmul.f32 %v722, %v861
      %v915 = vmul.f32 %v723, %v866
      %v916 = vmul.f32 %v724, %v871
      %v917 = vmul.f32 %v725, %v876
      %v918 = vmul.f32 %v726, %v881
      %v919 = vmul.f32 %v727, %v886
      %v920 = vld [vmem:[#allocation2 + $0x1] sm:$0xff]
      %v921 = vld [vmem:[#allocation2 + $0x9] sm:$0xff]
      %v922 = vld [vmem:[#allocation2 + $0x11] sm:$0xff]
      %v923 = vld [vmem:[#allocation2 + $0x19] sm:$0xff]
      %v924 = vld [vmem:[#allocation2 + $0x21] sm:$0xff]
      %v925 = vld [vmem:[#allocation2 + $0x29] sm:$0xff]
      %v926 = vld [vmem:[#allocation2 + $0x31] sm:$0xff]
      %v927 = vld [vmem:[#allocation2 + $0x39] sm:$0xff]
      %v928 = vld [vmem:[#allocation2 + $0x41] sm:$0xff]
      %v929 = vld [vmem:[#allocation2 + $0x49] sm:$0xff]
      %v930 = vld [vmem:[#allocation2 + $0x51] sm:$0xff]
      %v931 = vld [vmem:[#allocation2 + $0x59] sm:$0xff]
      %v932 = vld [vmem:[#allocation2 + $0x61] sm:$0xff]
      %v933 = vld [vmem:[#allocation2 + $0x69] sm:$0xff]
      %v934 = vld [vmem:[#allocation2 + $0x71] sm:$0xff]
      %v935 = vld [vmem:[#allocation2 + $0x79] sm:$0xff]
      %v936 = vld [vmem:[#allocation2 + $0x81] sm:$0xff]
      %v937 = vld [vmem:[#allocation2 + $0x89] sm:$0xff]
      %v938 = vld [vmem:[#allocation2 + $0x91] sm:$0xff]
      %v939 = vld [vmem:[#allocation2 + $0x99] sm:$0xff]
      %v940 = vld [vmem:[#allocation2 + $0xa1] sm:$0xff]
      %v941 = vld [vmem:[#allocation2 + $0xa9] sm:$0xff]
      %v942 = vld [vmem:[#allocation2 + $0xb1] sm:$0xff]
      %v943 = vld [vmem:[#allocation2 + $0xb9] sm:$0xff]
      %v944 = vld [vmem:[#allocation2 + $0xc1] sm:$0xff]
      %v945 = vld [vmem:[#allocation2 + $0xc9] sm:$0xff]
      %v946 = vld [vmem:[#allocation2 + $0xd1] sm:$0xff]
      %v947 = vld [vmem:[#allocation2 + $0xd9] sm:$0xff]
      %v948 = vld [vmem:[#allocation2 + $0xe1] sm:$0xff]
      %v949 = vld [vmem:[#allocation2 + $0xe9] sm:$0xff]
      %v950 = vld [vmem:[#allocation2 + $0xf1] sm:$0xff]
      %v951 = vld [vmem:[#allocation2 + $0xf9] sm:$0xff]
      %v952 = vld [vmem:[#allocation2 + $0x2] sm:$0xff]
      %v953 = vld [vmem:[#allocation2 + $0xa] sm:$0xff]
      %v954 = vld [vmem:[#allocation2 + $0x12] sm:$0xff]
      %v955 = vld [vmem:[#allocation2 + $0x1a] sm:$0xff]
      %v956 = vld [vmem:[#allocation2 + $0x22] sm:$0xff]
      %v957 = vld [vmem:[#allocation2 + $0x2a] sm:$0xff]
      %v958 = vld [vmem:[#allocation2 + $0x32] sm:$0xff]
      %v959 = vld [vmem:[#allocation2 + $0x3a] sm:$0xff]
      %v960 = vld [vmem:[#allocation2 + $0x42] sm:$0xff]
      %v961 = vld [vmem:[#allocation2 + $0x4a] sm:$0xff]
      %v962 = vld [vmem:[#allocation2 + $0x52] sm:$0xff]
      %v963 = vld [vmem:[#allocation2 + $0x5a] sm:$0xff]
      %v964 = vld [vmem:[#allocation2 + $0x62] sm:$0xff]
      %v965 = vld [vmem:[#allocation2 + $0x6a] sm:$0xff]
      %v966 = vld [vmem:[#allocation2 + $0x72] sm:$0xff]
      %v967 = vld [vmem:[#allocation2 + $0x7a] sm:$0xff]
      %v968 = vld [vmem:[#allocation2 + $0x82] sm:$0xff]
      %v969 = vld [vmem:[#allocation2 + $0x8a] sm:$0xff]
      %v970 = vld [vmem:[#allocation2 + $0x92] sm:$0xff]
      %v971 = vld [vmem:[#allocation2 + $0x9a] sm:$0xff]
      %v972 = vld [vmem:[#allocation2 + $0xa2] sm:$0xff]
      %v973 = vld [vmem:[#allocation2 + $0xaa] sm:$0xff]
      %v974 = vld [vmem:[#allocation2 + $0xb2] sm:$0xff]
      %v975 = vld [vmem:[#allocation2 + $0xba] sm:$0xff]
      %v976 = vld [vmem:[#allocation2 + $0xc2] sm:$0xff]
      %v977 = vld [vmem:[#allocation2 + $0xca] sm:$0xff]
      %v978 = vld [vmem:[#allocation2 + $0xd2] sm:$0xff]
      %v979 = vld [vmem:[#allocation2 + $0xda] sm:$0xff]
      %v980 = vld [vmem:[#allocation2 + $0xe2] sm:$0xff]
      %v981 = vld [vmem:[#allocation2 + $0xea] sm:$0xff]
      %v982 = vld [vmem:[#allocation2 + $0xf2] sm:$0xff]
      %v983 = vld [vmem:[#allocation2 + $0xfa] sm:$0xff]
      %984 = vset.pattern.permute.xlu0 1
      %985 = vperm.xlu0 %984, %v664
      %v986 = vpop.permute.xlu0 %985
      %988 = vset.pattern.permute.xlu0 1
      %989 = vperm.xlu0 %988, %v665
      %v990 = vpop.permute.xlu0 %989
      %992 = vset.pattern.permute.xlu0 1
      %993 = vperm.xlu0 %992, %v666
      %v994 = vpop.permute.xlu0 %993
      %996 = vset.pattern.permute.xlu0 1
      %997 = vperm.xlu0 %996, %v667
      %v998 = vpop.permute.xlu0 %997
      %1000 = vset.pattern.permute.xlu0 1
      %1001 = vperm.xlu0 %1000, %v668
      %v1002 = vpop.permute.xlu0 %1001
      %1004 = vset.pattern.permute.xlu0 1
      %1005 = vperm.xlu0 %1004, %v669
      %v1006 = vpop.permute.xlu0 %1005
      %1008 = vset.pattern.permute.xlu0 1
      %1009 = vperm.xlu0 %1008, %v670
      %v1010 = vpop.permute.xlu0 %1009
      %1012 = vset.pattern.permute.xlu0 1
      %1013 = vperm.xlu0 %1012, %v671
      %v1014 = vpop.permute.xlu0 %1013
      %1016 = vset.pattern.permute.xlu0 1
      %1017 = vperm.xlu0 %1016, %v672
      %v1018 = vpop.permute.xlu0 %1017
      %1020 = vset.pattern.permute.xlu0 1
      %1021 = vperm.xlu0 %1020, %v673
      %v1022 = vpop.permute.xlu0 %1021
      %1024 = vset.pattern.permute.xlu0 1
      %1025 = vperm.xlu0 %1024, %v674
      %v1026 = vpop.permute.xlu0 %1025
      %1028 = vset.pattern.permute.xlu0 1
      %1029 = vperm.xlu0 %1028, %v675
      %v1030 = vpop.permute.xlu0 %1029
      %1032 = vset.pattern.permute.xlu0 1
      %1033 = vperm.xlu0 %1032, %v676
      %v1034 = vpop.permute.xlu0 %1033
      %1036 = vset.pattern.permute.xlu0 1
      %1037 = vperm.xlu0 %1036, %v677
      %v1038 = vpop.permute.xlu0 %1037
      %1040 = vset.pattern.permute.xlu0 1
      %1041 = vperm.xlu0 %1040, %v678
      %v1042 = vpop.permute.xlu0 %1041
      %1044 = vset.pattern.permute.xlu0 1
      %1045 = vperm.xlu0 %1044, %v679
      %v1046 = vpop.permute.xlu0 %1045
      %1048 = vset.pattern.permute.xlu0 1
      %1049 = vperm.xlu0 %1048, %v680
      %v1050 = vpop.permute.xlu0 %1049
      %1052 = vset.pattern.permute.xlu0 1
      %1053 = vperm.xlu0 %1052, %v681
      %v1054 = vpop.permute.xlu0 %1053
      %1056 = vset.pattern.permute.xlu0 1
      %1057 = vperm.xlu0 %1056, %v682
      %v1058 = vpop.permute.xlu0 %1057
      %1060 = vset.pattern.permute.xlu0 1
      %1061 = vperm.xlu0 %1060, %v683
      %v1062 = vpop.permute.xlu0 %1061
      %1064 = vset.pattern.permute.xlu0 1
      %1065 = vperm.xlu0 %1064, %v684
      %v1066 = vpop.permute.xlu0 %1065
      %1068 = vset.pattern.permute.xlu0 1
      %1069 = vperm.xlu0 %1068, %v685
      %v1070 = vpop.permute.xlu0 %1069
      %1072 = vset.pattern.permute.xlu0 1
      %1073 = vperm.xlu0 %1072, %v686
      %v1074 = vpop.permute.xlu0 %1073
      %1076 = vset.pattern.permute.xlu0 1
      %1077 = vperm.xlu0 %1076, %v687
      %v1078 = vpop.permute.xlu0 %1077
      %1080 = vset.pattern.permute.xlu0 1
      %1081 = vperm.xlu0 %1080, %v688
      %v1082 = vpop.permute.xlu0 %1081
      %1084 = vset.pattern.permute.xlu0 1
      %1085 = vperm.xlu0 %1084, %v689
      %v1086 = vpop.permute.xlu0 %1085
      %1088 = vset.pattern.permute.xlu0 1
      %1089 = vperm.xlu0 %1088, %v690
      %v1090 = vpop.permute.xlu0 %1089
      %1092 = vset.pattern.permute.xlu0 1
      %1093 = vperm.xlu0 %1092, %v691
      %v1094 = vpop.permute.xlu0 %1093
      %1096 = vset.pattern.permute.xlu0 1
      %1097 = vperm.xlu0 %1096, %v692
      %v1098 = vpop.permute.xlu0 %1097
      %1100 = vset.pattern.permute.xlu0 1
      %1101 = vperm.xlu0 %1100, %v693
      %v1102 = vpop.permute.xlu0 %1101
      %1104 = vset.pattern.permute.xlu0 1
      %1105 = vperm.xlu0 %1104, %v694
      %v1106 = vpop.permute.xlu0 %1105
      %1108 = vset.pattern.permute.xlu0 1
      %1109 = vperm.xlu0 %1108, %v695
      %v1110 = vpop.permute.xlu0 %1109
      %v1112 = vmul.f32 %v952, %v986
      %v1113 = vmul.f32 %v953, %v990
      %v1114 = vmul.f32 %v954, %v994
      %v1115 = vmul.f32 %v955, %v998
      %v1116 = vmul.f32 %v956, %v1002
      %v1117 = vmul.f32 %v957, %v1006
      %v1118 = vmul.f32 %v958, %v1010
      %v1119 = vmul.f32 %v959, %v1014
      %v1120 = vmul.f32 %v960, %v1018
      %v1121 = vmul.f32 %v961, %v1022
      %v1122 = vmul.f32 %v962, %v1026
      %v1123 = vmul.f32 %v963, %v1030
      %v1124 = vmul.f32 %v964, %v1034
      %v1125 = vmul.f32 %v965, %v1038
      %v1126 = vmul.f32 %v966, %v1042
      %v1127 = vmul.f32 %v967, %v1046
      %v1128 = vmul.f32 %v968, %v1050
      %v1129 = vmul.f32 %v969, %v1054
      %v1130 = vmul.f32 %v970, %v1058
      %v1131 = vmul.f32 %v971, %v1062
      %v1132 = vmul.f32 %v972, %v1066
      %v1133 = vmul.f32 %v973, %v1070
      %v1134 = vmul.f32 %v974, %v1074
      %v1135 = vmul.f32 %v975, %v1078
      %v1136 = vmul.f32 %v976, %v1082
      %v1137 = vmul.f32 %v977, %v1086
      %v1138 = vmul.f32 %v978, %v1090
      %v1139 = vmul.f32 %v979, %v1094
      %v1140 = vmul.f32 %v980, %v1098
      %v1141 = vmul.f32 %v981, %v1102
      %v1142 = vmul.f32 %v982, %v1106
      %v1143 = vmul.f32 %v983, %v1110
      %v1144 = vld [vmem:[#allocation2 + $0x10] sm:$0xff]
      %v1145 = vld [vmem:[#allocation2 + $0x18] sm:$0xff]
      %v1146 = vld [vmem:[#allocation2 + $0x20] sm:$0xff]
      %v1147 = vld [vmem:[#allocation2 + $0x28] sm:$0xff]
      %v1148 = vld [vmem:[#allocation2 + $0x30] sm:$0xff]
      %v1149 = vld [vmem:[#allocation2 + $0x38] sm:$0xff]
      %v1150 = vld [vmem:[#allocation2 + $0x40] sm:$0xff]
      %v1151 = vld [vmem:[#allocation2 + $0x48] sm:$0xff]
      %v1152 = vld [vmem:[#allocation2 + $0x50] sm:$0xff]
      %v1153 = vld [vmem:[#allocation2 + $0x58] sm:$0xff]
      %v1154 = vld [vmem:[#allocation2 + $0x60] sm:$0xff]
      %v1155 = vld [vmem:[#allocation2 + $0x68] sm:$0xff]
      %v1156 = vld [vmem:[#allocation2 + $0x70] sm:$0xff]
      %v1157 = vld [vmem:[#allocation2 + $0x78] sm:$0xff]
      %v1158 = vld [vmem:[#allocation2 + $0x80] sm:$0xff]
      %v1159 = vld [vmem:[#allocation2 + $0x88] sm:$0xff]
      %v1160 = vld [vmem:[#allocation2 + $0x90] sm:$0xff]
      %v1161 = vld [vmem:[#allocation2 + $0x98] sm:$0xff]
      %v1162 = vld [vmem:[#allocation2 + $0xa0] sm:$0xff]
      %v1163 = vld [vmem:[#allocation2 + $0xa8] sm:$0xff]
      %v1164 = vld [vmem:[#allocation2 + $0xb0] sm:$0xff]
      %v1165 = vld [vmem:[#allocation2 + $0xb8] sm:$0xff]
      %v1166 = vld [vmem:[#allocation2 + $0xc0] sm:$0xff]
      %v1167 = vld [vmem:[#allocation2 + $0xc8] sm:$0xff]
      %v1168 = vld [vmem:[#allocation2 + $0xd0] sm:$0xff]
      %v1169 = vld [vmem:[#allocation2 + $0xd8] sm:$0xff]
      %v1170 = vld [vmem:[#allocation2 + $0xe0] sm:$0xff]
      %v1171 = vld [vmem:[#allocation2 + $0xe8] sm:$0xff]
      %v1172 = vld [vmem:[#allocation2 + $0xf0] sm:$0xff]
      %v1173 = vld [vmem:[#allocation2 + $0xf8] sm:$0xff]
      %v1174 = vld [vmem:[#allocation2 + $0x100] sm:$0xff]
      %v1175 = vld [vmem:[#allocation2 + $0x108] sm:$0xff]
      %v1176 = vmul.f32 %v1144, %v731
      %v1177 = vmul.f32 %v1145, %v736
      %v1178 = vmul.f32 %v1146, %v741
      %v1179 = vmul.f32 %v1147, %v746
      %v1180 = vmul.f32 %v1148, %v751
      %v1181 = vmul.f32 %v1149, %v756
      %v1182 = vmul.f32 %v1150, %v761
      %v1183 = vmul.f32 %v1151, %v766
      %v1184 = vmul.f32 %v1152, %v771
      %v1185 = vmul.f32 %v1153, %v776
      %v1186 = vmul.f32 %v1154, %v781
      %v1187 = vmul.f32 %v1155, %v786
      %v1188 = vmul.f32 %v1156, %v791
      %v1189 = vmul.f32 %v1157, %v796
      %v1190 = vmul.f32 %v1158, %v801
      %v1191 = vmul.f32 %v1159, %v806
      %v1192 = vmul.f32 %v1160, %v811
      %v1193 = vmul.f32 %v1161, %v816
      %v1194 = vmul.f32 %v1162, %v821
      %v1195 = vmul.f32 %v1163, %v826
      %v1196 = vmul.f32 %v1164, %v831
      %v1197 = vmul.f32 %v1165, %v836
      %v1198 = vmul.f32 %v1166, %v841
      %v1199 = vmul.f32 %v1167, %v846
      %v1200 = vmul.f32 %v1168, %v851
      %v1201 = vmul.f32 %v1169, %v856
      %v1202 = vmul.f32 %v1170, %v861
      %v1203 = vmul.f32 %v1171, %v866
      %v1204 = vmul.f32 %v1172, %v871
      %v1205 = vmul.f32 %v1173, %v876
      %v1206 = vmul.f32 %v1174, %v881
      %v1207 = vmul.f32 %v1175, %v886
      %v1208 = vld [vmem:[#allocation2 + $0x11] sm:$0xff]
      %v1209 = vld [vmem:[#allocation2 + $0x19] sm:$0xff]
      %v1210 = vld [vmem:[#allocation2 + $0x21] sm:$0xff]
      %v1211 = vld [vmem:[#allocation2 + $0x29] sm:$0xff]
      %v1212 = vld [vmem:[#allocation2 + $0x31] sm:$0xff]
      %v1213 = vld [vmem:[#allocation2 + $0x39] sm:$0xff]
      %v1214 = vld [vmem:[#allocation2 + $0x41] sm:$0xff]
      %v1215 = vld [vmem:[#allocation2 + $0x49] sm:$0xff]
      %v1216 = vld [vmem:[#allocation2 + $0x51] sm:$0xff]
      %v1217 = vld [vmem:[#allocation2 + $0x59] sm:$0xff]
      %v1218 = vld [vmem:[#allocation2 + $0x61] sm:$0xff]
      %v1219 = vld [vmem:[#allocation2 + $0x69] sm:$0xff]
      %v1220 = vld [vmem:[#allocation2 + $0x71] sm:$0xff]
      %v1221 = vld [vmem:[#allocation2 + $0x79] sm:$0xff]
      %v1222 = vld [vmem:[#allocation2 + $0x81] sm:$0xff]
      %v1223 = vld [vmem:[#allocation2 + $0x89] sm:$0xff]
      %v1224 = vld [vmem:[#allocation2 + $0x91] sm:$0xff]
      %v1225 = vld [vmem:[#allocation2 + $0x99] sm:$0xff]
      %v1226 = vld [vmem:[#allocation2 + $0xa1] sm:$0xff]
      %v1227 = vld [vmem:[#allocation2 + $0xa9] sm:$0xff]
      %v1228 = vld [vmem:[#allocation2 + $0xb1] sm:$0xff]
      %v1229 = vld [vmem:[#allocation2 + $0xb9] sm:$0xff]
      %v1230 = vld [vmem:[#allocation2 + $0xc1] sm:$0xff]
      %v1231 = vld [vmem:[#allocation2 + $0xc9] sm:$0xff]
      %v1232 = vld [vmem:[#allocation2 + $0xd1] sm:$0xff]
      %v1233 = vld [vmem:[#allocation2 + $0xd9] sm:$0xff]
      %v1234 = vld [vmem:[#allocation2 + $0xe1] sm:$0xff]
      %v1235 = vld [vmem:[#allocation2 + $0xe9] sm:$0xff]
      %v1236 = vld [vmem:[#allocation2 + $0xf1] sm:$0xff]
      %v1237 = vld [vmem:[#allocation2 + $0xf9] sm:$0xff]
      %v1238 = vld [vmem:[#allocation2 + $0x101] sm:$0xff]
      %v1239 = vld [vmem:[#allocation2 + $0x109] sm:$0xff]
      %v1240 = vld [vmem:[#allocation2 + $0x12] sm:$0xff]
      %v1241 = vld [vmem:[#allocation2 + $0x1a] sm:$0xff]
      %v1242 = vld [vmem:[#allocation2 + $0x22] sm:$0xff]
      %v1243 = vld [vmem:[#allocation2 + $0x2a] sm:$0xff]
      %v1244 = vld [vmem:[#allocation2 + $0x32] sm:$0xff]
      %v1245 = vld [vmem:[#allocation2 + $0x3a] sm:$0xff]
      %v1246 = vld [vmem:[#allocation2 + $0x42] sm:$0xff]
      %v1247 = vld [vmem:[#allocation2 + $0x4a] sm:$0xff]
      %v1248 = vld [vmem:[#allocation2 + $0x52] sm:$0xff]
      %v1249 = vld [vmem:[#allocation2 + $0x5a] sm:$0xff]
      %v1250 = vld [vmem:[#allocation2 + $0x62] sm:$0xff]
      %v1251 = vld [vmem:[#allocation2 + $0x6a] sm:$0xff]
      %v1252 = vld [vmem:[#allocation2 + $0x72] sm:$0xff]
      %v1253 = vld [vmem:[#allocation2 + $0x7a] sm:$0xff]
      %v1254 = vld [vmem:[#allocation2 + $0x82] sm:$0xff]
      %v1255 = vld [vmem:[#allocation2 + $0x8a] sm:$0xff]
      %v1256 = vld [vmem:[#allocation2 + $0x92] sm:$0xff]
      %v1257 = vld [vmem:[#allocation2 + $0x9a] sm:$0xff]
      %v1258 = vld [vmem:[#allocation2 + $0xa2] sm:$0xff]
      %v1259 = vld [vmem:[#allocation2 + $0xaa] sm:$0xff]
      %v1260 = vld [vmem:[#allocation2 + $0xb2] sm:$0xff]
      %v1261 = vld [vmem:[#allocation2 + $0xba] sm:$0xff]
      %v1262 = vld [vmem:[#allocation2 + $0xc2] sm:$0xff]
      %v1263 = vld [vmem:[#allocation2 + $0xca] sm:$0xff]
      %v1264 = vld [vmem:[#allocation2 + $0xd2] sm:$0xff]
      %v1265 = vld [vmem:[#allocation2 + $0xda] sm:$0xff]
      %v1266 = vld [vmem:[#allocation2 + $0xe2] sm:$0xff]
      %v1267 = vld [vmem:[#allocation2 + $0xea] sm:$0xff]
      %v1268 = vld [vmem:[#allocation2 + $0xf2] sm:$0xff]
      %v1269 = vld [vmem:[#allocation2 + $0xfa] sm:$0xff]
      %v1270 = vld [vmem:[#allocation2 + $0x102] sm:$0xff]
      %v1271 = vld [vmem:[#allocation2 + $0x10a] sm:$0xff]
      %v1272 = vmul.f32 %v1240, %v986
      %v1273 = vmul.f32 %v1241, %v990
      %v1274 = vmul.f32 %v1242, %v994
      %v1275 = vmul.f32 %v1243, %v998
      %v1276 = vmul.f32 %v1244, %v1002
      %v1277 = vmul.f32 %v1245, %v1006
      %v1278 = vmul.f32 %v1246, %v1010
      %v1279 = vmul.f32 %v1247, %v1014
      %v1280 = vmul.f32 %v1248, %v1018
      %v1281 = vmul.f32 %v1249, %v1022
      %v1282 = vmul.f32 %v1250, %v1026
      %v1283 = vmul.f32 %v1251, %v1030
      %v1284 = vmul.f32 %v1252, %v1034
      %v1285 = vmul.f32 %v1253, %v1038
      %v1286 = vmul.f32 %v1254, %v1042
      %v1287 = vmul.f32 %v1255, %v1046
      %v1288 = vmul.f32 %v1256, %v1050
      %v1289 = vmul.f32 %v1257, %v1054
      %v1290 = vmul.f32 %v1258, %v1058
      %v1291 = vmul.f32 %v1259, %v1062
      %v1292 = vmul.f32 %v1260, %v1066
      %v1293 = vmul.f32 %v1261, %v1070
      %v1294 = vmul.f32 %v1262, %v1074
      %v1295 = vmul.f32 %v1263, %v1078
      %v1296 = vmul.f32 %v1264, %v1082
      %v1297 = vmul.f32 %v1265, %v1086
      %v1298 = vmul.f32 %v1266, %v1090
      %v1299 = vmul.f32 %v1267, %v1094
      %v1300 = vmul.f32 %v1268, %v1098
      %v1301 = vmul.f32 %v1269, %v1102
      %v1302 = vmul.f32 %v1270, %v1106
      %v1303 = vmul.f32 %v1271, %v1110
      %v1304 = vld [vmem:[#allocation2 + $0x110] sm:$0xff]
      %v1305 = vld [vmem:[#allocation2 + $0x118] sm:$0xff]
      %v1306 = vmul.f32 %v1146, %v731
      %v1307 = vmul.f32 %v1147, %v736
      %v1308 = vmul.f32 %v1148, %v741
      %v1309 = vmul.f32 %v1149, %v746
      %v1310 = vmul.f32 %v1150, %v751
      %v1311 = vmul.f32 %v1151, %v756
      %v1312 = vmul.f32 %v1152, %v761
      %v1313 = vmul.f32 %v1153, %v766
      %v1314 = vmul.f32 %v1154, %v771
      %v1315 = vmul.f32 %v1155, %v776
      %v1316 = vmul.f32 %v1156, %v781
      %v1317 = vmul.f32 %v1157, %v786
      %v1318 = vmul.f32 %v1158, %v791
      %v1319 = vmul.f32 %v1159, %v796
      %v1320 = vmul.f32 %v1160, %v801
      %v1321 = vmul.f32 %v1161, %v806
      %v1322 = vmul.f32 %v1162, %v811
      %v1323 = vmul.f32 %v1163, %v816
      %v1324 = vmul.f32 %v1164, %v821
      %v1325 = vmul.f32 %v1165, %v826
      %v1326 = vmul.f32 %v1166, %v831
      %v1327 = vmul.f32 %v1167, %v836
      %v1328 = vmul.f32 %v1168, %v841
      %v1329 = vmul.f32 %v1169, %v846
      %v1330 = vmul.f32 %v1170, %v851
      %v1331 = vmul.f32 %v1171, %v856
      %v1332 = vmul.f32 %v1172, %v861
      %v1333 = vmul.f32 %v1173, %v866
      %v1334 = vmul.f32 %v1174, %v871
      %v1335 = vmul.f32 %v1175, %v876
      %v1336 = vmul.f32 %v1304, %v881
      %v1337 = vmul.f32 %v1305, %v886
      %v1338 = vld [vmem:[#allocation2 + $0x111] sm:$0xff]
      %v1339 = vld [vmem:[#allocation2 + $0x119] sm:$0xff]
      %v1340 = vld [vmem:[#allocation2 + $0x112] sm:$0xff]
      %v1341 = vld [vmem:[#allocation2 + $0x11a] sm:$0xff]
      %v1342 = vmul.f32 %v1242, %v986
      %v1343 = vmul.f32 %v1243, %v990
      %v1344 = vmul.f32 %v1244, %v994
      %v1345 = vmul.f32 %v1245, %v998
      %v1346 = vmul.f32 %v1246, %v1002
      %v1347 = vmul.f32 %v1247, %v1006
      %v1348 = vmul.f32 %v1248, %v1010
      %v1349 = vmul.f32 %v1249, %v1014
      %v1350 = vmul.f32 %v1250, %v1018
      %v1351 = vmul.f32 %v1251, %v1022
      %v1352 = vmul.f32 %v1252, %v1026
      %v1353 = vmul.f32 %v1253, %v1030
      %v1354 = vmul.f32 %v1254, %v1034
      %v1355 = vmul.f32 %v1255, %v1038
      %v1356 = vmul.f32 %v1256, %v1042
      %v1357 = vmul.f32 %v1257, %v1046
      %v1358 = vmul.f32 %v1258, %v1050
      %v1359 = vmul.f32 %v1259, %v1054
      %v1360 = vmul.f32 %v1260, %v1058
      %v1361 = vmul.f32 %v1261, %v1062
      %v1362 = vmul.f32 %v1262, %v1066
      %v1363 = vmul.f32 %v1263, %v1070
      %v1364 = vmul.f32 %v1264, %v1074
      %v1365 = vmul.f32 %v1265, %v1078
      %v1366 = vmul.f32 %v1266, %v1082
      %v1367 = vmul.f32 %v1267, %v1086
      %v1368 = vmul.f32 %v1268, %v1090
      %v1369 = vmul.f32 %v1269, %v1094
      %v1370 = vmul.f32 %v1270, %v1098
      %v1371 = vmul.f32 %v1271, %v1102
      %v1372 = vmul.f32 %v1340, %v1106
      %v1373 = vmul.f32 %v1341, %v1110
      %1406 = vrot.lane.b32.xlu0 %v920, 4
      %v1407 = vpop.permute.xlu0 %1406
      %1408 = vrot.lane.b32.xlu0 %v921, 4
      %v1409 = vpop.permute.xlu0 %1408
      %1410 = vrot.lane.b32.xlu0 %v922, 4
      %v1411 = vpop.permute.xlu0 %1410
      %1412 = vrot.lane.b32.xlu0 %v923, 4
      %v1413 = vpop.permute.xlu0 %1412
      %1414 = vrot.lane.b32.xlu0 %v924, 4
      %v1415 = vpop.permute.xlu0 %1414
      %1416 = vrot.lane.b32.xlu0 %v925, 4
      %v1417 = vpop.permute.xlu0 %1416
      %1418 = vrot.lane.b32.xlu0 %v926, 4
      %v1419 = vpop.permute.xlu0 %1418
      %1420 = vrot.lane.b32.xlu0 %v927, 4
      %v1421 = vpop.permute.xlu0 %1420
      %1422 = vrot.lane.b32.xlu0 %v928, 4
      %v1423 = vpop.permute.xlu0 %1422
      %1424 = vrot.lane.b32.xlu0 %v929, 4
      %v1425 = vpop.permute.xlu0 %1424
      %1426 = vrot.lane.b32.xlu0 %v930, 4
      %v1427 = vpop.permute.xlu0 %1426
      %1428 = vrot.lane.b32.xlu0 %v931, 4
      %v1429 = vpop.permute.xlu0 %1428
      %1430 = vrot.lane.b32.xlu0 %v932, 4
      %v1431 = vpop.permute.xlu0 %1430
      %1432 = vrot.lane.b32.xlu0 %v933, 4
      %v1433 = vpop.permute.xlu0 %1432
      %1434 = vrot.lane.b32.xlu0 %v934, 4
      %v1435 = vpop.permute.xlu0 %1434
      %1436 = vrot.lane.b32.xlu0 %v935, 4
      %v1437 = vpop.permute.xlu0 %1436
      %1438 = vrot.lane.b32.xlu0 %v936, 4
      %v1439 = vpop.permute.xlu0 %1438
      %1440 = vrot.lane.b32.xlu0 %v937, 4
      %v1441 = vpop.permute.xlu0 %1440
      %1442 = vrot.lane.b32.xlu0 %v938, 4
      %v1443 = vpop.permute.xlu0 %1442
      %1444 = vrot.lane.b32.xlu0 %v939, 4
      %v1445 = vpop.permute.xlu0 %1444
      %1446 = vrot.lane.b32.xlu0 %v940, 4
      %v1447 = vpop.permute.xlu0 %1446
      %1448 = vrot.lane.b32.xlu0 %v941, 4
      %v1449 = vpop.permute.xlu0 %1448
      %1450 = vrot.lane.b32.xlu0 %v942, 4
      %v1451 = vpop.permute.xlu0 %1450
      %1452 = vrot.lane.b32.xlu0 %v943, 4
      %v1453 = vpop.permute.xlu0 %1452
      %1454 = vrot.lane.b32.xlu0 %v944, 4
      %v1455 = vpop.permute.xlu0 %1454
      %1456 = vrot.lane.b32.xlu0 %v945, 4
      %v1457 = vpop.permute.xlu0 %1456
      %1458 = vrot.lane.b32.xlu0 %v946, 4
      %v1459 = vpop.permute.xlu0 %1458
      %1460 = vrot.lane.b32.xlu0 %v947, 4
      %v1461 = vpop.permute.xlu0 %1460
      %1462 = vrot.lane.b32.xlu0 %v948, 4
      %v1463 = vpop.permute.xlu0 %1462
      %1464 = vrot.lane.b32.xlu0 %v949, 4
      %v1465 = vpop.permute.xlu0 %1464
      %1466 = vrot.lane.b32.xlu0 %v950, 4
      %v1467 = vpop.permute.xlu0 %1466
      %1468 = vrot.lane.b32.xlu0 %v951, 4
      %v1469 = vpop.permute.xlu0 %1468
      %1534 = vrot.lane.b32.xlu0 %v1112, 8
      %v1535 = vpop.permute.xlu0 %1534
      %1536 = vrot.lane.b32.xlu0 %v1113, 8
      %v1537 = vpop.permute.xlu0 %1536
      %1538 = vrot.lane.b32.xlu0 %v1114, 8
      %v1539 = vpop.permute.xlu0 %1538
      %1540 = vrot.lane.b32.xlu0 %v1115, 8
      %v1541 = vpop.permute.xlu0 %1540
      %1542 = vrot.lane.b32.xlu0 %v1116, 8
      %v1543 = vpop.permute.xlu0 %1542
      %1544 = vrot.lane.b32.xlu0 %v1117, 8
      %v1545 = vpop.permute.xlu0 %1544
      %1546 = vrot.lane.b32.xlu0 %v1118, 8
      %v1547 = vpop.permute.xlu0 %1546
      %1548 = vrot.lane.b32.xlu0 %v1119, 8
      %v1549 = vpop.permute.xlu0 %1548
      %1550 = vrot.lane.b32.xlu0 %v1120, 8
      %v1551 = vpop.permute.xlu0 %1550
      %1552 = vrot.lane.b32.xlu0 %v1121, 8
      %v1553 = vpop.permute.xlu0 %1552
      %1554 = vrot.lane.b32.xlu0 %v1122, 8
      %v1555 = vpop.permute.xlu0 %1554
      %1556 = vrot.lane.b32.xlu0 %v1123, 8
      %v1557 = vpop.permute.xlu0 %1556
      %1558 = vrot.lane.b32.xlu0 %v1124, 8
      %v1559 = vpop.permute.xlu0 %1558
      %1560 = vrot.lane.b32.xlu0 %v1125, 8
      %v1561 = vpop.permute.xlu0 %1560
      %1562 = vrot.lane.b32.xlu0 %v1126, 8
      %v1563 = vpop.permute.xlu0 %1562
      %1564 = vrot.lane.b32.xlu0 %v1127, 8
      %v1565 = vpop.permute.xlu0 %1564
      %1566 = vrot.lane.b32.xlu0 %v1128, 8
      %v1567 = vpop.permute.xlu0 %1566
      %1568 = vrot.lane.b32.xlu0 %v1129, 8
      %v1569 = vpop.permute.xlu0 %1568
      %1570 = vrot.lane.b32.xlu0 %v1130, 8
      %v1571 = vpop.permute.xlu0 %1570
      %1572 = vrot.lane.b32.xlu0 %v1131, 8
      %v1573 = vpop.permute.xlu0 %1572
      %1574 = vrot.lane.b32.xlu0 %v1132, 8
      %v1575 = vpop.permute.xlu0 %1574
      %1576 = vrot.lane.b32.xlu0 %v1133, 8
      %v1577 = vpop.permute.xlu0 %1576
      %1578 = vrot.lane.b32.xlu0 %v1134, 8
      %v1579 = vpop.permute.xlu0 %1578
      %1580 = vrot.lane.b32.xlu0 %v1135, 8
      %v1581 = vpop.permute.xlu0 %1580
      %1582 = vrot.lane.b32.xlu0 %v1136, 8
      %v1583 = vpop.permute.xlu0 %1582
      %1584 = vrot.lane.b32.xlu0 %v1137, 8
      %v1585 = vpop.permute.xlu0 %1584
      %1586 = vrot.lane.b32.xlu0 %v1138, 8
      %v1587 = vpop.permute.xlu0 %1586
      %1588 = vrot.lane.b32.xlu0 %v1139, 8
      %v1589 = vpop.permute.xlu0 %1588
      %1590 = vrot.lane.b32.xlu0 %v1140, 8
      %v1591 = vpop.permute.xlu0 %1590
      %1592 = vrot.lane.b32.xlu0 %v1141, 8
      %v1593 = vpop.permute.xlu0 %1592
      %1594 = vrot.lane.b32.xlu0 %v1142, 8
      %v1595 = vpop.permute.xlu0 %1594
      %1596 = vrot.lane.b32.xlu0 %v1143, 8
      %v1597 = vpop.permute.xlu0 %1596
      %1662 = vrot.lane.b32.xlu0 %v1176, 12
      %v1663 = vpop.permute.xlu0 %1662
      %1664 = vrot.lane.b32.xlu0 %v1177, 12
      %v1665 = vpop.permute.xlu0 %1664
      %1666 = vrot.lane.b32.xlu0 %v1178, 12
      %v1667 = vpop.permute.xlu0 %1666
      %1668 = vrot.lane.b32.xlu0 %v1179, 12
      %v1669 = vpop.permute.xlu0 %1668
      %1670 = vrot.lane.b32.xlu0 %v1180, 12
      %v1671 = vpop.permute.xlu0 %1670
      %1672 = vrot.lane.b32.xlu0 %v1181, 12
      %v1673 = vpop.permute.xlu0 %1672
      %1674 = vrot.lane.b32.xlu0 %v1182, 12
      %v1675 = vpop.permute.xlu0 %1674
      %1676 = vrot.lane.b32.xlu0 %v1183, 12
      %v1677 = vpop.permute.xlu0 %1676
      %1678 = vrot.lane.b32.xlu0 %v1184, 12
      %v1679 = vpop.permute.xlu0 %1678
      %1680 = vrot.lane.b32.xlu0 %v1185, 12
      %v1681 = vpop.permute.xlu0 %1680
      %1682 = vrot.lane.b32.xlu0 %v1186, 12
      %v1683 = vpop.permute.xlu0 %1682
      %1684 = vrot.lane.b32.xlu0 %v1187, 12
      %v1685 = vpop.permute.xlu0 %1684
      %1686 = vrot.lane.b32.xlu0 %v1188, 12
      %v1687 = vpop.permute.xlu0 %1686
      %1688 = vrot.lane.b32.xlu0 %v1189, 12
      %v1689 = vpop.permute.xlu0 %1688
      %1690 = vrot.lane.b32.xlu0 %v1190, 12
      %v1691 = vpop.permute.xlu0 %1690
      %1692 = vrot.lane.b32.xlu0 %v1191, 12
      %v1693 = vpop.permute.xlu0 %1692
      %1694 = vrot.lane.b32.xlu0 %v1192, 12
      %v1695 = vpop.permute.xlu0 %1694
      %1696 = vrot.lane.b32.xlu0 %v1193, 12
      %v1697 = vpop.permute.xlu0 %1696
      %1698 = vrot.lane.b32.xlu0 %v1194, 12
      %v1699 = vpop.permute.xlu0 %1698
      %1700 = vrot.lane.b32.xlu0 %v1195, 12
      %v1701 = vpop.permute.xlu0 %1700
      %1702 = vrot.lane.b32.xlu0 %v1196, 12
      %v1703 = vpop.permute.xlu0 %1702
      %1704 = vrot.lane.b32.xlu0 %v1197, 12
      %v1705 = vpop.permute.xlu0 %1704
      %1706 = vrot.lane.b32.xlu0 %v1198, 12
      %v1707 = vpop.permute.xlu0 %1706
      %1708 = vrot.lane.b32.xlu0 %v1199, 12
      %v1709 = vpop.permute.xlu0 %1708
      %1710 = vrot.lane.b32.xlu0 %v1200, 12
      %v1711 = vpop.permute.xlu0 %1710
      %1712 = vrot.lane.b32.xlu0 %v1201, 12
      %v1713 = vpop.permute.xlu0 %1712
      %1714 = vrot.lane.b32.xlu0 %v1202, 12
      %v1715 = vpop.permute.xlu0 %1714
      %1716 = vrot.lane.b32.xlu0 %v1203, 12
      %v1717 = vpop.permute.xlu0 %1716
      %1718 = vrot.lane.b32.xlu0 %v1204, 12
      %v1719 = vpop.permute.xlu0 %1718
      %1720 = vrot.lane.b32.xlu0 %v1205, 12
      %v1721 = vpop.permute.xlu0 %1720
      %1722 = vrot.lane.b32.xlu0 %v1206, 12
      %v1723 = vpop.permute.xlu0 %1722
      %1724 = vrot.lane.b32.xlu0 %v1207, 12
      %v1725 = vpop.permute.xlu0 %1724
      %1790 = vrot.lane.b32.xlu0 %v1208, 16
      %v1791 = vpop.permute.xlu0 %1790
      %1792 = vrot.lane.b32.xlu0 %v1209, 16
      %v1793 = vpop.permute.xlu0 %1792
      %1794 = vrot.lane.b32.xlu0 %v1210, 16
      %v1795 = vpop.permute.xlu0 %1794
      %1796 = vrot.lane.b32.xlu0 %v1211, 16
      %v1797 = vpop.permute.xlu0 %1796
      %1798 = vrot.lane.b32.xlu0 %v1212, 16
      %v1799 = vpop.permute.xlu0 %1798
      %1800 = vrot.lane.b32.xlu0 %v1213, 16
      %v1801 = vpop.permute.xlu0 %1800
      %1802 = vrot.lane.b32.xlu0 %v1214, 16
      %v1803 = vpop.permute.xlu0 %1802
      %1804 = vrot.lane.b32.xlu0 %v1215, 16
      %v1805 = vpop.permute.xlu0 %1804
      %1806 = vrot.lane.b32.xlu0 %v1216, 16
      %v1807 = vpop.permute.xlu0 %1806
      %1808 = vrot.lane.b32.xlu0 %v1217, 16
      %v1809 = vpop.permute.xlu0 %1808
      %1810 = vrot.lane.b32.xlu0 %v1218, 16
      %v1811 = vpop.permute.xlu0 %1810
      %1812 = vrot.lane.b32.xlu0 %v1219, 16
      %v1813 = vpop.permute.xlu0 %1812
      %1814 = vrot.lane.b32.xlu0 %v1220, 16
      %v1815 = vpop.permute.xlu0 %1814
      %1816 = vrot.lane.b32.xlu0 %v1221, 16
      %v1817 = vpop.permute.xlu0 %1816
      %1818 = vrot.lane.b32.xlu0 %v1222, 16
      %v1819 = vpop.permute.xlu0 %1818
      %1820 = vrot.lane.b32.xlu0 %v1223, 16
      %v1821 = vpop.permute.xlu0 %1820
      %1822 = vrot.lane.b32.xlu0 %v1224, 16
      %v1823 = vpop.permute.xlu0 %1822
      %1824 = vrot.lane.b32.xlu0 %v1225, 16
      %v1825 = vpop.permute.xlu0 %1824
      %1826 = vrot.lane.b32.xlu0 %v1226, 16
      %v1827 = vpop.permute.xlu0 %1826
      %1828 = vrot.lane.b32.xlu0 %v1227, 16
      %v1829 = vpop.permute.xlu0 %1828
      %1830 = vrot.lane.b32.xlu0 %v1228, 16
      %v1831 = vpop.permute.xlu0 %1830
      %1832 = vrot.lane.b32.xlu0 %v1229, 16
      %v1833 = vpop.permute.xlu0 %1832
      %1834 = vrot.lane.b32.xlu0 %v1230, 16
      %v1835 = vpop.permute.xlu0 %1834
      %1836 = vrot.lane.b32.xlu0 %v1231, 16
      %v1837 = vpop.permute.xlu0 %1836
      %1838 = vrot.lane.b32.xlu0 %v1232, 16
      %v1839 = vpop.permute.xlu0 %1838
      %1840 = vrot.lane.b32.xlu0 %v1233, 16
      %v1841 = vpop.permute.xlu0 %1840
      %1842 = vrot.lane.b32.xlu0 %v1234, 16
      %v1843 = vpop.permute.xlu0 %1842
      %1844 = vrot.lane.b32.xlu0 %v1235, 16
      %v1845 = vpop.permute.xlu0 %1844
      %1846 = vrot.lane.b32.xlu0 %v1236, 16
      %v1847 = vpop.permute.xlu0 %1846
      %1848 = vrot.lane.b32.xlu0 %v1237, 16
      %v1849 = vpop.permute.xlu0 %1848
      %1850 = vrot.lane.b32.xlu0 %v1238, 16
      %v1851 = vpop.permute.xlu0 %1850
      %1852 = vrot.lane.b32.xlu0 %v1239, 16
      %v1853 = vpop.permute.xlu0 %1852
      %1918 = vrot.lane.b32.xlu0 %v1272, 20
      %v1919 = vpop.permute.xlu0 %1918
      %1920 = vrot.lane.b32.xlu0 %v1273, 20
      %v1921 = vpop.permute.xlu0 %1920
      %1922 = vrot.lane.b32.xlu0 %v1274, 20
      %v1923 = vpop.permute.xlu0 %1922
      %1924 = vrot.lane.b32.xlu0 %v1275, 20
      %v1925 = vpop.permute.xlu0 %1924
      %1926 = vrot.lane.b32.xlu0 %v1276, 20
      %v1927 = vpop.permute.xlu0 %1926
      %1928 = vrot.lane.b32.xlu0 %v1277, 20
      %v1929 = vpop.permute.xlu0 %1928
      %1930 = vrot.lane.b32.xlu0 %v1278, 20
      %v1931 = vpop.permute.xlu0 %1930
      %1932 = vrot.lane.b32.xlu0 %v1279, 20
      %v1933 = vpop.permute.xlu0 %1932
      %1934 = vrot.lane.b32.xlu0 %v1280, 20
      %v1935 = vpop.permute.xlu0 %1934
      %1936 = vrot.lane.b32.xlu0 %v1281, 20
      %v1937 = vpop.permute.xlu0 %1936
      %1938 = vrot.lane.b32.xlu0 %v1282, 20
      %v1939 = vpop.permute.xlu0 %1938
      %1940 = vrot.lane.b32.xlu0 %v1283, 20
      %v1941 = vpop.permute.xlu0 %1940
      %1942 = vrot.lane.b32.xlu0 %v1284, 20
      %v1943 = vpop.permute.xlu0 %1942
      %1944 = vrot.lane.b32.xlu0 %v1285, 20
      %v1945 = vpop.permute.xlu0 %1944
      %1946 = vrot.lane.b32.xlu0 %v1286, 20
      %v1947 = vpop.permute.xlu0 %1946
      %1948 = vrot.lane.b32.xlu0 %v1287, 20
      %v1949 = vpop.permute.xlu0 %1948
      %1950 = vrot.lane.b32.xlu0 %v1288, 20
      %v1951 = vpop.permute.xlu0 %1950
      %1952 = vrot.lane.b32.xlu0 %v1289, 20
      %v1953 = vpop.permute.xlu0 %1952
      %1954 = vrot.lane.b32.xlu0 %v1290, 20
      %v1955 = vpop.permute.xlu0 %1954
      %1956 = vrot.lane.b32.xlu0 %v1291, 20
      %v1957 = vpop.permute.xlu0 %1956
      %1958 = vrot.lane.b32.xlu0 %v1292, 20
      %v1959 = vpop.permute.xlu0 %1958
      %1960 = vrot.lane.b32.xlu0 %v1293, 20
      %v1961 = vpop.permute.xlu0 %1960
      %1962 = vrot.lane.b32.xlu0 %v1294, 20
      %v1963 = vpop.permute.xlu0 %1962
      %1964 = vrot.lane.b32.xlu0 %v1295, 20
      %v1965 = vpop.permute.xlu0 %1964
      %1966 = vrot.lane.b32.xlu0 %v1296, 20
      %v1967 = vpop.permute.xlu0 %1966
      %1968 = vrot.lane.b32.xlu0 %v1297, 20
      %v1969 = vpop.permute.xlu0 %1968
      %1970 = vrot.lane.b32.xlu0 %v1298, 20
      %v1971 = vpop.permute.xlu0 %1970
      %1972 = vrot.lane.b32.xlu0 %v1299, 20
      %v1973 = vpop.permute.xlu0 %1972
      %1974 = vrot.lane.b32.xlu0 %v1300, 20
      %v1975 = vpop.permute.xlu0 %1974
      %1976 = vrot.lane.b32.xlu0 %v1301, 20
      %v1977 = vpop.permute.xlu0 %1976
      %1978 = vrot.lane.b32.xlu0 %v1302, 20
      %v1979 = vpop.permute.xlu0 %1978
      %1980 = vrot.lane.b32.xlu0 %v1303, 20
      %v1981 = vpop.permute.xlu0 %1980
      %2046 = vrot.lane.b32.xlu0 %v1306, 24
      %v2047 = vpop.permute.xlu0 %2046
      %2048 = vrot.lane.b32.xlu0 %v1307, 24
      %v2049 = vpop.permute.xlu0 %2048
      %2050 = vrot.lane.b32.xlu0 %v1308, 24
      %v2051 = vpop.permute.xlu0 %2050
      %2052 = vrot.lane.b32.xlu0 %v1309, 24
      %v2053 = vpop.permute.xlu0 %2052
      %2054 = vrot.lane.b32.xlu0 %v1310, 24
      %v2055 = vpop.permute.xlu0 %2054
      %2056 = vrot.lane.b32.xlu0 %v1311, 24
      %v2057 = vpop.permute.xlu0 %2056
      %2058 = vrot.lane.b32.xlu0 %v1312, 24
      %v2059 = vpop.permute.xlu0 %2058
      %2060 = vrot.lane.b32.xlu0 %v1313, 24
      %v2061 = vpop.permute.xlu0 %2060
      %2062 = vrot.lane.b32.xlu0 %v1314, 24
      %v2063 = vpop.permute.xlu0 %2062
      %2064 = vrot.lane.b32.xlu0 %v1315, 24
      %v2065 = vpop.permute.xlu0 %2064
      %2066 = vrot.lane.b32.xlu0 %v1316, 24
      %v2067 = vpop.permute.xlu0 %2066
      %2068 = vrot.lane.b32.xlu0 %v1317, 24
      %v2069 = vpop.permute.xlu0 %2068
      %2070 = vrot.lane.b32.xlu0 %v1318, 24
      %v2071 = vpop.permute.xlu0 %2070
      %2072 = vrot.lane.b32.xlu0 %v1319, 24
      %v2073 = vpop.permute.xlu0 %2072
      %2074 = vrot.lane.b32.xlu0 %v1320, 24
      %v2075 = vpop.permute.xlu0 %2074
      %2076 = vrot.lane.b32.xlu0 %v1321, 24
      %v2077 = vpop.permute.xlu0 %2076
      %2078 = vrot.lane.b32.xlu0 %v1322, 24
      %v2079 = vpop.permute.xlu0 %2078
      %2080 = vrot.lane.b32.xlu0 %v1323, 24
      %v2081 = vpop.permute.xlu0 %2080
      %2082 = vrot.lane.b32.xlu0 %v1324, 24
      %v2083 = vpop.permute.xlu0 %2082
      %2084 = vrot.lane.b32.xlu0 %v1325, 24
      %v2085 = vpop.permute.xlu0 %2084
      %2086 = vrot.lane.b32.xlu0 %v1326, 24
      %v2087 = vpop.permute.xlu0 %2086
      %2088 = vrot.lane.b32.xlu0 %v1327, 24
      %v2089 = vpop.permute.xlu0 %2088
      %2090 = vrot.lane.b32.xlu0 %v1328, 24
      %v2091 = vpop.permute.xlu0 %2090
      %2092 = vrot.lane.b32.xlu0 %v1329, 24
      %v2093 = vpop.permute.xlu0 %2092
      %2094 = vrot.lane.b32.xlu0 %v1330, 24
      %v2095 = vpop.permute.xlu0 %2094
      %2096 = vrot.lane.b32.xlu0 %v1331, 24
      %v2097 = vpop.permute.xlu0 %2096
      %2098 = vrot.lane.b32.xlu0 %v1332, 24
      %v2099 = vpop.permute.xlu0 %2098
      %2100 = vrot.lane.b32.xlu0 %v1333, 24
      %v2101 = vpop.permute.xlu0 %2100
      %2102 = vrot.lane.b32.xlu0 %v1334, 24
      %v2103 = vpop.permute.xlu0 %2102
      %2104 = vrot.lane.b32.xlu0 %v1335, 24
      %v2105 = vpop.permute.xlu0 %2104
      %2106 = vrot.lane.b32.xlu0 %v1336, 24
      %v2107 = vpop.permute.xlu0 %2106
      %2108 = vrot.lane.b32.xlu0 %v1337, 24
      %v2109 = vpop.permute.xlu0 %2108
      %2144 = vrot.lane.b32.xlu0 %v1210, 28
      %v2145 = vpop.permute.xlu0 %2144
      %2146 = vrot.lane.b32.xlu0 %v1211, 28
      %v2147 = vpop.permute.xlu0 %2146
      %2148 = vrot.lane.b32.xlu0 %v1212, 28
      %v2149 = vpop.permute.xlu0 %2148
      %2150 = vrot.lane.b32.xlu0 %v1213, 28
      %v2151 = vpop.permute.xlu0 %2150
      %2152 = vrot.lane.b32.xlu0 %v1214, 28
      %v2153 = vpop.permute.xlu0 %2152
      %2154 = vrot.lane.b32.xlu0 %v1215, 28
      %v2155 = vpop.permute.xlu0 %2154
      %2156 = vrot.lane.b32.xlu0 %v1216, 28
      %v2157 = vpop.permute.xlu0 %2156
      %2158 = vrot.lane.b32.xlu0 %v1217, 28
      %v2159 = vpop.permute.xlu0 %2158
      %2160 = vrot.lane.b32.xlu0 %v1218, 28
      %v2161 = vpop.permute.xlu0 %2160
      %2162 = vrot.lane.b32.xlu0 %v1219, 28
      %v2163 = vpop.permute.xlu0 %2162
      %2164 = vrot.lane.b32.xlu0 %v1220, 28
      %v2165 = vpop.permute.xlu0 %2164
      %2166 = vrot.lane.b32.xlu0 %v1221, 28
      %v2167 = vpop.permute.xlu0 %2166
      %2168 = vrot.lane.b32.xlu0 %v1222, 28
      %v2169 = vpop.permute.xlu0 %2168
      %2170 = vrot.lane.b32.xlu0 %v1223, 28
      %v2171 = vpop.permute.xlu0 %2170
      %2172 = vrot.lane.b32.xlu0 %v1224, 28
      %v2173 = vpop.permute.xlu0 %2172
      %2174 = vrot.lane.b32.xlu0 %v1225, 28
      %v2175 = vpop.permute.xlu0 %2174
      %2176 = vrot.lane.b32.xlu0 %v1226, 28
      %v2177 = vpop.permute.xlu0 %2176
      %2178 = vrot.lane.b32.xlu0 %v1227, 28
      %v2179 = vpop.permute.xlu0 %2178
      %2180 = vrot.lane.b32.xlu0 %v1228, 28
      %v2181 = vpop.permute.xlu0 %2180
      %2182 = vrot.lane.b32.xlu0 %v1229, 28
      %v2183 = vpop.permute.xlu0 %2182
      %2184 = vrot.lane.b32.xlu0 %v1230, 28
      %v2185 = vpop.permute.xlu0 %2184
      %2186 = vrot.lane.b32.xlu0 %v1231, 28
      %v2187 = vpop.permute.xlu0 %2186
      %2188 = vrot.lane.b32.xlu0 %v1232, 28
      %v2189 = vpop.permute.xlu0 %2188
      %2190 = vrot.lane.b32.xlu0 %v1233, 28
      %v2191 = vpop.permute.xlu0 %2190
      %2192 = vrot.lane.b32.xlu0 %v1234, 28
      %v2193 = vpop.permute.xlu0 %2192
      %2194 = vrot.lane.b32.xlu0 %v1235, 28
      %v2195 = vpop.permute.xlu0 %2194
      %2196 = vrot.lane.b32.xlu0 %v1236, 28
      %v2197 = vpop.permute.xlu0 %2196
      %2198 = vrot.lane.b32.xlu0 %v1237, 28
      %v2199 = vpop.permute.xlu0 %2198
      %2200 = vrot.lane.b32.xlu0 %v1238, 28
      %v2201 = vpop.permute.xlu0 %2200
      %2202 = vrot.lane.b32.xlu0 %v1239, 28
      %v2203 = vpop.permute.xlu0 %2202
      %2204 = vrot.lane.b32.xlu0 %v1338, 28
      %v2205 = vpop.permute.xlu0 %2204
      %2206 = vrot.lane.b32.xlu0 %v1339, 28
      %v2207 = vpop.permute.xlu0 %2206
      %2272 = vrot.lane.b32.xlu0 %v1342, 32
      %v2273 = vpop.permute.xlu0 %2272
      %2274 = vrot.lane.b32.xlu0 %v1343, 32
      %v2275 = vpop.permute.xlu0 %2274
      %2276 = vrot.lane.b32.xlu0 %v1344, 32
      %v2277 = vpop.permute.xlu0 %2276
      %2278 = vrot.lane.b32.xlu0 %v1345, 32
      %v2279 = vpop.permute.xlu0 %2278
      %2280 = vrot.lane.b32.xlu0 %v1346, 32
      %v2281 = vpop.permute.xlu0 %2280
      %2282 = vrot.lane.b32.xlu0 %v1347, 32
      %v2283 = vpop.permute.xlu0 %2282
      %2284 = vrot.lane.b32.xlu0 %v1348, 32
      %v2285 = vpop.permute.xlu0 %2284
      %2286 = vrot.lane.b32.xlu0 %v1349, 32
      %v2287 = vpop.permute.xlu0 %2286
      %2288 = vrot.lane.b32.xlu0 %v1350, 32
      %v2289 = vpop.permute.xlu0 %2288
      %2290 = vrot.lane.b32.xlu0 %v1351, 32
      %v2291 = vpop.permute.xlu0 %2290
      %2292 = vrot.lane.b32.xlu0 %v1352, 32
      %v2293 = vpop.permute.xlu0 %2292
      %2294 = vrot.lane.b32.xlu0 %v1353, 32
      %v2295 = vpop.permute.xlu0 %2294
      %2296 = vrot.lane.b32.xlu0 %v1354, 32
      %v2297 = vpop.permute.xlu0 %2296
      %2298 = vrot.lane.b32.xlu0 %v1355, 32
      %v2299 = vpop.permute.xlu0 %2298
      %2300 = vrot.lane.b32.xlu0 %v1356, 32
      %v2301 = vpop.permute.xlu0 %2300
      %2302 = vrot.lane.b32.xlu0 %v1357, 32
      %v2303 = vpop.permute.xlu0 %2302
      %2304 = vrot.lane.b32.xlu0 %v1358, 32
      %v2305 = vpop.permute.xlu0 %2304
      %2306 = vrot.lane.b32.xlu0 %v1359, 32
      %v2307 = vpop.permute.xlu0 %2306
      %2308 = vrot.lane.b32.xlu0 %v1360, 32
      %v2309 = vpop.permute.xlu0 %2308
      %2310 = vrot.lane.b32.xlu0 %v1361, 32
      %v2311 = vpop.permute.xlu0 %2310
      %2312 = vrot.lane.b32.xlu0 %v1362, 32
      %v2313 = vpop.permute.xlu0 %2312
      %2314 = vrot.lane.b32.xlu0 %v1363, 32
      %v2315 = vpop.permute.xlu0 %2314
      %2316 = vrot.lane.b32.xlu0 %v1364, 32
      %v2317 = vpop.permute.xlu0 %2316
      %2318 = vrot.lane.b32.xlu0 %v1365, 32
      %v2319 = vpop.permute.xlu0 %2318
      %2320 = vrot.lane.b32.xlu0 %v1366, 32
      %v2321 = vpop.permute.xlu0 %2320
      %2322 = vrot.lane.b32.xlu0 %v1367, 32
      %v2323 = vpop.permute.xlu0 %2322
      %2324 = vrot.lane.b32.xlu0 %v1368, 32
      %v2325 = vpop.permute.xlu0 %2324
      %2326 = vrot.lane.b32.xlu0 %v1369, 32
      %v2327 = vpop.permute.xlu0 %2326
      %2328 = vrot.lane.b32.xlu0 %v1370, 32
      %v2329 = vpop.permute.xlu0 %2328
      %2330 = vrot.lane.b32.xlu0 %v1371, 32
      %v2331 = vpop.permute.xlu0 %2330
      %2332 = vrot.lane.b32.xlu0 %v1372, 32
      %v2333 = vpop.permute.xlu0 %2332
      %2334 = vrot.lane.b32.xlu0 %v1373, 32
      %v2335 = vpop.permute.xlu0 %2334
      %v2368 = vsel %vm624, %v888, %v1407
      %v2369 = vsel %vm624, %v889, %v1409
      %v2370 = vsel %vm624, %v890, %v1411
      %v2371 = vsel %vm624, %v891, %v1413
      %v2372 = vsel %vm624, %v892, %v1415
      %v2373 = vsel %vm624, %v893, %v1417
      %v2374 = vsel %vm624, %v894, %v1419
      %v2375 = vsel %vm624, %v895, %v1421
      %v2376 = vsel %vm624, %v896, %v1423
      %v2377 = vsel %vm624, %v897, %v1425
      %v2378 = vsel %vm624, %v898, %v1427
      %v2379 = vsel %vm624, %v899, %v1429
      %v2380 = vsel %vm624, %v900, %v1431
      %v2381 = vsel %vm624, %v901, %v1433
      %v2382 = vsel %vm624, %v902, %v1435
      %v2383 = vsel %vm624, %v903, %v1437
      %v2384 = vsel %vm624, %v904, %v1439
      %v2385 = vsel %vm624, %v905, %v1441
      %v2386 = vsel %vm624, %v906, %v1443
      %v2387 = vsel %vm624, %v907, %v1445
      %v2388 = vsel %vm624, %v908, %v1447
      %v2389 = vsel %vm624, %v909, %v1449
      %v2390 = vsel %vm624, %v910, %v1451
      %v2391 = vsel %vm624, %v911, %v1453
      %v2392 = vsel %vm624, %v912, %v1455
      %v2393 = vsel %vm624, %v913, %v1457
      %v2394 = vsel %vm624, %v914, %v1459
      %v2395 = vsel %vm624, %v915, %v1461
      %v2396 = vsel %vm624, %v916, %v1463
      %v2397 = vsel %vm624, %v917, %v1465
      %v2398 = vsel %vm624, %v918, %v1467
      %v2399 = vsel %vm624, %v919, %v1469
      %vm2400 = vcmask 64512
      %v2401 = vsel %vm2400, %v2368, %v1535
      %v2402 = vsel %vm2400, %v2369, %v1537
      %v2403 = vsel %vm2400, %v2370, %v1539
      %v2404 = vsel %vm2400, %v2371, %v1541
      %v2405 = vsel %vm2400, %v2372, %v1543
      %v2406 = vsel %vm2400, %v2373, %v1545
      %v2407 = vsel %vm2400, %v2374, %v1547
      %v2408 = vsel %vm2400, %v2375, %v1549
      %v2409 = vsel %vm2400, %v2376, %v1551
      %v2410 = vsel %vm2400, %v2377, %v1553
      %v2411 = vsel %vm2400, %v2378, %v1555
      %v2412 = vsel %vm2400, %v2379, %v1557
      %v2413 = vsel %vm2400, %v2380, %v1559
      %v2414 = vsel %vm2400, %v2381, %v1561
      %v2415 = vsel %vm2400, %v2382, %v1563
      %v2416 = vsel %vm2400, %v2383, %v1565
      %v2417 = vsel %vm2400, %v2384, %v1567
      %v2418 = vsel %vm2400, %v2385, %v1569
      %v2419 = vsel %vm2400, %v2386, %v1571
      %v2420 = vsel %vm2400, %v2387, %v1573
      %v2421 = vsel %vm2400, %v2388, %v1575
      %v2422 = vsel %vm2400, %v2389, %v1577
      %v2423 = vsel %vm2400, %v2390, %v1579
      %v2424 = vsel %vm2400, %v2391, %v1581
      %v2425 = vsel %vm2400, %v2392, %v1583
      %v2426 = vsel %vm2400, %v2393, %v1585
      %v2427 = vsel %vm2400, %v2394, %v1587
      %v2428 = vsel %vm2400, %v2395, %v1589
      %v2429 = vsel %vm2400, %v2396, %v1591
      %v2430 = vsel %vm2400, %v2397, %v1593
      %v2431 = vsel %vm2400, %v2398, %v1595
      %v2432 = vsel %vm2400, %v2399, %v1597
      %vm2433 = vcmask 97280
      %v2434 = vsel %vm2433, %v2401, %v1663
      %v2435 = vsel %vm2433, %v2402, %v1665
      %v2436 = vsel %vm2433, %v2403, %v1667
      %v2437 = vsel %vm2433, %v2404, %v1669
      %v2438 = vsel %vm2433, %v2405, %v1671
      %v2439 = vsel %vm2433, %v2406, %v1673
      %v2440 = vsel %vm2433, %v2407, %v1675
      %v2441 = vsel %vm2433, %v2408, %v1677
      %v2442 = vsel %vm2433, %v2409, %v1679
      %v2443 = vsel %vm2433, %v2410, %v1681
      %v2444 = vsel %vm2433, %v2411, %v1683
      %v2445 = vsel %vm2433, %v2412, %v1685
      %v2446 = vsel %vm2433, %v2413, %v1687
      %v2447 = vsel %vm2433, %v2414, %v1689
      %v2448 = vsel %vm2433, %v2415, %v1691
      %v2449 = vsel %vm2433, %v2416, %v1693
      %v2450 = vsel %vm2433, %v2417, %v1695
      %v2451 = vsel %vm2433, %v2418, %v1697
      %v2452 = vsel %vm2433, %v2419, %v1699
      %v2453 = vsel %vm2433, %v2420, %v1701
      %v2454 = vsel %vm2433, %v2421, %v1703
      %v2455 = vsel %vm2433, %v2422, %v1705
      %v2456 = vsel %vm2433, %v2423, %v1707
      %v2457 = vsel %vm2433, %v2424, %v1709
      %v2458 = vsel %vm2433, %v2425, %v1711
      %v2459 = vsel %vm2433, %v2426, %v1713
      %v2460 = vsel %vm2433, %v2427, %v1715
      %v2461 = vsel %vm2433, %v2428, %v1717
      %v2462 = vsel %vm2433, %v2429, %v1719
      %v2463 = vsel %vm2433, %v2430, %v1721
      %v2464 = vsel %vm2433, %v2431, %v1723
      %v2465 = vsel %vm2433, %v2432, %v1725
      %vm2466 = vcmask 130048
      %v2467 = vsel %vm2466, %v2434, %v1791
      %v2468 = vsel %vm2466, %v2435, %v1793
      %v2469 = vsel %vm2466, %v2436, %v1795
      %v2470 = vsel %vm2466, %v2437, %v1797
      %v2471 = vsel %vm2466, %v2438, %v1799
      %v2472 = vsel %vm2466, %v2439, %v1801
      %v2473 = vsel %vm2466, %v2440, %v1803
      %v2474 = vsel %vm2466, %v2441, %v1805
      %v2475 = vsel %vm2466, %v2442, %v1807
      %v2476 = vsel %vm2466, %v2443, %v1809
      %v2477 = vsel %vm2466, %v2444, %v1811
      %v2478 = vsel %vm2466, %v2445, %v1813
      %v2479 = vsel %vm2466, %v2446, %v1815
      %v2480 = vsel %vm2466, %v2447, %v1817
      %v2481 = vsel %vm2466, %v2448, %v1819
      %v2482 = vsel %vm2466, %v2449, %v1821
      %v2483 = vsel %vm2466, %v2450, %v1823
      %v2484 = vsel %vm2466, %v2451, %v1825
      %v2485 = vsel %vm2466, %v2452, %v1827
      %v2486 = vsel %vm2466, %v2453, %v1829
      %v2487 = vsel %vm2466, %v2454, %v1831
      %v2488 = vsel %vm2466, %v2455, %v1833
      %v2489 = vsel %vm2466, %v2456, %v1835
      %v2490 = vsel %vm2466, %v2457, %v1837
      %v2491 = vsel %vm2466, %v2458, %v1839
      %v2492 = vsel %vm2466, %v2459, %v1841
      %v2493 = vsel %vm2466, %v2460, %v1843
      %v2494 = vsel %vm2466, %v2461, %v1845
      %v2495 = vsel %vm2466, %v2462, %v1847
      %v2496 = vsel %vm2466, %v2463, %v1849
      %v2497 = vsel %vm2466, %v2464, %v1851
      %v2498 = vsel %vm2466, %v2465, %v1853
      %vm2499 = vcmask 162816
      %v2500 = vsel %vm2499, %v2467, %v1919
      %v2501 = vsel %vm2499, %v2468, %v1921
      %v2502 = vsel %vm2499, %v2469, %v1923
      %v2503 = vsel %vm2499, %v2470, %v1925
      %v2504 = vsel %vm2499, %v2471, %v1927
      %v2505 = vsel %vm2499, %v2472, %v1929
      %v2506 = vsel %vm2499, %v2473, %v1931
      %v2507 = vsel %vm2499, %v2474, %v1933
      %v2508 = vsel %vm2499, %v2475, %v1935
      %v2509 = vsel %vm2499, %v2476, %v1937
      %v2510 = vsel %vm2499, %v2477, %v1939
      %v2511 = vsel %vm2499, %v2478, %v1941
      %v2512 = vsel %vm2499, %v2479, %v1943
      %v2513 = vsel %vm2499, %v2480, %v1945
      %v2514 = vsel %vm2499, %v2481, %v1947
      %v2515 = vsel %vm2499, %v2482, %v1949
      %v2516 = vsel %vm2499, %v2483, %v1951
      %v2517 = vsel %vm2499, %v2484, %v1953
      %v2518 = vsel %vm2499, %v2485, %v1955
      %v2519 = vsel %vm2499, %v2486, %v1957
      %v2520 = vsel %vm2499, %v2487, %v1959
      %v2521 = vsel %vm2499, %v2488, %v1961
      %v2522 = vsel %vm2499, %v2489, %v1963
      %v2523 = vsel %vm2499, %v2490, %v1965
      %v2524 = vsel %vm2499, %v2491, %v1967
      %v2525 = vsel %vm2499, %v2492, %v1969
      %v2526 = vsel %vm2499, %v2493, %v1971
      %v2527 = vsel %vm2499, %v2494, %v1973
      %v2528 = vsel %vm2499, %v2495, %v1975
      %v2529 = vsel %vm2499, %v2496, %v1977
      %v2530 = vsel %vm2499, %v2497, %v1979
      %v2531 = vsel %vm2499, %v2498, %v1981
      %vm2532 = vcmask 195584
      %v2533 = vsel %vm2532, %v2500, %v2047
      %v2534 = vsel %vm2532, %v2501, %v2049
      %v2535 = vsel %vm2532, %v2502, %v2051
      %v2536 = vsel %vm2532, %v2503, %v2053
      %v2537 = vsel %vm2532, %v2504, %v2055
      %v2538 = vsel %vm2532, %v2505, %v2057
      %v2539 = vsel %vm2532, %v2506, %v2059
      %v2540 = vsel %vm2532, %v2507, %v2061
      %v2541 = vsel %vm2532, %v2508, %v2063
      %v2542 = vsel %vm2532, %v2509, %v2065
      %v2543 = vsel %vm2532, %v2510, %v2067
      %v2544 = vsel %vm2532, %v2511, %v2069
      %v2545 = vsel %vm2532, %v2512, %v2071
      %v2546 = vsel %vm2532, %v2513, %v2073
      %v2547 = vsel %vm2532, %v2514, %v2075
      %v2548 = vsel %vm2532, %v2515, %v2077
      %v2549 = vsel %vm2532, %v2516, %v2079
      %v2550 = vsel %vm2532, %v2517, %v2081
      %v2551 = vsel %vm2532, %v2518, %v2083
      %v2552 = vsel %vm2532, %v2519, %v2085
      %v2553 = vsel %vm2532, %v2520, %v2087
      %v2554 = vsel %vm2532, %v2521, %v2089
      %v2555 = vsel %vm2532, %v2522, %v2091
      %v2556 = vsel %vm2532, %v2523, %v2093
      %v2557 = vsel %vm2532, %v2524, %v2095
      %v2558 = vsel %vm2532, %v2525, %v2097
      %v2559 = vsel %vm2532, %v2526, %v2099
      %v2560 = vsel %vm2532, %v2527, %v2101
      %v2561 = vsel %vm2532, %v2528, %v2103
      %v2562 = vsel %vm2532, %v2529, %v2105
      %v2563 = vsel %vm2532, %v2530, %v2107
      %v2564 = vsel %vm2532, %v2531, %v2109
      %vm2565 = vcmask 228352
      %v2566 = vsel %vm2565, %v2533, %v2145
      %v2567 = vsel %vm2565, %v2534, %v2147
      %v2568 = vsel %vm2565, %v2535, %v2149
      %v2569 = vsel %vm2565, %v2536, %v2151
      %v2570 = vsel %vm2565, %v2537, %v2153
      %v2571 = vsel %vm2565, %v2538, %v2155
      %v2572 = vsel %vm2565, %v2539, %v2157
      %v2573 = vsel %vm2565, %v2540, %v2159
      %v2574 = vsel %vm2565, %v2541, %v2161
      %v2575 = vsel %vm2565, %v2542, %v2163
      %v2576 = vsel %vm2565, %v2543, %v2165
      %v2577 = vsel %vm2565, %v2544, %v2167
      %v2578 = vsel %vm2565, %v2545, %v2169
      %v2579 = vsel %vm2565, %v2546, %v2171
      %v2580 = vsel %vm2565, %v2547, %v2173
      %v2581 = vsel %vm2565, %v2548, %v2175
      %v2582 = vsel %vm2565, %v2549, %v2177
      %v2583 = vsel %vm2565, %v2550, %v2179
      %v2584 = vsel %vm2565, %v2551, %v2181
      %v2585 = vsel %vm2565, %v2552, %v2183
      %v2586 = vsel %vm2565, %v2553, %v2185
      %v2587 = vsel %vm2565, %v2554, %v2187
      %v2588 = vsel %vm2565, %v2555, %v2189
      %v2589 = vsel %vm2565, %v2556, %v2191
      %v2590 = vsel %vm2565, %v2557, %v2193
      %v2591 = vsel %vm2565, %v2558, %v2195
      %v2592 = vsel %vm2565, %v2559, %v2197
      %v2593 = vsel %vm2565, %v2560, %v2199
      %v2594 = vsel %vm2565, %v2561, %v2201
      %v2595 = vsel %vm2565, %v2562, %v2203
      %v2596 = vsel %vm2565, %v2563, %v2205
      %v2597 = vsel %vm2565, %v2564, %v2207
      %vm2598 = vcmask 261120
      %v2599 = vsel %vm2598, %v2566, %v2273
      %v2600 = vsel %vm2598, %v2567, %v2275
      %v2601 = vsel %vm2598, %v2568, %v2277
      %v2602 = vsel %vm2598, %v2569, %v2279
      %v2603 = vsel %vm2598, %v2570, %v2281
      %v2604 = vsel %vm2598, %v2571, %v2283
      %v2605 = vsel %vm2598, %v2572, %v2285
      %v2606 = vsel %vm2598, %v2573, %v2287
      %v2607 = vsel %vm2598, %v2574, %v2289
      %v2608 = vsel %vm2598, %v2575, %v2291
      %v2609 = vsel %vm2598, %v2576, %v2293
      %v2610 = vsel %vm2598, %v2577, %v2295
      %v2611 = vsel %vm2598, %v2578, %v2297
      %v2612 = vsel %vm2598, %v2579, %v2299
      %v2613 = vsel %vm2598, %v2580, %v2301
      %v2614 = vsel %vm2598, %v2581, %v2303
      %v2615 = vsel %vm2598, %v2582, %v2305
      %v2616 = vsel %vm2598, %v2583, %v2307
      %v2617 = vsel %vm2598, %v2584, %v2309
      %v2618 = vsel %vm2598, %v2585, %v2311
      %v2619 = vsel %vm2598, %v2586, %v2313
      %v2620 = vsel %vm2598, %v2587, %v2315
      %v2621 = vsel %vm2598, %v2588, %v2317
      %v2622 = vsel %vm2598, %v2589, %v2319
      %v2623 = vsel %vm2598, %v2590, %v2321
      %v2624 = vsel %vm2598, %v2591, %v2323
      %v2625 = vsel %vm2598, %v2592, %v2325
      %v2626 = vsel %vm2598, %v2593, %v2327
      %v2627 = vsel %vm2598, %v2594, %v2329
      %v2628 = vsel %vm2598, %v2595, %v2331
      %v2629 = vsel %vm2598, %v2596, %v2333
      %v2630 = vsel %vm2598, %v2597, %v2335
      %v2631 = vld [vmem:[%s6] sm:$0xff]
      %v2632 = vld [vmem:[%s6 + $0x8] sm:$0xff]
      %v2633 = vld [vmem:[%s6 + $0x10] sm:$0xff]
      %v2634 = vld [vmem:[%s6 + $0x18] sm:$0xff]
      %v2635 = vld [vmem:[%s6 + $0x20] sm:$0xf]
      %vm2636 = vcmask 293888
      %v2638 = vsel %vm2636, %v2599, 0
      %v2641 = vsel %vm2636, %v2600, 0
      %v2644 = vsel %vm2636, %v2601, 0
      %v2647 = vsel %vm2636, %v2602, 0
      %v2650 = vsel %vm2636, %v2603, 0
      %v2653 = vsel %vm2636, %v2604, 0
      %v2656 = vsel %vm2636, %v2605, 0
      %v2659 = vsel %vm2636, %v2606, 0
      %v2662 = vsel %vm2636, %v2607, 0
      %v2665 = vsel %vm2636, %v2608, 0
      %v2668 = vsel %vm2636, %v2609, 0
      %v2671 = vsel %vm2636, %v2610, 0
      %v2674 = vsel %vm2636, %v2611, 0
      %v2677 = vsel %vm2636, %v2612, 0
      %v2680 = vsel %vm2636, %v2613, 0
      %v2683 = vsel %vm2636, %v2614, 0
      %v2686 = vsel %vm2636, %v2615, 0
      %v2689 = vsel %vm2636, %v2616, 0
      %v2692 = vsel %vm2636, %v2617, 0
      %v2695 = vsel %vm2636, %v2618, 0
      %v2698 = vsel %vm2636, %v2619, 0
      %v2701 = vsel %vm2636, %v2620, 0
      %v2704 = vsel %vm2636, %v2621, 0
      %v2707 = vsel %vm2636, %v2622, 0
      %v2710 = vsel %vm2636, %v2623, 0
      %v2713 = vsel %vm2636, %v2624, 0
      %v2716 = vsel %vm2636, %v2625, 0
      %v2719 = vsel %vm2636, %v2626, 0
      %v2722 = vsel %vm2636, %v2627, 0
      %v2725 = vsel %vm2636, %v2628, 0
      %v2728 = vsel %vm2636, %v2629, 0
      %v2731 = vsel %vm2636, %v2630, 0
      %vm2733 = vcmask 1043456
      %v2735 = vsel %vm2733, %v2635, 0
      %2737 = vmatpush.msra.mxu0 0.0
      %2738 = vmatpush.msra.mxu0 0.0
      %2739 = vmatpush.msra.mxu0 0.0
      %2740 = vmatpush.msra.mxu0 0.0
      %2741 = vmatpush.msra.mxu0 0.0
      %2742 = vmatpush.msra.mxu0 0.0
      %2743 = vmatpush.msra.mxu0 0.0
      %2744 = vmatpush.msra.mxu0 0.0
      %2745 = vmatpush.msra.mxu0 0.0
      %2746 = vmatpush.msra.mxu0 0.0
      %2747 = vmatpush.msra.mxu0 0.0
      %2748 = vmatpush.msra.mxu0 %v2735
      %2749 = vmatpush.msra.mxu0 %v2634
      %2750 = vmatpush.msra.mxu0 %v2633
      %2751 = vmatpush.msra.mxu0 %v2632
      %2752 = vmatpush.msra.mxu0 %v2631
      %2753 = vmatmul.f32.gmra.mxu0 %v2638
      %v2754 = vpop.f32.mrf.mxu0
      %v2755 = vadd.f32 0.0, %v2754
      %2756 = vmatmul.f32.gmra.mxu0 %v2641
      %v2757 = vpop.f32.mrf.mxu0
      %v2758 = vadd.f32 0.0, %v2757
      %2759 = vmatmul.f32.gmra.mxu0 %v2644
      %v2760 = vpop.f32.mrf.mxu0
      %v2761 = vadd.f32 0.0, %v2760
      %2762 = vmatmul.f32.gmra.mxu0 %v2647
      %v2763 = vpop.f32.mrf.mxu0
      %v2764 = vadd.f32 0.0, %v2763
      %2765 = vmatmul.f32.gmra.mxu0 %v2650
      %v2766 = vpop.f32.mrf.mxu0
      %v2767 = vadd.f32 0.0, %v2766
      %2768 = vmatmul.f32.gmra.mxu0 %v2653
      %v2769 = vpop.f32.mrf.mxu0
      %v2770 = vadd.f32 0.0, %v2769
      %2771 = vmatmul.f32.gmra.mxu0 %v2656
      %v2772 = vpop.f32.mrf.mxu0
      %v2773 = vadd.f32 0.0, %v2772
      %2774 = vmatmul.f32.gmra.mxu0 %v2659
      %v2775 = vpop.f32.mrf.mxu0
      %v2776 = vadd.f32 0.0, %v2775
      %2777 = vmatmul.f32.gmra.mxu0 %v2662
      %v2778 = vpop.f32.mrf.mxu0
      %v2779 = vadd.f32 0.0, %v2778
      %2780 = vmatmul.f32.gmra.mxu0 %v2665
      %v2781 = vpop.f32.mrf.mxu0
      %v2782 = vadd.f32 0.0, %v2781
      %2783 = vmatmul.f32.gmra.mxu0 %v2668
      %v2784 = vpop.f32.mrf.mxu0
      %v2785 = vadd.f32 0.0, %v2784
      %2786 = vmatmul.f32.gmra.mxu0 %v2671
      %v2787 = vpop.f32.mrf.mxu0
      %v2788 = vadd.f32 0.0, %v2787
      %2789 = vmatmul.f32.gmra.mxu0 %v2674
      %v2790 = vpop.f32.mrf.mxu0
      %v2791 = vadd.f32 0.0, %v2790
      %2792 = vmatmul.f32.gmra.mxu0 %v2677
      %v2793 = vpop.f32.mrf.mxu0
      %v2794 = vadd.f32 0.0, %v2793
      %2795 = vmatmul.f32.gmra.mxu0 %v2680
      %v2796 = vpop.f32.mrf.mxu0
      %v2797 = vadd.f32 0.0, %v2796
      %2798 = vmatmul.f32.gmra.mxu0 %v2683
      %v2799 = vpop.f32.mrf.mxu0
      %v2800 = vadd.f32 0.0, %v2799
      %2801 = vmatmul.f32.gmra.mxu0 %v2686
      %v2802 = vpop.f32.mrf.mxu0
      %v2803 = vadd.f32 0.0, %v2802
      %2804 = vmatmul.f32.gmra.mxu0 %v2689
      %v2805 = vpop.f32.mrf.mxu0
      %v2806 = vadd.f32 0.0, %v2805
      %2807 = vmatmul.f32.gmra.mxu0 %v2692
      %v2808 = vpop.f32.mrf.mxu0
      %v2809 = vadd.f32 0.0, %v2808
      %2810 = vmatmul.f32.gmra.mxu0 %v2695
      %v2811 = vpop.f32.mrf.mxu0
      %v2812 = vadd.f32 0.0, %v2811
      %2813 = vmatmul.f32.gmra.mxu0 %v2698
      %v2814 = vpop.f32.mrf.mxu0
      %v2815 = vadd.f32 0.0, %v2814
      %2816 = vmatmul.f32.gmra.mxu0 %v2701
      %v2817 = vpop.f32.mrf.mxu0
      %v2818 = vadd.f32 0.0, %v2817
      %2819 = vmatmul.f32.gmra.mxu0 %v2704
      %v2820 = vpop.f32.mrf.mxu0
      %v2821 = vadd.f32 0.0, %v2820
      %2822 = vmatmul.f32.gmra.mxu0 %v2707
      %v2823 = vpop.f32.mrf.mxu0
      %v2824 = vadd.f32 0.0, %v2823
      %2825 = vmatmul.f32.gmra.mxu0 %v2710
      %v2826 = vpop.f32.mrf.mxu0
      %v2827 = vadd.f32 0.0, %v2826
      %2828 = vmatmul.f32.gmra.mxu0 %v2713
      %v2829 = vpop.f32.mrf.mxu0
      %v2830 = vadd.f32 0.0, %v2829
      %2831 = vmatmul.f32.gmra.mxu0 %v2716
      %v2832 = vpop.f32.mrf.mxu0
      %v2833 = vadd.f32 0.0, %v2832
      %2834 = vmatmul.f32.gmra.mxu0 %v2719
      %v2835 = vpop.f32.mrf.mxu0
      %v2836 = vadd.f32 0.0, %v2835
      %2837 = vmatmul.f32.gmra.mxu0 %v2722
      %v2838 = vpop.f32.mrf.mxu0
      %v2839 = vadd.f32 0.0, %v2838
      %2840 = vmatmul.f32.gmra.mxu0 %v2725
      %v2841 = vpop.f32.mrf.mxu0
      %v2842 = vadd.f32 0.0, %v2841
      %2843 = vmatmul.f32.gmra.mxu0 %v2728
      %v2844 = vpop.f32.mrf.mxu0
      %v2845 = vadd.f32 0.0, %v2844
      %2846 = vmatmul.f32.gmra.mxu0 %v2731
      %v2847 = vpop.f32.mrf.mxu0
      %v2848 = vadd.f32 0.0, %v2847
      %2849 = vdwg.mxu0
      %2850 = vst.msk [vmem:[#allocation5] sm:$0xff] %vm2400, %v2755
      %2851 = vst.msk [vmem:[#allocation5 + $0x8] sm:$0xff] %vm2400, %v2758
      %2852 = vst.msk [vmem:[#allocation5 + $0x10] sm:$0xff] %vm2400, %v2761
      %2853 = vst.msk [vmem:[#allocation5 + $0x18] sm:$0xff] %vm2400, %v2764
      %2854 = vst.msk [vmem:[#allocation5 + $0x20] sm:$0xff] %vm2400, %v2767
      %2855 = vst.msk [vmem:[#allocation5 + $0x28] sm:$0xff] %vm2400, %v2770
      %2856 = vst.msk [vmem:[#allocation5 + $0x30] sm:$0xff] %vm2400, %v2773
      %2857 = vst.msk [vmem:[#allocation5 + $0x38] sm:$0xff] %vm2400, %v2776
      %2858 = vst.msk [vmem:[#allocation5 + $0x40] sm:$0xff] %vm2400, %v2779
      %2859 = vst.msk [vmem:[#allocation5 + $0x48] sm:$0xff] %vm2400, %v2782
      %2860 = vst.msk [vmem:[#allocation5 + $0x50] sm:$0xff] %vm2400, %v2785
      %2861 = vst.msk [vmem:[#allocation5 + $0x58] sm:$0xff] %vm2400, %v2788
      %2862 = vst.msk [vmem:[#allocation5 + $0x60] sm:$0xff] %vm2400, %v2791
      %2863 = vst.msk [vmem:[#allocation5 + $0x68] sm:$0xff] %vm2400, %v2794
      %2864 = vst.msk [vmem:[#allocation5 + $0x70] sm:$0xff] %vm2400, %v2797
      %2865 = vst.msk [vmem:[#allocation5 + $0x78] sm:$0xff] %vm2400, %v2800
      %2866 = vst.msk [vmem:[#allocation5 + $0x80] sm:$0xff] %vm2400, %v2803
      %2867 = vst.msk [vmem:[#allocation5 + $0x88] sm:$0xff] %vm2400, %v2806
      %2868 = vst.msk [vmem:[#allocation5 + $0x90] sm:$0xff] %vm2400, %v2809
      %2869 = vst.msk [vmem:[#allocation5 + $0x98] sm:$0xff] %vm2400, %v2812
      %2870 = vst.msk [vmem:[#allocation5 + $0xa0] sm:$0xff] %vm2400, %v2815
      %2871 = vst.msk [vmem:[#allocation5 + $0xa8] sm:$0xff] %vm2400, %v2818
      %2872 = vst.msk [vmem:[#allocation5 + $0xb0] sm:$0xff] %vm2400, %v2821
      %2873 = vst.msk [vmem:[#allocation5 + $0xb8] sm:$0xff] %vm2400, %v2824
      %2874 = vst.msk [vmem:[#allocation5 + $0xc0] sm:$0xff] %vm2400, %v2827
      %2875 = vst.msk [vmem:[#allocation5 + $0xc8] sm:$0xff] %vm2400, %v2830
      %2876 = vst.msk [vmem:[#allocation5 + $0xd0] sm:$0xff] %vm2400, %v2833
      %2877 = vst.msk [vmem:[#allocation5 + $0xd8] sm:$0xff] %vm2400, %v2836
      %2878 = vst.msk [vmem:[#allocation5 + $0xe0] sm:$0xff] %vm2400, %v2839
      %2879 = vst.msk [vmem:[#allocation5 + $0xe8] sm:$0xff] %vm2400, %v2842
      %2880 = vst.msk [vmem:[#allocation5 + $0xf0] sm:$0xff] %vm2400, %v2845
      %2881 = vst.msk [vmem:[#allocation5 + $0xf8] sm:$0xff] %vm2400, %v2848
      %v2882 = vld [vmem:[#allocation5] ss:$2 sm:$0xff]
      %s2883 = scalar_lea.vmem [#allocation5], 1
      %v2884 = vld [vmem:[%s2883] ss:$2 sm:$0xff]
      %s2885 = scalar_lea.vmem [#allocation5], 16
      %v2886 = vld [vmem:[%s2885] ss:$2 sm:$0xff]
      %s2887 = scalar_lea.vmem [#allocation5], 17
      %v2888 = vld [vmem:[%s2887] ss:$2 sm:$0xff]
      %v2889 = vmax.f32 %v2882, %v2884
      %v2890 = vmax.f32 %v2886, %v2888
      %v2891 = vmax.f32 %v2889, %v2890
      %s2892 = scalar_lea.vmem [#allocation5], 32
      %v2893 = vld [vmem:[%s2892] ss:$2 sm:$0xff]
      %s2894 = scalar_lea.vmem [#allocation5], 33
      %v2895 = vld [vmem:[%s2894] ss:$2 sm:$0xff]
      %s2896 = scalar_lea.vmem [#allocation5], 48
      %v2897 = vld [vmem:[%s2896] ss:$2 sm:$0xff]
      %s2898 = scalar_lea.vmem [#allocation5], 49
      %v2899 = vld [vmem:[%s2898] ss:$2 sm:$0xff]
      %v2900 = vmax.f32 %v2893, %v2895
      %v2901 = vmax.f32 %v2897, %v2899
      %v2902 = vmax.f32 %v2900, %v2901
      %s2903 = scalar_lea.vmem [#allocation5], 64
      %v2904 = vld [vmem:[%s2903] ss:$2 sm:$0xff]
      %s2905 = scalar_lea.vmem [#allocation5], 65
      %v2906 = vld [vmem:[%s2905] ss:$2 sm:$0xff]
      %s2907 = scalar_lea.vmem [#allocation5], 80
      %v2908 = vld [vmem:[%s2907] ss:$2 sm:$0xff]
      %s2909 = scalar_lea.vmem [#allocation5], 81
      %v2910 = vld [vmem:[%s2909] ss:$2 sm:$0xff]
      %v2911 = vmax.f32 %v2904, %v2906
      %v2912 = vmax.f32 %v2908, %v2910
      %v2913 = vmax.f32 %v2911, %v2912
      %s2914 = scalar_lea.vmem [#allocation5], 96
      %v2915 = vld [vmem:[%s2914] ss:$2 sm:$0xff]
      %s2916 = scalar_lea.vmem [#allocation5], 97
      %v2917 = vld [vmem:[%s2916] ss:$2 sm:$0xff]
      %s2918 = scalar_lea.vmem [#allocation5], 112
      %v2919 = vld [vmem:[%s2918] ss:$2 sm:$0xff]
      %s2920 = scalar_lea.vmem [#allocation5], 113
      %v2921 = vld [vmem:[%s2920] ss:$2 sm:$0xff]
      %v2922 = vmax.f32 %v2915, %v2917
      %v2923 = vmax.f32 %v2919, %v2921
      %v2924 = vmax.f32 %v2922, %v2923
      %s2925 = scalar_lea.vmem [#allocation5], 128
      %v2926 = vld [vmem:[%s2925] ss:$2 sm:$0xff]
      %s2927 = scalar_lea.vmem [#allocation5], 129
      %v2928 = vld [vmem:[%s2927] ss:$2 sm:$0xff]
      %s2929 = scalar_lea.vmem [#allocation5], 144
      %v2930 = vld [vmem:[%s2929] ss:$2 sm:$0xff]
      %s2931 = scalar_lea.vmem [#allocation5], 145
      %v2932 = vld [vmem:[%s2931] ss:$2 sm:$0xff]
      %v2933 = vmax.f32 %v2926, %v2928
      %v2934 = vmax.f32 %v2930, %v2932
      %v2935 = vmax.f32 %v2933, %v2934
      %s2936 = scalar_lea.vmem [#allocation5], 160
      %v2937 = vld [vmem:[%s2936] ss:$2 sm:$0xff]
      %s2938 = scalar_lea.vmem [#allocation5], 161
      %v2939 = vld [vmem:[%s2938] ss:$2 sm:$0xff]
      %s2940 = scalar_lea.vmem [#allocation5], 176
      %v2941 = vld [vmem:[%s2940] ss:$2 sm:$0xff]
      %s2942 = scalar_lea.vmem [#allocation5], 177
      %v2943 = vld [vmem:[%s2942] ss:$2 sm:$0xff]
      %v2944 = vmax.f32 %v2937, %v2939
      %v2945 = vmax.f32 %v2941, %v2943
      %v2946 = vmax.f32 %v2944, %v2945
      %s2947 = scalar_lea.vmem [#allocation5], 192
      %v2948 = vld [vmem:[%s2947] ss:$2 sm:$0xff]
      %s2949 = scalar_lea.vmem [#allocation5], 193
      %v2950 = vld [vmem:[%s2949] ss:$2 sm:$0xff]
      %s2951 = scalar_lea.vmem [#allocation5], 208
      %v2952 = vld [vmem:[%s2951] ss:$2 sm:$0xff]
      %s2953 = scalar_lea.vmem [#allocation5], 209
      %v2954 = vld [vmem:[%s2953] ss:$2 sm:$0xff]
      %v2955 = vmax.f32 %v2948, %v2950
      %v2956 = vmax.f32 %v2952, %v2954
      %v2957 = vmax.f32 %v2955, %v2956
      %s2958 = scalar_lea.vmem [#allocation5], 224
      %v2959 = vld [vmem:[%s2958] ss:$2 sm:$0xff]
      %s2960 = scalar_lea.vmem [#allocation5], 225
      %v2961 = vld [vmem:[%s2960] ss:$2 sm:$0xff]
      %s2962 = scalar_lea.vmem [#allocation5], 240
      %v2963 = vld [vmem:[%s2962] ss:$2 sm:$0xff]
      %s2964 = scalar_lea.vmem [#allocation5], 241
      %v2965 = vld [vmem:[%s2964] ss:$2 sm:$0xff]
      %v2966 = vmax.f32 %v2959, %v2961
      %v2967 = vmax.f32 %v2963, %v2965
      %v2968 = vmax.f32 %v2966, %v2967
      %v2969 = vld [vmem:[%s482] sm:$0xff]
      %v2970 = vld [vmem:[%s482 + $0x8] sm:$0xff]
      %v2971 = vld [vmem:[%s482 + $0x10] sm:$0xff]
      %v2972 = vld [vmem:[%s482 + $0x18] sm:$0xff]
      %v2973 = vld [vmem:[%s482 + $0x20] sm:$0xff]
      %v2974 = vld [vmem:[%s482 + $0x28] sm:$0xff]
      %v2975 = vld [vmem:[%s482 + $0x30] sm:$0xff]
      %v2976 = vld [vmem:[%s482 + $0x38] sm:$0xff]
      %v2977 = vld [vmem:[%s7] sm:$0x1]
      %v2979 = vperm.slane %v2977, 0
      %v2981 = vmul.f32 %v2969, %v2979
      %v2982 = vmul.f32 %v2970, %v2979
      %v2983 = vmul.f32 %v2971, %v2979
      %v2984 = vmul.f32 %v2972, %v2979
      %v2985 = vmul.f32 %v2973, %v2979
      %v2986 = vmul.f32 %v2974, %v2979
      %v2987 = vmul.f32 %v2975, %v2979
      %v2988 = vmul.f32 %v2976, %v2979
      %v2989 = vld [vmem:[%s8] sm:$0x1]
      %v2991 = vperm.slane %v2989, 0
      %v2993 = vadd.f32 %v2981, %v2991
      %v2994 = vadd.f32 %v2982, %v2991
      %v2995 = vadd.f32 %v2983, %v2991
      %v2996 = vadd.f32 %v2984, %v2991
      %v2997 = vadd.f32 %v2985, %v2991
      %v2998 = vadd.f32 %v2986, %v2991
      %v2999 = vadd.f32 %v2987, %v2991
      %v3000 = vadd.f32 %v2988, %v2991
      %v3001 = vmax.f32 %v2993, 0.0
      %v3002 = vmax.f32 %v2994, 0.0
      %v3003 = vmax.f32 %v2995, 0.0
      %v3004 = vmax.f32 %v2996, 0.0
      %v3005 = vmax.f32 %v2997, 0.0
      %v3006 = vmax.f32 %v2998, 0.0
      %v3007 = vmax.f32 %v2999, 0.0
      %v3008 = vmax.f32 %v3000, 0.0
      %3009 = vst.msk [vmem:[#allocation3] sm:$0xff] %vm2400, 0.0
      %vm3010 = vcmask 57344
      %3011 = vst.msk [vmem:[#allocation3 + $0x8] sm:$0x1] %vm3010, 0.0
      %3012 = vst.msk [vmem:[#allocation3 + $0x49] sm:$0xff] %vm2400, 0.0
      %3013 = vst.msk [vmem:[#allocation3 + $0x51] sm:$0x1] %vm3010, 0.0
      %3014 = vst.msk [vmem:[#allocation3 + $0x9] sm:$0xff] %vm2400, %v3001
      %3015 = vst.msk [vmem:[#allocation3 + $0x11] sm:$0xff] %vm2400, %v3002
      %3016 = vst.msk [vmem:[#allocation3 + $0x19] sm:$0xff] %vm2400, %v3003
      %3017 = vst.msk [vmem:[#allocation3 + $0x21] sm:$0xff] %vm2400, %v3004
      %3018 = vst.msk [vmem:[#allocation3 + $0x29] sm:$0xff] %vm2400, %v3005
      %3019 = vst.msk [vmem:[#allocation3 + $0x31] sm:$0xff] %vm2400, %v3006
      %3020 = vst.msk [vmem:[#allocation3 + $0x39] sm:$0xff] %vm2400, %v3007
      %3021 = vst.msk [vmem:[#allocation3 + $0x41] sm:$0xff] %vm2400, %v3008
      %v3022 = vld [vmem:[%s3] sm:$0xff]
      %v3023 = vld [vmem:[%s3 + $0x8] sm:$0xff]
      %v3024 = vld [vmem:[%s3 + $0x10] sm:$0xff]
      %v3025 = vld [vmem:[%s3 + $0x18] sm:$0xff]
      %v3026 = vld [vmem:[%s3 + $0x20] sm:$0xff]
      %v3027 = vld [vmem:[%s3 + $0x28] sm:$0xff]
      %v3028 = vld [vmem:[%s3 + $0x30] sm:$0xff]
      %v3029 = vld [vmem:[%s3 + $0x38] sm:$0xff]
      %v3030 = vld [vmem:[#allocation3] sm:$0xff]
      %v3031 = vld [vmem:[#allocation3 + $0x8] sm:$0xff]
      %v3032 = vld [vmem:[#allocation3 + $0x10] sm:$0xff]
      %v3033 = vld [vmem:[#allocation3 + $0x18] sm:$0xff]
      %v3034 = vld [vmem:[#allocation3 + $0x20] sm:$0xff]
      %v3035 = vld [vmem:[#allocation3 + $0x28] sm:$0xff]
      %v3036 = vld [vmem:[#allocation3 + $0x30] sm:$0xff]
      %v3037 = vld [vmem:[#allocation3 + $0x38] sm:$0xff]
      %3039 = vset.pattern.permute.xlu0 0
      %3040 = vperm.xlu0 %3039, %v3022
      %v3041 = vpop.permute.xlu0 %3040
      %3044 = vset.pattern.permute.xlu0 0
      %3045 = vperm.xlu0 %3044, %v3023
      %v3046 = vpop.permute.xlu0 %3045
      %3049 = vset.pattern.permute.xlu0 0
      %3050 = vperm.xlu0 %3049, %v3024
      %v3051 = vpop.permute.xlu0 %3050
      %3054 = vset.pattern.permute.xlu0 0
      %3055 = vperm.xlu0 %3054, %v3025
      %v3056 = vpop.permute.xlu0 %3055
      %3059 = vset.pattern.permute.xlu0 0
      %3060 = vperm.xlu0 %3059, %v3026
      %v3061 = vpop.permute.xlu0 %3060
      %3064 = vset.pattern.permute.xlu0 0
      %3065 = vperm.xlu0 %3064, %v3027
      %v3066 = vpop.permute.xlu0 %3065
      %3069 = vset.pattern.permute.xlu0 0
      %3070 = vperm.xlu0 %3069, %v3028
      %v3071 = vpop.permute.xlu0 %3070
      %3074 = vset.pattern.permute.xlu0 0
      %3075 = vperm.xlu0 %3074, %v3029
      %v3076 = vpop.permute.xlu0 %3075
      %v3078 = vmul.f32 %v3030, %v3041
      %v3079 = vmul.f32 %v3031, %v3046
      %v3080 = vmul.f32 %v3032, %v3051
      %v3081 = vmul.f32 %v3033, %v3056
      %v3082 = vmul.f32 %v3034, %v3061
      %v3083 = vmul.f32 %v3035, %v3066
      %v3084 = vmul.f32 %v3036, %v3071
      %v3085 = vmul.f32 %v3037, %v3076
      %v3086 = vld [vmem:[#allocation3 + $0x1] sm:$0xff]
      %v3087 = vld [vmem:[#allocation3 + $0x9] sm:$0xff]
      %v3088 = vld [vmem:[#allocation3 + $0x11] sm:$0xff]
      %v3089 = vld [vmem:[#allocation3 + $0x19] sm:$0xff]
      %v3090 = vld [vmem:[#allocation3 + $0x21] sm:$0xff]
      %v3091 = vld [vmem:[#allocation3 + $0x29] sm:$0xff]
      %v3092 = vld [vmem:[#allocation3 + $0x31] sm:$0xff]
      %v3093 = vld [vmem:[#allocation3 + $0x39] sm:$0xff]
      %v3094 = vld [vmem:[#allocation3 + $0x2] sm:$0xff]
      %v3095 = vld [vmem:[#allocation3 + $0xa] sm:$0xff]
      %v3096 = vld [vmem:[#allocation3 + $0x12] sm:$0xff]
      %v3097 = vld [vmem:[#allocation3 + $0x1a] sm:$0xff]
      %v3098 = vld [vmem:[#allocation3 + $0x22] sm:$0xff]
      %v3099 = vld [vmem:[#allocation3 + $0x2a] sm:$0xff]
      %v3100 = vld [vmem:[#allocation3 + $0x32] sm:$0xff]
      %v3101 = vld [vmem:[#allocation3 + $0x3a] sm:$0xff]
      %3102 = vset.pattern.permute.xlu0 1
      %3103 = vperm.xlu0 %3102, %v3022
      %v3104 = vpop.permute.xlu0 %3103
      %3106 = vset.pattern.permute.xlu0 1
      %3107 = vperm.xlu0 %3106, %v3023
      %v3108 = vpop.permute.xlu0 %3107
      %3110 = vset.pattern.permute.xlu0 1
      %3111 = vperm.xlu0 %3110, %v3024
      %v3112 = vpop.permute.xlu0 %3111
      %3114 = vset.pattern.permute.xlu0 1
      %3115 = vperm.xlu0 %3114, %v3025
      %v3116 = vpop.permute.xlu0 %3115
      %3118 = vset.pattern.permute.xlu0 1
      %3119 = vperm.xlu0 %3118, %v3026
      %v3120 = vpop.permute.xlu0 %3119
      %3122 = vset.pattern.permute.xlu0 1
      %3123 = vperm.xlu0 %3122, %v3027
      %v3124 = vpop.permute.xlu0 %3123
      %3126 = vset.pattern.permute.xlu0 1
      %3127 = vperm.xlu0 %3126, %v3028
      %v3128 = vpop.permute.xlu0 %3127
      %3130 = vset.pattern.permute.xlu0 1
      %3131 = vperm.xlu0 %3130, %v3029
      %v3132 = vpop.permute.xlu0 %3131
      %v3134 = vmul.f32 %v3094, %v3104
      %v3135 = vmul.f32 %v3095, %v3108
      %v3136 = vmul.f32 %v3096, %v3112
      %v3137 = vmul.f32 %v3097, %v3116
      %v3138 = vmul.f32 %v3098, %v3120
      %v3139 = vmul.f32 %v3099, %v3124
      %v3140 = vmul.f32 %v3100, %v3128
      %v3141 = vmul.f32 %v3101, %v3132
      %v3142 = vld [vmem:[#allocation3 + $0x8] sm:$0xff]
      %v3143 = vld [vmem:[#allocation3 + $0x10] sm:$0xff]
      %v3144 = vld [vmem:[#allocation3 + $0x18] sm:$0xff]
      %v3145 = vld [vmem:[#allocation3 + $0x20] sm:$0xff]
      %v3146 = vld [vmem:[#allocation3 + $0x28] sm:$0xff]
      %v3147 = vld [vmem:[#allocation3 + $0x30] sm:$0xff]
      %v3148 = vld [vmem:[#allocation3 + $0x38] sm:$0xff]
      %v3149 = vld [vmem:[#allocation3 + $0x40] sm:$0xff]
      %v3150 = vmul.f32 %v3142, %v3041
      %v3151 = vmul.f32 %v3143, %v3046
      %v3152 = vmul.f32 %v3144, %v3051
      %v3153 = vmul.f32 %v3145, %v3056
      %v3154 = vmul.f32 %v3146, %v3061
      %v3155 = vmul.f32 %v3147, %v3066
      %v3156 = vmul.f32 %v3148, %v3071
      %v3157 = vmul.f32 %v3149, %v3076
      %v3158 = vld [vmem:[#allocation3 + $0x9] sm:$0xff]
      %v3159 = vld [vmem:[#allocation3 + $0x11] sm:$0xff]
      %v3160 = vld [vmem:[#allocation3 + $0x19] sm:$0xff]
      %v3161 = vld [vmem:[#allocation3 + $0x21] sm:$0xff]
      %v3162 = vld [vmem:[#allocation3 + $0x29] sm:$0xff]
      %v3163 = vld [vmem:[#allocation3 + $0x31] sm:$0xff]
      %v3164 = vld [vmem:[#allocation3 + $0x39] sm:$0xff]
      %v3165 = vld [vmem:[#allocation3 + $0x41] sm:$0xff]
      %v3166 = vld [vmem:[#allocation3 + $0xa] sm:$0xff]
      %v3167 = vld [vmem:[#allocation3 + $0x12] sm:$0xff]
      %v3168 = vld [vmem:[#allocation3 + $0x1a] sm:$0xff]
      %v3169 = vld [vmem:[#allocation3 + $0x22] sm:$0xff]
      %v3170 = vld [vmem:[#allocation3 + $0x2a] sm:$0xff]
      %v3171 = vld [vmem:[#allocation3 + $0x32] sm:$0xff]
      %v3172 = vld [vmem:[#allocation3 + $0x3a] sm:$0xff]
      %v3173 = vld [vmem:[#allocation3 + $0x42] sm:$0xff]
      %v3174 = vmul.f32 %v3166, %v3104
      %v3175 = vmul.f32 %v3167, %v3108
      %v3176 = vmul.f32 %v3168, %v3112
      %v3177 = vmul.f32 %v3169, %v3116
      %v3178 = vmul.f32 %v3170, %v3120
      %v3179 = vmul.f32 %v3171, %v3124
      %v3180 = vmul.f32 %v3172, %v3128
      %v3181 = vmul.f32 %v3173, %v3132
      %v3182 = vld [vmem:[#allocation3 + $0x48] sm:$0xff]
      %v3183 = vmul.f32 %v3143, %v3041
      %v3184 = vmul.f32 %v3144, %v3046
      %v3185 = vmul.f32 %v3145, %v3051
      %v3186 = vmul.f32 %v3146, %v3056
      %v3187 = vmul.f32 %v3147, %v3061
      %v3188 = vmul.f32 %v3148, %v3066
      %v3189 = vmul.f32 %v3149, %v3071
      %v3190 = vmul.f32 %v3182, %v3076
      %v3191 = vld [vmem:[#allocation3 + $0x49] sm:$0xff]
      %v3192 = vld [vmem:[#allocation3 + $0x4a] sm:$0xff]
      %v3193 = vmul.f32 %v3167, %v3104
      %v3194 = vmul.f32 %v3168, %v3108
      %v3195 = vmul.f32 %v3169, %v3112
      %v3196 = vmul.f32 %v3170, %v3116
      %v3197 = vmul.f32 %v3171, %v3120
      %v3198 = vmul.f32 %v3172, %v3124
      %v3199 = vmul.f32 %v3173, %v3128
      %v3200 = vmul.f32 %v3192, %v3132
      %3209 = vrot.lane.b32.xlu0 %v3086, 8
      %v3210 = vpop.permute.xlu0 %3209
      %3211 = vrot.lane.b32.xlu0 %v3087, 8
      %v3212 = vpop.permute.xlu0 %3211
      %3213 = vrot.lane.b32.xlu0 %v3088, 8
      %v3214 = vpop.permute.xlu0 %3213
      %3215 = vrot.lane.b32.xlu0 %v3089, 8
      %v3216 = vpop.permute.xlu0 %3215
      %3217 = vrot.lane.b32.xlu0 %v3090, 8
      %v3218 = vpop.permute.xlu0 %3217
      %3219 = vrot.lane.b32.xlu0 %v3091, 8
      %v3220 = vpop.permute.xlu0 %3219
      %3221 = vrot.lane.b32.xlu0 %v3092, 8
      %v3222 = vpop.permute.xlu0 %3221
      %3223 = vrot.lane.b32.xlu0 %v3093, 8
      %v3224 = vpop.permute.xlu0 %3223
      %3241 = vrot.lane.b32.xlu0 %v3134, 16
      %v3242 = vpop.permute.xlu0 %3241
      %3243 = vrot.lane.b32.xlu0 %v3135, 16
      %v3244 = vpop.permute.xlu0 %3243
      %3245 = vrot.lane.b32.xlu0 %v3136, 16
      %v3246 = vpop.permute.xlu0 %3245
      %3247 = vrot.lane.b32.xlu0 %v3137, 16
      %v3248 = vpop.permute.xlu0 %3247
      %3249 = vrot.lane.b32.xlu0 %v3138, 16
      %v3250 = vpop.permute.xlu0 %3249
      %3251 = vrot.lane.b32.xlu0 %v3139, 16
      %v3252 = vpop.permute.xlu0 %3251
      %3253 = vrot.lane.b32.xlu0 %v3140, 16
      %v3254 = vpop.permute.xlu0 %3253
      %3255 = vrot.lane.b32.xlu0 %v3141, 16
      %v3256 = vpop.permute.xlu0 %3255
      %3273 = vrot.lane.b32.xlu0 %v3150, 24
      %v3274 = vpop.permute.xlu0 %3273
      %3275 = vrot.lane.b32.xlu0 %v3151, 24
      %v3276 = vpop.permute.xlu0 %3275
      %3277 = vrot.lane.b32.xlu0 %v3152, 24
      %v3278 = vpop.permute.xlu0 %3277
      %3279 = vrot.lane.b32.xlu0 %v3153, 24
      %v3280 = vpop.permute.xlu0 %3279
      %3281 = vrot.lane.b32.xlu0 %v3154, 24
      %v3282 = vpop.permute.xlu0 %3281
      %3283 = vrot.lane.b32.xlu0 %v3155, 24
      %v3284 = vpop.permute.xlu0 %3283
      %3285 = vrot.lane.b32.xlu0 %v3156, 24
      %v3286 = vpop.permute.xlu0 %3285
      %3287 = vrot.lane.b32.xlu0 %v3157, 24
      %v3288 = vpop.permute.xlu0 %3287
      %3305 = vrot.lane.b32.xlu0 %v3158, 32
      %v3306 = vpop.permute.xlu0 %3305
      %3307 = vrot.lane.b32.xlu0 %v3159, 32
      %v3308 = vpop.permute.xlu0 %3307
      %3309 = vrot.lane.b32.xlu0 %v3160, 32
      %v3310 = vpop.permute.xlu0 %3309
      %3311 = vrot.lane.b32.xlu0 %v3161, 32
      %v3312 = vpop.permute.xlu0 %3311
      %3313 = vrot.lane.b32.xlu0 %v3162, 32
      %v3314 = vpop.permute.xlu0 %3313
      %3315 = vrot.lane.b32.xlu0 %v3163, 32
      %v3316 = vpop.permute.xlu0 %3315
      %3317 = vrot.lane.b32.xlu0 %v3164, 32
      %v3318 = vpop.permute.xlu0 %3317
      %3319 = vrot.lane.b32.xlu0 %v3165, 32
      %v3320 = vpop.permute.xlu0 %3319
      %3337 = vrot.lane.b32.xlu0 %v3174, 40
      %v3338 = vpop.permute.xlu0 %3337
      %3339 = vrot.lane.b32.xlu0 %v3175, 40
      %v3340 = vpop.permute.xlu0 %3339
      %3341 = vrot.lane.b32.xlu0 %v3176, 40
      %v3342 = vpop.permute.xlu0 %3341
      %3343 = vrot.lane.b32.xlu0 %v3177, 40
      %v3344 = vpop.permute.xlu0 %3343
      %3345 = vrot.lane.b32.xlu0 %v3178, 40
      %v3346 = vpop.permute.xlu0 %3345
      %3347 = vrot.lane.b32.xlu0 %v3179, 40
      %v3348 = vpop.permute.xlu0 %3347
      %3349 = vrot.lane.b32.xlu0 %v3180, 40
      %v3350 = vpop.permute.xlu0 %3349
      %3351 = vrot.lane.b32.xlu0 %v3181, 40
      %v3352 = vpop.permute.xlu0 %3351
      %3369 = vrot.lane.b32.xlu0 %v3183, 48
      %v3370 = vpop.permute.xlu0 %3369
      %3371 = vrot.lane.b32.xlu0 %v3184, 48
      %v3372 = vpop.permute.xlu0 %3371
      %3373 = vrot.lane.b32.xlu0 %v3185, 48
      %v3374 = vpop.permute.xlu0 %3373
      %3375 = vrot.lane.b32.xlu0 %v3186, 48
      %v3376 = vpop.permute.xlu0 %3375
      %3377 = vrot.lane.b32.xlu0 %v3187, 48
      %v3378 = vpop.permute.xlu0 %3377
      %3379 = vrot.lane.b32.xlu0 %v3188, 48
      %v3380 = vpop.permute.xlu0 %3379
      %3381 = vrot.lane.b32.xlu0 %v3189, 48
      %v3382 = vpop.permute.xlu0 %3381
      %3383 = vrot.lane.b32.xlu0 %v3190, 48
      %v3384 = vpop.permute.xlu0 %3383
      %3394 = vrot.lane.b32.xlu0 %v3159, 56
      %v3395 = vpop.permute.xlu0 %3394
      %3396 = vrot.lane.b32.xlu0 %v3160, 56
      %v3397 = vpop.permute.xlu0 %3396
      %3398 = vrot.lane.b32.xlu0 %v3161, 56
      %v3399 = vpop.permute.xlu0 %3398
      %3400 = vrot.lane.b32.xlu0 %v3162, 56
      %v3401 = vpop.permute.xlu0 %3400
      %3402 = vrot.lane.b32.xlu0 %v3163, 56
      %v3403 = vpop.permute.xlu0 %3402
      %3404 = vrot.lane.b32.xlu0 %v3164, 56
      %v3405 = vpop.permute.xlu0 %3404
      %3406 = vrot.lane.b32.xlu0 %v3165, 56
      %v3407 = vpop.permute.xlu0 %3406
      %3408 = vrot.lane.b32.xlu0 %v3191, 56
      %v3409 = vpop.permute.xlu0 %3408
      %3426 = vrot.lane.b32.xlu0 %v3193, 64
      %v3427 = vpop.permute.xlu0 %3426
      %3428 = vrot.lane.b32.xlu0 %v3194, 64
      %v3429 = vpop.permute.xlu0 %3428
      %3430 = vrot.lane.b32.xlu0 %v3195, 64
      %v3431 = vpop.permute.xlu0 %3430
      %3432 = vrot.lane.b32.xlu0 %v3196, 64
      %v3433 = vpop.permute.xlu0 %3432
      %3434 = vrot.lane.b32.xlu0 %v3197, 64
      %v3435 = vpop.permute.xlu0 %3434
      %3436 = vrot.lane.b32.xlu0 %v3198, 64
      %v3437 = vpop.permute.xlu0 %3436
      %3438 = vrot.lane.b32.xlu0 %v3199, 64
      %v3439 = vpop.permute.xlu0 %3438
      %3440 = vrot.lane.b32.xlu0 %v3200, 64
      %v3441 = vpop.permute.xlu0 %3440
      %v3450 = vsel %vm2400, %v3078, %v3210
      %v3451 = vsel %vm2400, %v3079, %v3212
      %v3452 = vsel %vm2400, %v3080, %v3214
      %v3453 = vsel %vm2400, %v3081, %v3216
      %v3454 = vsel %vm2400, %v3082, %v3218
      %v3455 = vsel %vm2400, %v3083, %v3220
      %v3456 = vsel %vm2400, %v3084, %v3222
      %v3457 = vsel %vm2400, %v3085, %v3224
      %v3458 = vsel %vm2466, %v3450, %v3242
      %v3459 = vsel %vm2466, %v3451, %v3244
      %v3460 = vsel %vm2466, %v3452, %v3246
      %v3461 = vsel %vm2466, %v3453, %v3248
      %v3462 = vsel %vm2466, %v3454, %v3250
      %v3463 = vsel %vm2466, %v3455, %v3252
      %v3464 = vsel %vm2466, %v3456, %v3254
      %v3465 = vsel %vm2466, %v3457, %v3256
      %v3466 = vsel %vm2532, %v3458, %v3274
      %v3467 = vsel %vm2532, %v3459, %v3276
      %v3468 = vsel %vm2532, %v3460, %v3278
      %v3469 = vsel %vm2532, %v3461, %v3280
      %v3470 = vsel %vm2532, %v3462, %v3282
      %v3471 = vsel %vm2532, %v3463, %v3284
      %v3472 = vsel %vm2532, %v3464, %v3286
      %v3473 = vsel %vm2532, %v3465, %v3288
      %v3474 = vsel %vm2598, %v3466, %v3306
      %v3475 = vsel %vm2598, %v3467, %v3308
      %v3476 = vsel %vm2598, %v3468, %v3310
      %v3477 = vsel %vm2598, %v3469, %v3312
      %v3478 = vsel %vm2598, %v3470, %v3314
      %v3479 = vsel %vm2598, %v3471, %v3316
      %v3480 = vsel %vm2598, %v3472, %v3318
      %v3481 = vsel %vm2598, %v3473, %v3320
      %vm3482 = vcmask 326656
      %v3483 = vsel %vm3482, %v3474, %v3338
      %v3484 = vsel %vm3482, %v3475, %v3340
      %v3485 = vsel %vm3482, %v3476, %v3342
      %v3486 = vsel %vm3482, %v3477, %v3344
      %v3487 = vsel %vm3482, %v3478, %v3346
      %v3488 = vsel %vm3482, %v3479, %v3348
      %v3489 = vsel %vm3482, %v3480, %v3350
      %v3490 = vsel %vm3482, %v3481, %v3352
      %vm3491 = vcmask 392192
      %v3492 = vsel %vm3491, %v3483, %v3370
      %v3493 = vsel %vm3491, %v3484, %v3372
      %v3494 = vsel %vm3491, %v3485, %v3374
      %v3495 = vsel %vm3491, %v3486, %v3376
      %v3496 = vsel %vm3491, %v3487, %v3378
      %v3497 = vsel %vm3491, %v3488, %v3380
      %v3498 = vsel %vm3491, %v3489, %v3382
      %v3499 = vsel %vm3491, %v3490, %v3384
      %vm3500 = vcmask 457728
      %v3501 = vsel %vm3500, %v3492, %v3395
      %v3502 = vsel %vm3500, %v3493, %v3397
      %v3503 = vsel %vm3500, %v3494, %v3399
      %v3504 = vsel %vm3500, %v3495, %v3401
      %v3505 = vsel %vm3500, %v3496, %v3403
      %v3506 = vsel %vm3500, %v3497, %v3405
      %v3507 = vsel %vm3500, %v3498, %v3407
      %v3508 = vsel %vm3500, %v3499, %v3409
      %vm3509 = vcmask 523264
      %v3510 = vsel %vm3509, %v3501, %v3427
      %v3511 = vsel %vm3509, %v3502, %v3429
      %v3512 = vsel %vm3509, %v3503, %v3431
      %v3513 = vsel %vm3509, %v3504, %v3433
      %v3514 = vsel %vm3509, %v3505, %v3435
      %v3515 = vsel %vm3509, %v3506, %v3437
      %v3516 = vsel %vm3509, %v3507, %v3439
      %v3517 = vsel %vm3509, %v3508, %v3441
      %v3518 = vld [vmem:[%s9] sm:$0xff]
      %v3519 = vld [vmem:[%s9 + $0x8] sm:$0xff]
      %v3520 = vld [vmem:[%s9 + $0x10] sm:$0xff]
      %v3521 = vld [vmem:[%s9 + $0x18] sm:$0xff]
      %v3522 = vld [vmem:[%s9 + $0x20] sm:$0xff]
      %v3523 = vld [vmem:[%s9 + $0x28] sm:$0xff]
      %v3524 = vld [vmem:[%s9 + $0x30] sm:$0xff]
      %v3525 = vld [vmem:[%s9 + $0x38] sm:$0xff]
      %v3526 = vld [vmem:[%s9 + $0x40] sm:$0xff]
      %vm3527 = vcmask 588800
      %v3529 = vsel %vm3527, %v3510, 0
      %v3532 = vsel %vm3527, %v3511, 0
      %v3535 = vsel %vm3527, %v3512, 0
      %v3538 = vsel %vm3527, %v3513, 0
      %v3541 = vsel %vm3527, %v3514, 0
      %v3544 = vsel %vm3527, %v3515, 0
      %v3547 = vsel %vm3527, %v3516, 0
      %v3550 = vsel %vm3527, %v3517, 0
      %3552 = vmatpush.msra.mxu0 0.0
      %3553 = vmatpush.msra.mxu0 0.0
      %3554 = vmatpush.msra.mxu0 0.0
      %3555 = vmatpush.msra.mxu0 0.0
      %3556 = vmatpush.msra.mxu0 0.0
      %3557 = vmatpush.msra.mxu0 0.0
      %3558 = vmatpush.msra.mxu0 0.0
      %3559 = vmatpush.msra.mxu0 %v3526
      %3560 = vmatpush.msra.mxu0 %v3525
      %3561 = vmatpush.msra.mxu0 %v3524
      %3562 = vmatpush.msra.mxu0 %v3523
      %3563 = vmatpush.msra.mxu0 %v3522
      %3564 = vmatpush.msra.mxu0 %v3521
      %3565 = vmatpush.msra.mxu0 %v3520
      %3566 = vmatpush.msra.mxu0 %v3519
      %3567 = vmatpush.msra.mxu0 %v3518
      %3568 = vmatmul.f32.gmra.mxu0 %v3529
      %v3569 = vpop.f32.mrf.mxu0
      %v3570 = vadd.f32 0.0, %v3569
      %3571 = vmatmul.f32.gmra.mxu0 %v3532
      %v3572 = vpop.f32.mrf.mxu0
      %v3573 = vadd.f32 0.0, %v3572
      %3574 = vmatmul.f32.gmra.mxu0 %v3535
      %v3575 = vpop.f32.mrf.mxu0
      %v3576 = vadd.f32 0.0, %v3575
      %3577 = vmatmul.f32.gmra.mxu0 %v3538
      %v3578 = vpop.f32.mrf.mxu0
      %v3579 = vadd.f32 0.0, %v3578
      %3580 = vmatmul.f32.gmra.mxu0 %v3541
      %v3581 = vpop.f32.mrf.mxu0
      %v3582 = vadd.f32 0.0, %v3581
      %3583 = vmatmul.f32.gmra.mxu0 %v3544
      %v3584 = vpop.f32.mrf.mxu0
      %v3585 = vadd.f32 0.0, %v3584
      %3586 = vmatmul.f32.gmra.mxu0 %v3547
      %v3587 = vpop.f32.mrf.mxu0
      %v3588 = vadd.f32 0.0, %v3587
      %3589 = vmatmul.f32.gmra.mxu0 %v3550
      %v3590 = vpop.f32.mrf.mxu0
      %v3591 = vadd.f32 0.0, %v3590
      %3592 = vdwg.mxu0
      %v3593 = vadd.f32 %v2891, %v3570
      %v3594 = vadd.f32 %v2902, %v3573
      %v3595 = vadd.f32 %v2913, %v3576
      %v3596 = vadd.f32 %v2924, %v3579
      %v3597 = vadd.f32 %v2935, %v3582
      %v3598 = vadd.f32 %v2946, %v3585
      %v3599 = vadd.f32 %v2957, %v3588
      %v3600 = vadd.f32 %v2968, %v3591
      %v3601 = vld [vmem:[%s10] sm:$0x1]
      %v3603 = vperm.slane %v3601, 0
      %v3605 = vmul.f32 %v3593, %v3603
      %v3606 = vmul.f32 %v3594, %v3603
      %v3607 = vmul.f32 %v3595, %v3603
      %v3608 = vmul.f32 %v3596, %v3603
      %v3609 = vmul.f32 %v3597, %v3603
      %v3610 = vmul.f32 %v3598, %v3603
      %v3611 = vmul.f32 %v3599, %v3603
      %v3612 = vmul.f32 %v3600, %v3603
      %v3613 = vld [vmem:[%s11] sm:$0x1]
      %v3615 = vperm.slane %v3613, 0
      %v3617 = vadd.f32 %v3605, %v3615
      %v3618 = vadd.f32 %v3606, %v3615
      %v3619 = vadd.f32 %v3607, %v3615
      %v3620 = vadd.f32 %v3608, %v3615
      %v3621 = vadd.f32 %v3609, %v3615
      %v3622 = vadd.f32 %v3610, %v3615
      %v3623 = vadd.f32 %v3611, %v3615
      %v3624 = vadd.f32 %v3612, %v3615
      %v3625 = vmax.f32 %v3617, 0.0
      %v3626 = vmax.f32 %v3618, 0.0
      %v3627 = vmax.f32 %v3619, 0.0
      %v3628 = vmax.f32 %v3620, 0.0
      %v3629 = vmax.f32 %v3621, 0.0
      %v3630 = vmax.f32 %v3622, 0.0
      %v3631 = vmax.f32 %v3623, 0.0
      %v3632 = vmax.f32 %v3624, 0.0
      %3633 = vst.msk [vmem:[#allocation4] sm:$0xff] %vm2400, 0.0
      %3634 = vst.msk [vmem:[#allocation4 + $0x8] sm:$0x1] %vm3010, 0.0
      %3635 = vst.msk [vmem:[#allocation4 + $0x49] sm:$0xff] %vm2400, 0.0
      %3636 = vst.msk [vmem:[#allocation4 + $0x51] sm:$0x1] %vm3010, 0.0
      %3637 = vst.msk [vmem:[#allocation4 + $0x9] sm:$0xff] %vm2400, %v3625
      %3638 = vst.msk [vmem:[#allocation4 + $0x11] sm:$0xff] %vm2400, %v3626
      %3639 = vst.msk [vmem:[#allocation4 + $0x19] sm:$0xff] %vm2400, %v3627
      %3640 = vst.msk [vmem:[#allocation4 + $0x21] sm:$0xff] %vm2400, %v3628
      %3641 = vst.msk [vmem:[#allocation4 + $0x29] sm:$0xff] %vm2400, %v3629
      %3642 = vst.msk [vmem:[#allocation4 + $0x31] sm:$0xff] %vm2400, %v3630
      %3643 = vst.msk [vmem:[#allocation4 + $0x39] sm:$0xff] %vm2400, %v3631
      %3644 = vst.msk [vmem:[#allocation4 + $0x41] sm:$0xff] %vm2400, %v3632
      %v3645 = vld [vmem:[%s3] sm:$0xff]
      %v3646 = vld [vmem:[%s3 + $0x8] sm:$0xff]
      %v3647 = vld [vmem:[%s3 + $0x10] sm:$0xff]
      %v3648 = vld [vmem:[%s3 + $0x18] sm:$0xff]
      %v3649 = vld [vmem:[%s3 + $0x20] sm:$0xff]
      %v3650 = vld [vmem:[%s3 + $0x28] sm:$0xff]
      %v3651 = vld [vmem:[%s3 + $0x30] sm:$0xff]
      %v3652 = vld [vmem:[%s3 + $0x38] sm:$0xff]
      %v3653 = vld [vmem:[#allocation4] sm:$0xff]
      %v3654 = vld [vmem:[#allocation4 + $0x8] sm:$0xff]
      %v3655 = vld [vmem:[#allocation4 + $0x10] sm:$0xff]
      %v3656 = vld [vmem:[#allocation4 + $0x18] sm:$0xff]
      %v3657 = vld [vmem:[#allocation4 + $0x20] sm:$0xff]
      %v3658 = vld [vmem:[#allocation4 + $0x28] sm:$0xff]
      %v3659 = vld [vmem:[#allocation4 + $0x30] sm:$0xff]
      %v3660 = vld [vmem:[#allocation4 + $0x38] sm:$0xff]
      %3662 = vset.pattern.permute.xlu0 0
      %3663 = vperm.xlu0 %3662, %v3645
      %v3664 = vpop.permute.xlu0 %3663
      %3667 = vset.pattern.permute.xlu0 0
      %3668 = vperm.xlu0 %3667, %v3646
      %v3669 = vpop.permute.xlu0 %3668
      %3672 = vset.pattern.permute.xlu0 0
      %3673 = vperm.xlu0 %3672, %v3647
      %v3674 = vpop.permute.xlu0 %3673
      %3677 = vset.pattern.permute.xlu0 0
      %3678 = vperm.xlu0 %3677, %v3648
      %v3679 = vpop.permute.xlu0 %3678
      %3682 = vset.pattern.permute.xlu0 0
      %3683 = vperm.xlu0 %3682, %v3649
      %v3684 = vpop.permute.xlu0 %3683
      %3687 = vset.pattern.permute.xlu0 0
      %3688 = vperm.xlu0 %3687, %v3650
      %v3689 = vpop.permute.xlu0 %3688
      %3692 = vset.pattern.permute.xlu0 0
      %3693 = vperm.xlu0 %3692, %v3651
      %v3694 = vpop.permute.xlu0 %3693
      %3697 = vset.pattern.permute.xlu0 0
      %3698 = vperm.xlu0 %3697, %v3652
      %v3699 = vpop.permute.xlu0 %3698
      %v3701 = vmul.f32 %v3653, %v3664
      %v3702 = vmul.f32 %v3654, %v3669
      %v3703 = vmul.f32 %v3655, %v3674
      %v3704 = vmul.f32 %v3656, %v3679
      %v3705 = vmul.f32 %v3657, %v3684
      %v3706 = vmul.f32 %v3658, %v3689
      %v3707 = vmul.f32 %v3659, %v3694
      %v3708 = vmul.f32 %v3660, %v3699
      %v3709 = vld [vmem:[#allocation4 + $0x1] sm:$0xff]
      %v3710 = vld [vmem:[#allocation4 + $0x9] sm:$0xff]
      %v3711 = vld [vmem:[#allocation4 + $0x11] sm:$0xff]
      %v3712 = vld [vmem:[#allocation4 + $0x19] sm:$0xff]
      %v3713 = vld [vmem:[#allocation4 + $0x21] sm:$0xff]
      %v3714 = vld [vmem:[#allocation4 + $0x29] sm:$0xff]
      %v3715 = vld [vmem:[#allocation4 + $0x31] sm:$0xff]
      %v3716 = vld [vmem:[#allocation4 + $0x39] sm:$0xff]
      %v3717 = vld [vmem:[#allocation4 + $0x2] sm:$0xff]
      %v3718 = vld [vmem:[#allocation4 + $0xa] sm:$0xff]
      %v3719 = vld [vmem:[#allocation4 + $0x12] sm:$0xff]
      %v3720 = vld [vmem:[#allocation4 + $0x1a] sm:$0xff]
      %v3721 = vld [vmem:[#allocation4 + $0x22] sm:$0xff]
      %v3722 = vld [vmem:[#allocation4 + $0x2a] sm:$0xff]
      %v3723 = vld [vmem:[#allocation4 + $0x32] sm:$0xff]
      %v3724 = vld [vmem:[#allocation4 + $0x3a] sm:$0xff]
      %3725 = vset.pattern.permute.xlu0 1
      %3726 = vperm.xlu0 %3725, %v3645
      %v3727 = vpop.permute.xlu0 %3726
      %3729 = vset.pattern.permute.xlu0 1
      %3730 = vperm.xlu0 %3729, %v3646
      %v3731 = vpop.permute.xlu0 %3730
      %3733 = vset.pattern.permute.xlu0 1
      %3734 = vperm.xlu0 %3733, %v3647
      %v3735 = vpop.permute.xlu0 %3734
      %3737 = vset.pattern.permute.xlu0 1
      %3738 = vperm.xlu0 %3737, %v3648
      %v3739 = vpop.permute.xlu0 %3738
      %3741 = vset.pattern.permute.xlu0 1
      %3742 = vperm.xlu0 %3741, %v3649
      %v3743 = vpop.permute.xlu0 %3742
      %3745 = vset.pattern.permute.xlu0 1
      %3746 = vperm.xlu0 %3745, %v3650
      %v3747 = vpop.permute.xlu0 %3746
      %3749 = vset.pattern.permute.xlu0 1
      %3750 = vperm.xlu0 %3749, %v3651
      %v3751 = vpop.permute.xlu0 %3750
      %3753 = vset.pattern.permute.xlu0 1
      %3754 = vperm.xlu0 %3753, %v3652
      %v3755 = vpop.permute.xlu0 %3754
      %v3757 = vmul.f32 %v3717, %v3727
      %v3758 = vmul.f32 %v3718, %v3731
      %v3759 = vmul.f32 %v3719, %v3735
      %v3760 = vmul.f32 %v3720, %v3739
      %v3761 = vmul.f32 %v3721, %v3743
      %v3762 = vmul.f32 %v3722, %v3747
      %v3763 = vmul.f32 %v3723, %v3751
      %v3764 = vmul.f32 %v3724, %v3755
      %v3765 = vld [vmem:[#allocation4 + $0x8] sm:$0xff]
      %v3766 = vld [vmem:[#allocation4 + $0x10] sm:$0xff]
      %v3767 = vld [vmem:[#allocation4 + $0x18] sm:$0xff]
      %v3768 = vld [vmem:[#allocation4 + $0x20] sm:$0xff]
      %v3769 = vld [vmem:[#allocation4 + $0x28] sm:$0xff]
      %v3770 = vld [vmem:[#allocation4 + $0x30] sm:$0xff]
      %v3771 = vld [vmem:[#allocation4 + $0x38] sm:$0xff]
      %v3772 = vld [vmem:[#allocation4 + $0x40] sm:$0xff]
      %v3773 = vmul.f32 %v3765, %v3664
      %v3774 = vmul.f32 %v3766, %v3669
      %v3775 = vmul.f32 %v3767, %v3674
      %v3776 = vmul.f32 %v3768, %v3679
      %v3777 = vmul.f32 %v3769, %v3684
      %v3778 = vmul.f32 %v3770, %v3689
      %v3779 = vmul.f32 %v3771, %v3694
      %v3780 = vmul.f32 %v3772, %v3699
      %v3781 = vld [vmem:[#allocation4 + $0x9] sm:$0xff]
      %v3782 = vld [vmem:[#allocation4 + $0x11] sm:$0xff]
      %v3783 = vld [vmem:[#allocation4 + $0x19] sm:$0xff]
      %v3784 = vld [vmem:[#allocation4 + $0x21] sm:$0xff]
      %v3785 = vld [vmem:[#allocation4 + $0x29] sm:$0xff]
      %v3786 = vld [vmem:[#allocation4 + $0x31] sm:$0xff]
      %v3787 = vld [vmem:[#allocation4 + $0x39] sm:$0xff]
      %v3788 = vld [vmem:[#allocation4 + $0x41] sm:$0xff]
      %v3789 = vld [vmem:[#allocation4 + $0xa] sm:$0xff]
      %v3790 = vld [vmem:[#allocation4 + $0x12] sm:$0xff]
      %v3791 = vld [vmem:[#allocation4 + $0x1a] sm:$0xff]
      %v3792 = vld [vmem:[#allocation4 + $0x22] sm:$0xff]
      %v3793 = vld [vmem:[#allocation4 + $0x2a] sm:$0xff]
      %v3794 = vld [vmem:[#allocation4 + $0x32] sm:$0xff]
      %v3795 = vld [vmem:[#allocation4 + $0x3a] sm:$0xff]
      %v3796 = vld [vmem:[#allocation4 + $0x42] sm:$0xff]
      %v3797 = vmul.f32 %v3789, %v3727
      %v3798 = vmul.f32 %v3790, %v3731
      %v3799 = vmul.f32 %v3791, %v3735
      %v3800 = vmul.f32 %v3792, %v3739
      %v3801 = vmul.f32 %v3793, %v3743
      %v3802 = vmul.f32 %v3794, %v3747
      %v3803 = vmul.f32 %v3795, %v3751
      %v3804 = vmul.f32 %v3796, %v3755
      %v3805 = vld [vmem:[#allocation4 + $0x48] sm:$0xff]
      %v3806 = vmul.f32 %v3766, %v3664
      %v3807 = vmul.f32 %v3767, %v3669
      %v3808 = vmul.f32 %v3768, %v3674
      %v3809 = vmul.f32 %v3769, %v3679
      %v3810 = vmul.f32 %v3770, %v3684
      %v3811 = vmul.f32 %v3771, %v3689
      %v3812 = vmul.f32 %v3772, %v3694
      %v3813 = vmul.f32 %v3805, %v3699
      %v3814 = vld [vmem:[#allocation4 + $0x49] sm:$0xff]
      %v3815 = vld [vmem:[#allocation4 + $0x4a] sm:$0xff]
      %v3816 = vmul.f32 %v3790, %v3727
      %v3817 = vmul.f32 %v3791, %v3731
      %v3818 = vmul.f32 %v3792, %v3735
      %v3819 = vmul.f32 %v3793, %v3739
      %v3820 = vmul.f32 %v3794, %v3743
      %v3821 = vmul.f32 %v3795, %v3747
      %v3822 = vmul.f32 %v3796, %v3751
      %v3823 = vmul.f32 %v3815, %v3755
      %3832 = vrot.lane.b32.xlu0 %v3709, 8
      %v3833 = vpop.permute.xlu0 %3832
      %3834 = vrot.lane.b32.xlu0 %v3710, 8
      %v3835 = vpop.permute.xlu0 %3834
      %3836 = vrot.lane.b32.xlu0 %v3711, 8
      %v3837 = vpop.permute.xlu0 %3836
      %3838 = vrot.lane.b32.xlu0 %v3712, 8
      %v3839 = vpop.permute.xlu0 %3838
      %3840 = vrot.lane.b32.xlu0 %v3713, 8
      %v3841 = vpop.permute.xlu0 %3840
      %3842 = vrot.lane.b32.xlu0 %v3714, 8
      %v3843 = vpop.permute.xlu0 %3842
      %3844 = vrot.lane.b32.xlu0 %v3715, 8
      %v3845 = vpop.permute.xlu0 %3844
      %3846 = vrot.lane.b32.xlu0 %v3716, 8
      %v3847 = vpop.permute.xlu0 %3846
      %3864 = vrot.lane.b32.xlu0 %v3757, 16
      %v3865 = vpop.permute.xlu0 %3864
      %3866 = vrot.lane.b32.xlu0 %v3758, 16
      %v3867 = vpop.permute.xlu0 %3866
      %3868 = vrot.lane.b32.xlu0 %v3759, 16
      %v3869 = vpop.permute.xlu0 %3868
      %3870 = vrot.lane.b32.xlu0 %v3760, 16
      %v3871 = vpop.permute.xlu0 %3870
      %3872 = vrot.lane.b32.xlu0 %v3761, 16
      %v3873 = vpop.permute.xlu0 %3872
      %3874 = vrot.lane.b32.xlu0 %v3762, 16
      %v3875 = vpop.permute.xlu0 %3874
      %3876 = vrot.lane.b32.xlu0 %v3763, 16
      %v3877 = vpop.permute.xlu0 %3876
      %3878 = vrot.lane.b32.xlu0 %v3764, 16
      %v3879 = vpop.permute.xlu0 %3878
      %3896 = vrot.lane.b32.xlu0 %v3773, 24
      %v3897 = vpop.permute.xlu0 %3896
      %3898 = vrot.lane.b32.xlu0 %v3774, 24
      %v3899 = vpop.permute.xlu0 %3898
      %3900 = vrot.lane.b32.xlu0 %v3775, 24
      %v3901 = vpop.permute.xlu0 %3900
      %3902 = vrot.lane.b32.xlu0 %v3776, 24
      %v3903 = vpop.permute.xlu0 %3902
      %3904 = vrot.lane.b32.xlu0 %v3777, 24
      %v3905 = vpop.permute.xlu0 %3904
      %3906 = vrot.lane.b32.xlu0 %v3778, 24
      %v3907 = vpop.permute.xlu0 %3906
      %3908 = vrot.lane.b32.xlu0 %v3779, 24
      %v3909 = vpop.permute.xlu0 %3908
      %3910 = vrot.lane.b32.xlu0 %v3780, 24
      %v3911 = vpop.permute.xlu0 %3910
      %3928 = vrot.lane.b32.xlu0 %v3781, 32
      %v3929 = vpop.permute.xlu0 %3928
      %3930 = vrot.lane.b32.xlu0 %v3782, 32
      %v3931 = vpop.permute.xlu0 %3930
      %3932 = vrot.lane.b32.xlu0 %v3783, 32
      %v3933 = vpop.permute.xlu0 %3932
      %3934 = vrot.lane.b32.xlu0 %v3784, 32
      %v3935 = vpop.permute.xlu0 %3934
      %3936 = vrot.lane.b32.xlu0 %v3785, 32
      %v3937 = vpop.permute.xlu0 %3936
      %3938 = vrot.lane.b32.xlu0 %v3786, 32
      %v3939 = vpop.permute.xlu0 %3938
      %3940 = vrot.lane.b32.xlu0 %v3787, 32
      %v3941 = vpop.permute.xlu0 %3940
      %3942 = vrot.lane.b32.xlu0 %v3788, 32
      %v3943 = vpop.permute.xlu0 %3942
      %3960 = vrot.lane.b32.xlu0 %v3797, 40
      %v3961 = vpop.permute.xlu0 %3960
      %3962 = vrot.lane.b32.xlu0 %v3798, 40
      %v3963 = vpop.permute.xlu0 %3962
      %3964 = vrot.lane.b32.xlu0 %v3799, 40
      %v3965 = vpop.permute.xlu0 %3964
      %3966 = vrot.lane.b32.xlu0 %v3800, 40
      %v3967 = vpop.permute.xlu0 %3966
      %3968 = vrot.lane.b32.xlu0 %v3801, 40
      %v3969 = vpop.permute.xlu0 %3968
      %3970 = vrot.lane.b32.xlu0 %v3802, 40
      %v3971 = vpop.permute.xlu0 %3970
      %3972 = vrot.lane.b32.xlu0 %v3803, 40
      %v3973 = vpop.permute.xlu0 %3972
      %3974 = vrot.lane.b32.xlu0 %v3804, 40
      %v3975 = vpop.permute.xlu0 %3974
      %3992 = vrot.lane.b32.xlu0 %v3806, 48
      %v3993 = vpop.permute.xlu0 %3992
      %3994 = vrot.lane.b32.xlu0 %v3807, 48
      %v3995 = vpop.permute.xlu0 %3994
      %3996 = vrot.lane.b32.xlu0 %v3808, 48
      %v3997 = vpop.permute.xlu0 %3996
      %3998 = vrot.lane.b32.xlu0 %v3809, 48
      %v3999 = vpop.permute.xlu0 %3998
      %4000 = vrot.lane.b32.xlu0 %v3810, 48
      %v4001 = vpop.permute.xlu0 %4000
      %4002 = vrot.lane.b32.xlu0 %v3811, 48
      %v4003 = vpop.permute.xlu0 %4002
      %4004 = vrot.lane.b32.xlu0 %v3812, 48
      %v4005 = vpop.permute.xlu0 %4004
      %4006 = vrot.lane.b32.xlu0 %v3813, 48
      %v4007 = vpop.permute.xlu0 %4006
      %4017 = vrot.lane.b32.xlu0 %v3782, 56
      %v4018 = vpop.permute.xlu0 %4017
      %4019 = vrot.lane.b32.xlu0 %v3783, 56
      %v4020 = vpop.permute.xlu0 %4019
      %4021 = vrot.lane.b32.xlu0 %v3784, 56
      %v4022 = vpop.permute.xlu0 %4021
      %4023 = vrot.lane.b32.xlu0 %v3785, 56
      %v4024 = vpop.permute.xlu0 %4023
      %4025 = vrot.lane.b32.xlu0 %v3786, 56
      %v4026 = vpop.permute.xlu0 %4025
      %4027 = vrot.lane.b32.xlu0 %v3787, 56
      %v4028 = vpop.permute.xlu0 %4027
      %4029 = vrot.lane.b32.xlu0 %v3788, 56
      %v4030 = vpop.permute.xlu0 %4029
      %4031 = vrot.lane.b32.xlu0 %v3814, 56
      %v4032 = vpop.permute.xlu0 %4031
      %4049 = vrot.lane.b32.xlu0 %v3816, 64
      %v4050 = vpop.permute.xlu0 %4049
      %4051 = vrot.lane.b32.xlu0 %v3817, 64
      %v4052 = vpop.permute.xlu0 %4051
      %4053 = vrot.lane.b32.xlu0 %v3818, 64
      %v4054 = vpop.permute.xlu0 %4053
      %4055 = vrot.lane.b32.xlu0 %v3819, 64
      %v4056 = vpop.permute.xlu0 %4055
      %4057 = vrot.lane.b32.xlu0 %v3820, 64
      %v4058 = vpop.permute.xlu0 %4057
      %4059 = vrot.lane.b32.xlu0 %v3821, 64
      %v4060 = vpop.permute.xlu0 %4059
      %4061 = vrot.lane.b32.xlu0 %v3822, 64
      %v4062 = vpop.permute.xlu0 %4061
      %4063 = vrot.lane.b32.xlu0 %v3823, 64
      %v4064 = vpop.permute.xlu0 %4063
      %v4073 = vsel %vm2400, %v3701, %v3833
      %v4074 = vsel %vm2400, %v3702, %v3835
      %v4075 = vsel %vm2400, %v3703, %v3837
      %v4076 = vsel %vm2400, %v3704, %v3839
      %v4077 = vsel %vm2400, %v3705, %v3841
      %v4078 = vsel %vm2400, %v3706, %v3843
      %v4079 = vsel %vm2400, %v3707, %v3845
      %v4080 = vsel %vm2400, %v3708, %v3847
      %v4081 = vsel %vm2466, %v4073, %v3865
      %v4082 = vsel %vm2466, %v4074, %v3867
      %v4083 = vsel %vm2466, %v4075, %v3869
      %v4084 = vsel %vm2466, %v4076, %v3871
      %v4085 = vsel %vm2466, %v4077, %v3873
      %v4086 = vsel %vm2466, %v4078, %v3875
      %v4087 = vsel %vm2466, %v4079, %v3877
      %v4088 = vsel %vm2466, %v4080, %v3879
      %v4089 = vsel %vm2532, %v4081, %v3897
      %v4090 = vsel %vm2532, %v4082, %v3899
      %v4091 = vsel %vm2532, %v4083, %v3901
      %v4092 = vsel %vm2532, %v4084, %v3903
      %v4093 = vsel %vm2532, %v4085, %v3905
      %v4094 = vsel %vm2532, %v4086, %v3907
      %v4095 = vsel %vm2532, %v4087, %v3909
      %v4096 = vsel %vm2532, %v4088, %v3911
      %v4097 = vsel %vm2598, %v4089, %v3929
      %v4098 = vsel %vm2598, %v4090, %v3931
      %v4099 = vsel %vm2598, %v4091, %v3933
      %v4100 = vsel %vm2598, %v4092, %v3935
      %v4101 = vsel %vm2598, %v4093, %v3937
      %v4102 = vsel %vm2598, %v4094, %v3939
      %v4103 = vsel %vm2598, %v4095, %v3941
      %v4104 = vsel %vm2598, %v4096, %v3943
      %v4105 = vsel %vm3482, %v4097, %v3961
      %v4106 = vsel %vm3482, %v4098, %v3963
      %v4107 = vsel %vm3482, %v4099, %v3965
      %v4108 = vsel %vm3482, %v4100, %v3967
      %v4109 = vsel %vm3482, %v4101, %v3969
      %v4110 = vsel %vm3482, %v4102, %v3971
      %v4111 = vsel %vm3482, %v4103, %v3973
      %v4112 = vsel %vm3482, %v4104, %v3975
      %v4113 = vsel %vm3491, %v4105, %v3993
      %v4114 = vsel %vm3491, %v4106, %v3995
      %v4115 = vsel %vm3491, %v4107, %v3997
      %v4116 = vsel %vm3491, %v4108, %v3999
      %v4117 = vsel %vm3491, %v4109, %v4001
      %v4118 = vsel %vm3491, %v4110, %v4003
      %v4119 = vsel %vm3491, %v4111, %v4005
      %v4120 = vsel %vm3491, %v4112, %v4007
      %v4121 = vsel %vm3500, %v4113, %v4018
      %v4122 = vsel %vm3500, %v4114, %v4020
      %v4123 = vsel %vm3500, %v4115, %v4022
      %v4124 = vsel %vm3500, %v4116, %v4024
      %v4125 = vsel %vm3500, %v4117, %v4026
      %v4126 = vsel %vm3500, %v4118, %v4028
      %v4127 = vsel %vm3500, %v4119, %v4030
      %v4128 = vsel %vm3500, %v4120, %v4032
      %v4129 = vsel %vm3509, %v4121, %v4050
      %v4130 = vsel %vm3509, %v4122, %v4052
      %v4131 = vsel %vm3509, %v4123, %v4054
      %v4132 = vsel %vm3509, %v4124, %v4056
      %v4133 = vsel %vm3509, %v4125, %v4058
      %v4134 = vsel %vm3509, %v4126, %v4060
      %v4135 = vsel %vm3509, %v4127, %v4062
      %v4136 = vsel %vm3509, %v4128, %v4064
      %v4137 = vld [vmem:[%s12] sm:$0xff]
      %v4138 = vld [vmem:[%s12 + $0x8] sm:$0xff]
      %v4139 = vld [vmem:[%s12 + $0x10] sm:$0xff]
      %v4140 = vld [vmem:[%s12 + $0x18] sm:$0xff]
      %v4141 = vld [vmem:[%s12 + $0x20] sm:$0xff]
      %v4142 = vld [vmem:[%s12 + $0x28] sm:$0xff]
      %v4143 = vld [vmem:[%s12 + $0x30] sm:$0xff]
      %v4144 = vld [vmem:[%s12 + $0x38] sm:$0xff]
      %v4145 = vld [vmem:[%s12 + $0x40] sm:$0xff]
      %v4146 = vld [vmem:[%s13] sm:$0x1]
      %v4148 = vperm.slane %v4146, 0
      %v4151 = vsel %vm3527, %v4129, 0
      %v4154 = vsel %vm3527, %v4130, 0
      %v4157 = vsel %vm3527, %v4131, 0
      %v4160 = vsel %vm3527, %v4132, 0
      %v4163 = vsel %vm3527, %v4133, 0
      %v4166 = vsel %vm3527, %v4134, 0
      %v4169 = vsel %vm3527, %v4135, 0
      %v4172 = vsel %vm3527, %v4136, 0
      %4174 = vmatpush.msra.mxu0 0.0
      %4175 = vmatpush.msra.mxu0 0.0
      %4176 = vmatpush.msra.mxu0 0.0
      %4177 = vmatpush.msra.mxu0 0.0
      %4178 = vmatpush.msra.mxu0 0.0
      %4179 = vmatpush.msra.mxu0 0.0
      %4180 = vmatpush.msra.mxu0 0.0
      %4181 = vmatpush.msra.mxu0 %v4145
      %4182 = vmatpush.msra.mxu0 %v4144
      %4183 = vmatpush.msra.mxu0 %v4143
      %4184 = vmatpush.msra.mxu0 %v4142
      %4185 = vmatpush.msra.mxu0 %v4141
      %4186 = vmatpush.msra.mxu0 %v4140
      %4187 = vmatpush.msra.mxu0 %v4139
      %4188 = vmatpush.msra.mxu0 %v4138
      %4189 = vmatpush.msra.mxu0 %v4137
      %4190 = vmatmul.f32.gmra.mxu0 %v4151
      %v4191 = vpop.f32.mrf.mxu0
      %v4192 = vadd.f32 %v4148, %v4191
      %4193 = vmatmul.f32.gmra.mxu0 %v4154
      %v4194 = vpop.f32.mrf.mxu0
      %v4195 = vadd.f32 %v4148, %v4194
      %4196 = vmatmul.f32.gmra.mxu0 %v4157
      %v4197 = vpop.f32.mrf.mxu0
      %v4198 = vadd.f32 %v4148, %v4197
      %4199 = vmatmul.f32.gmra.mxu0 %v4160
      %v4200 = vpop.f32.mrf.mxu0
      %v4201 = vadd.f32 %v4148, %v4200
      %4202 = vmatmul.f32.gmra.mxu0 %v4163
      %v4203 = vpop.f32.mrf.mxu0
      %v4204 = vadd.f32 %v4148, %v4203
      %4205 = vmatmul.f32.gmra.mxu0 %v4166
      %v4206 = vpop.f32.mrf.mxu0
      %v4207 = vadd.f32 %v4148, %v4206
      %4208 = vmatmul.f32.gmra.mxu0 %v4169
      %v4209 = vpop.f32.mrf.mxu0
      %v4210 = vadd.f32 %v4148, %v4209
      %4211 = vmatmul.f32.gmra.mxu0 %v4172
      %v4212 = vpop.f32.mrf.mxu0
      %v4213 = vadd.f32 %v4148, %v4212
      %4214 = vdwg.mxu0
      %v4215 = vmul.f32 %v4192, %v2969
      %v4216 = vmul.f32 %v4195, %v2970
      %v4217 = vmul.f32 %v4198, %v2971
      %v4218 = vmul.f32 %v4201, %v2972
      %v4219 = vmul.f32 %v4204, %v2973
      %v4220 = vmul.f32 %v4207, %v2974
      %v4221 = vmul.f32 %v4210, %v2975
      %v4222 = vmul.f32 %v4213, %v2976
      %4223 = vst.msk [vmem:[%s487] sm:$0xff] %vm2400, %v4215
      %4224 = vst.msk [vmem:[%s487 + $0x8] sm:$0xff] %vm2400, %v4216
      %4225 = vst.msk [vmem:[%s487 + $0x10] sm:$0xff] %vm2400, %v4217
      %4226 = vst.msk [vmem:[%s487 + $0x18] sm:$0xff] %vm2400, %v4218
      %4227 = vst.msk [vmem:[%s487 + $0x20] sm:$0xff] %vm2400, %v4219
      %4228 = vst.msk [vmem:[%s487 + $0x28] sm:$0xff] %vm2400, %v4220
      %4229 = vst.msk [vmem:[%s487 + $0x30] sm:$0xff] %vm2400, %v4221
      %4230 = vst.msk [vmem:[%s487 + $0x38] sm:$0xff] %vm2400, %v4222
      %p4231 = scmp.lt.s32.totalorder %s25, 1
      %s4232 = scalar_select %p4231, %s25, 1
      %s4233 = smul.addr %s4232, 8
      %s4234 = smul.addr %s4233, 8
      %s4235 = scalar_lea.vmem %s14, %s4234
      // Predicated region
      $region77: #{tpu_custom_call.1} parent=75 // pred_check
        %p4236 = pneg %p347
      $region78: #{tpu_custom_call.1} parent=75 // pred_check_branch
        %4238 = sbr.rel (%p4236) target = $region80
      $region79: #{tpu_custom_call.1} parent=75 // pred_region
        _
      $region80: #{tpu_custom_call.1} parent=75 // pred_fallthru
        _
    $region76: #{tpu_custom_call.1} parent=5 // pred_fallthru
      _
    %p4239 = scmp.le.s32.totalorder 2, %s20
    // Predicated region
    $region81: #{tpu_custom_call.1} parent=5 // pred_check
      %p4240 = pneg %p4239
    $region82: #{tpu_custom_call.1} parent=5 // pred_check_branch
      %4242 = sbr.rel (%p4240) target = $region84
    $region83: #{tpu_custom_call.1} parent=5 // pred_region
      %s4243 = ssub.s32 %s20, 2
      // Predicated region
      $region85: #{tpu_custom_call.1} parent=83 // pred_check
        %p4244 = pneg %p353
      $region86: #{tpu_custom_call.1} parent=83 // pred_check_branch
        %4246 = sbr.rel (%p4244) target = $region88
      $region87: #{tpu_custom_call.1} parent=83 // pred_region
        %p4247 = scmp.lt.s32.totalorder %s26, 1
        %s4248 = scalar_select %p4247, %s26, 1
        %s4249 = smul.addr %s4248, 8
        %s4250 = smul.addr %s4249, 8
        %s4251 = scalar_lea.vmem %s14, %s4250
      $region88: #{tpu_custom_call.1} parent=83 // pred_fallthru
        _
    $region84: #{tpu_custom_call.1} parent=5 // pred_fallthru
      _
  $region6: #{tpu_custom_call.1} parent=0 // loop_footer
    %s24 = sadd.s32 1, %s20
  $region7: #{tpu_custom_call.1} parent=0 // loop_footer_branch
    %19 = sbr.rel target = $region3
  $region8: #{tpu_custom_call.1} parent=0 // loop_exit
    _

</llo_original>
